<compile_context>
chip_gen: v7x
topology: tpu7x:2x2x1
jax: 0.10.0
libtpu: 0.0.40
codegen_flags: <defaults>
</compile_context>

<pallas_src>
import functools

import numpy as np

import jax
import jax.numpy as jnp
from jax import lax
from jax.experimental import pallas as pl
from jax.experimental.pallas import tpu as pltpu


# ------------------------------- helpers -----------------------------------


def _round_up(x, m):
    return ((x + m - 1) // m) * m


def _conv_out(n):
    return (n - 4) // 2 + 1


# ------------------------------ Pallas kernel -------------------------------


def _encoder_kernel(x_ref, *refs):
    """Whole ConvEncoder forward for ONE frame, VMEM-resident.

    x_ref : (1, H, W*Cin) bf16 NHWC frame with (w, c) fused on lanes.
    refs  : (S, B, bias) for each conv layer, then (Wh, bh) head weights,
            then mean_ref, scale_ref outputs.

      S    : (4*Hop, Hinp) bf16  0/1 row-gather; row kh*Hop+r selects input row 2r+kh.
      B    : (4, Win*Cin, Wo*Cout) bf16  per-kh lane-gather + (kw, ci) contraction.
      bias : (1, Wo*Cout) f32    conv bias tiled per output column block.
      Wh   : (2, 2*C4, 2L) bf16  Linear weight with the NCHW flatten folded in.
      bh   : (1, 2L) f32
    """
    mean_ref, scale_ref = refs[-2], refs[-1]
    wh_ref, bh_ref = refs[-4], refs[-3]
    layer_refs = refs[:-4]
    n_layers = len(layer_refs) // 3

    act = x_ref[0]                                              # (H, W*Cin) bf16
    for li in range(n_layers):
        s_ref = layer_refs[3 * li]
        b_ref = layer_refs[3 * li + 1]
        c_ref = layer_refs[3 * li + 2]
        ho_p = s_ref.shape[0] // 4

        # Row gather (exact 0/1 selection of bf16 rows): g[kh*Hop+r] = act[2r+kh].
        g = jnp.dot(s_ref[...], act,
                    preferred_element_type=jnp.float32).astype(jnp.bfloat16)

        # Per-kh tap matmuls: stride-2 W gather + (kw, ci) contraction live in B.
        out = jnp.dot(g[0:ho_p], b_ref[0], preferred_element_type=jnp.float32)
        for kh in range(1, 4):
            out = out + jnp.dot(g[kh * ho_p:(kh + 1) * ho_p], b_ref[kh],
                                preferred_element_type=jnp.float32)

        # f32 bias + ReLU epilogue, bf16 activation for the next layer.
        act = jnp.maximum(out + c_ref[...], 0.0).astype(jnp.bfloat16)

    # Head: conv4 output rows 0,1 hold the 2x2 feature map (lanes = w*C4 + c);
    # the PyTorch NCHW flatten permutation is pre-folded into Wh.
    head = (jnp.dot(act[0:1, :], wh_ref[0], preferred_element_type=jnp.float32)
            + jnp.dot(act[1:2, :], wh_ref[1], preferred_element_type=jnp.float32)
            + bh_ref[...])                                      # (1, 2L) f32

    latent = head.shape[-1] // 2
    mean_ref[...] = head[:, :latent].reshape(mean_ref.shape)
    raw = head[:, latent:]
    # softplus(x) = max(x, 0) + log(1 + exp(-|x|))  (stable; matches F.softplus)
    sp = jnp.maximum(raw, 0.0) + jnp.log(1.0 + jnp.exp(-jnp.abs(raw))) + 1e-5
    scale_ref[...] = sp.reshape(scale_ref.shape)


# --------------------------- one-time weight prep ---------------------------


def prepare_params(params, *, spatial=64, compute_dtype=jnp.bfloat16):
    """Folds im2col + flatten into matmul-ready weights (host-side, run once)."""
    sizes = [spatial]
    for _ in range(4):
        sizes.append(_conv_out(sizes[-1]))
    assert sizes[-1] == 2, "ConvEncoder requires 64x64 spatial input"

    layers = []
    for li, (w, bias) in enumerate(params["convs"]):
        w = np.asarray(w, np.float32)                  # (Co, Ci, 4, 4)
        bias = np.asarray(bias, np.float32)
        co, ci = w.shape[0], w.shape[1]
        hin, ho = sizes[li], sizes[li + 1]             # square feature maps
        win, wo = hin, ho
        hin_p, ho_p = _round_up(hin, 8), _round_up(ho, 8)

        # Row-gather matrix: S[kh*Hop + r, 2r + kh] = 1 (zero rows/cols for padding,
        # so garbage in padded activation rows never propagates).
        S = np.zeros((4 * ho_p, hin_p), np.float32)
        for kh in range(4):
            for r in range(ho):
                S[kh * ho_p + r, 2 * r + kh] = 1.0

        # Per-kh block-sparse weight: out lane (wo, co) <- in lanes (2wo+kw, ci).
        B = np.zeros((4, win * ci, wo * co), np.float32)
        for kh in range(4):
            for kw in range(4):
                blk = w[:, :, kh, kw].T                # (Ci, Co)
                for q in range(wo):
                    wi = 2 * q + kw
                    B[kh, wi * ci:(wi + 1) * ci, q * co:(q + 1) * co] = blk

        brow = np.tile(bias, wo)[None, :]              # (1, Wo*Co) f32
        layers.append((jnp.asarray(S, compute_dtype),
                       jnp.asarray(B, compute_dtype),
                       jnp.asarray(brow, jnp.float32)))

    # Head: fold PyTorch flatten index c*4 + h*2 + w into the Linear weight.
    wl, bl = params["linear"]                          # (2L, 4*C4), (2L,)
    wl = np.asarray(wl, np.float32)
    bl = np.asarray(bl, np.float32)
    c4 = params["convs"][3][0].shape[0]
    out_dim = wl.shape[0]
    wh = np.transpose(wl.reshape(out_dim, c4, 2, 2), (2, 3, 1, 0))  # (h, w, c, 2L)
    wh = wh.reshape(2, 2 * c4, out_dim)                # lane = w*C4 + c
    head = (jnp.asarray(wh, compute_dtype), jnp.asarray(bl[None, :], jnp.float32))
    return {"layers": layers, "head": head}


# --------------------------------- forward ----------------------------------


@jax.jit
def conv_encoder_forward(x, prepped):
    """x: (B, T, C, H, W) float32.  Returns (mean, scale), each (B, T, latent)."""
    b, t, c, h, w = x.shape
    n = b * t

    # TODO(synk): the NCHW -> (H, W*C) relayout + bf16 cast of the raw input stays as a
    # single XLA fusion; it is pure layout on <0.5 MB and not worth an in-kernel gather.
    imgs = x.astype(jnp.bfloat16).reshape(n, c, h, w)
    imgs = jnp.transpose(imgs, (0, 2, 3, 1)).reshape(n, h, w * c)   # (N, H, W*C)

    layers = prepped["layers"]
    wh, bh = prepped["head"]
    out_dim = bh.shape[-1]
    latent = out_dim // 2

    weight_args, weight_specs = [], []
    for (s_m, b_m, c_m) in layers:
        for arr in (s_m, b_m, c_m):
            weight_args.append(arr)
            weight_specs.append(pl.BlockSpec(arr.shape, lambda i, nd=arr.ndim: (0,) * nd))
    for arr in (wh, bh):
        weight_args.append(arr)
        weight_specs.append(pl.BlockSpec(arr.shape, lambda i, nd=arr.ndim: (0,) * nd))

    # Advisory cost estimate so XLA can overlap the input relayout with the kernel.
    flops = 0
    for (s_m, b_m, _) in layers:
        four_hop, hinp = s_m.shape
        hop = four_hop // 4
        kdim, ndim_ = b_m.shape[1], b_m.shape[2]
        flops += 2 * four_hop * hinp * kdim + 4 * 2 * hop * kdim * ndim_
    flops += 2 * 2 * wh.shape[1] * wh.shape[2]
    flops *= n
    bytes_accessed = (imgs.size * 2
                      + sum(int(a.size) * a.dtype.itemsize for a in weight_args)
                      + 2 * n * latent * 4)
    cost = pl.CostEstimate(flops=int(flops), transcendentals=int(n * latent),
                           bytes_accessed=int(bytes_accessed))

    mean, scale = pl.pallas_call(
        _encoder_kernel,
        out_shape=(jax.ShapeDtypeStruct((n, 1, latent), jnp.float32),
                   jax.ShapeDtypeStruct((n, 1, latent), jnp.float32)),
        grid=(n,),
        in_specs=[pl.BlockSpec((1, h, w * c), lambda i: (i, 0, 0))] + weight_specs,
        out_specs=(pl.BlockSpec((1, 1, latent), lambda i: (i, 0, 0)),
                   pl.BlockSpec((1, 1, latent), lambda i: (i, 0, 0))),
        compiler_params=pltpu.CompilerParams(
            dimension_semantics=("parallel",),          # both TCs on v7x
            vmem_limit_bytes=32 * 1024 * 1024),
        cost_estimate=cost,
    )(imgs, *weight_args)

    return mean.reshape(b, t, latent), scale.reshape(b, t, latent)


# ------------------------- pure-JAX references (checks) ---------------------


def reference_forward_f32(x, params, *, depth, latent_dim):
    """Full-f32 PyTorch-semantics reference."""
    b, t = x.shape[:2]
    h = x.reshape((-1,) + x.shape[2:])
    for w, bias in params["convs"]:
        h = lax.conv_general_dilated(
            h, w, (2, 2), "VALID", dimension_numbers=("NCHW", "OIHW", "NCHW")
        ) + bias[None, :, None, None]
        h = jnp.maximum(h, 0.0)
    h = h.reshape(h.shape[0], -1)
    wl, bl = params["linear"]
    out = h @ wl.T + bl
    mean, scale = jnp.split(out, 2, axis=-1)
    mean = mean.reshape(b, t, latent_dim)
    scale = jax.nn.softplus(scale.reshape(b, t, latent_dim)) + 1e-5
    return mean, scale


def reference_forward_bf16_policy(x, params, *, depth, latent_dim):
    """Reference with the exact precision policy of the Pallas path:
    bf16 operands, f32 accumulation + epilogue, bf16 intermediate activations."""
    b, t = x.shape[:2]
    h = x.reshape((-1,) + x.shape[2:]).astype(jnp.bfloat16)
    for w, bias in params["convs"]:
        acc = lax.conv_general_dilated(
            h, w.astype(jnp.bfloat16), (2, 2), "VALID",
            dimension_numbers=("NCHW", "OIHW", "NCHW"),
            preferred_element_type=jnp.float32,
        )
        h = jnp.maximum(acc + bias[None, :, None, None], 0.0).astype(jnp.bfloat16)
    feat = h.reshape(h.shape[0], -1)
    wl, bl = params["linear"]
    out = jnp.dot(feat, wl.T.astype(jnp.bfloat16), preferred_element_type=jnp.float32) + bl
    mean, scale = jnp.split(out, 2, axis=-1)
    mean = mean.reshape(b, t, latent_dim)
    scale = jax.nn.softplus(scale.reshape(b, t, latent_dim)) + 1e-5
    return mean, scale


# ----------------------------------- main -----------------------------------


def init_params(key, *, depth, latent_dim, in_channels):
    channels = [in_channels, depth, 2 * depth, 4 * depth, 8 * depth]
    convs = []
    for i in range(4):
        key, kw_, kb_ = jax.random.split(key, 3)
        fan_in = channels[i] * 4 * 4
        w = jax.random.normal(kw_, (channels[i + 1], channels[i], 4, 4), jnp.float32) / jnp.sqrt(fan_in)
        bias = jax.random.normal(kb_, (channels[i + 1],), jnp.float32) * 0.01
        convs.append((w, bias))
    key, kw_, kb_ = jax.random.split(key, 3)
    out_channels = 2 * latent_dim
    wl = jax.random.normal(kw_, (out_channels, 32 * depth), jnp.float32) / jnp.sqrt(32 * depth)
    bl = jax.random.normal(kb_, (out_channels,), jnp.float32) * 0.01
    return {"convs": convs, "linear": (wl, bl)}


if __name__ == "__main__":
    # Spatial must be 64x64 (Reshape((-1, 32*depth)) hard-codes the 2x2 final map);
    # keep depth / latent / batch / seq small instead.
    DEPTH, LATENT, B, T = 8, 16, 2, 3
    IN_C, H, W = 3, 64, 64

    key = jax.random.PRNGKey(0)
    key_p, key_x = jax.random.split(key)
    params = init_params(key_p, depth=DEPTH, latent_dim=LATENT, in_channels=IN_C)
    x = jax.random.normal(key_x, (B, T, IN_C, H, W), jnp.float32)

    prepped = prepare_params(params, spatial=H)                    # hoisted, run once
    mean, scale = conv_encoder_forward(x, prepped)
    jax.block_until_ready((mean, scale))
    assert mean.shape == (B, T, LATENT) and scale.shape == (B, T, LATENT)

    # Tight check vs. a reference with the identical bf16-operand / f32-accumulate policy.
    m_pol, s_pol = reference_forward_bf16_policy(x, params, depth=DEPTH, latent_dim=LATENT)
    assert jnp.allclose(mean, m_pol, rtol=5e-3, atol=5e-3), "mean mismatch vs bf16-policy reference"
    assert jnp.allclose(scale, s_pol, rtol=5e-3, atol=5e-3), "scale mismatch vs bf16-policy reference"

    # Looser sanity check vs. full-f32 PyTorch semantics (bf16 operand rounding).
    m_f32, s_f32 = reference_forward_f32(x, params, depth=DEPTH, latent_dim=LATENT)
    assert jnp.allclose(mean, m_f32, rtol=5e-2, atol=5e-2), "mean mismatch vs f32 reference"
    assert jnp.allclose(scale, s_f32, rtol=5e-2, atol=5e-2), "scale mismatch vs f32 reference"

    print("KERNEL_OK")
</pallas_src>

<mosaic_0001>
module attributes {stable_mosaic.version = 11 : i64} {
  func.func @_encoder_kernel(%arg0: i32, %arg1: memref<1x64x192xbf16, #tpu.memory_space<vmem>>, %arg2: memref<128x64xbf16, #tpu.memory_space<vmem>>, %arg3: memref<4x192x248xbf16, #tpu.memory_space<vmem>>, %arg4: memref<1x248xf32, #tpu.memory_space<vmem>>, %arg5: memref<64x32xbf16, #tpu.memory_space<vmem>>, %arg6: memref<4x248x224xbf16, #tpu.memory_space<vmem>>, %arg7: memref<1x224xf32, #tpu.memory_space<vmem>>, %arg8: memref<32x16xbf16, #tpu.memory_space<vmem>>, %arg9: memref<4x224x192xbf16, #tpu.memory_space<vmem>>, %arg10: memref<1x192xf32, #tpu.memory_space<vmem>>, %arg11: memref<32x8xbf16, #tpu.memory_space<vmem>>, %arg12: memref<4x192x128xbf16, #tpu.memory_space<vmem>>, %arg13: memref<1x128xf32, #tpu.memory_space<vmem>>, %arg14: memref<2x128x32xbf16, #tpu.memory_space<vmem>>, %arg15: memref<1x32xf32, #tpu.memory_space<vmem>>, %arg16: memref<1x1x16xf32, #tpu.memory_space<vmem>>, %arg17: memref<1x1x16xf32, #tpu.memory_space<vmem>>) attributes {dimension_semantics = [#tpu.dimension_semantics<parallel>], iteration_bounds = array<i64: 6>, scalar_prefetch = 0 : i64, scratch_operands = 0 : i64, tpu.core_type = #tpu.core_type<tc>, window_params = [{transform_indices = @transform_0, window_bounds = array<i64: 1, 64, 192>}, {pipeline_mode = #tpu.pipeline_mode<synchronous>, transform_indices = @transform_1, window_bounds = array<i64: 128, 64>}, {pipeline_mode = #tpu.pipeline_mode<synchronous>, transform_indices = @transform_2, window_bounds = array<i64: 4, 192, 248>}, {pipeline_mode = #tpu.pipeline_mode<synchronous>, transform_indices = @transform_3, window_bounds = array<i64: 1, 248>}, {pipeline_mode = #tpu.pipeline_mode<synchronous>, transform_indices = @transform_4, window_bounds = array<i64: 64, 32>}, {pipeline_mode = #tpu.pipeline_mode<synchronous>, transform_indices = @transform_5, window_bounds = array<i64: 4, 248, 224>}, {pipeline_mode = #tpu.pipeline_mode<synchronous>, transform_indices = @transform_6, window_bounds = array<i64: 1, 224>}, {pipeline_mode = #tpu.pipeline_mode<synchronous>, transform_indices = @transform_7, window_bounds = array<i64: 32, 16>}, {pipeline_mode = #tpu.pipeline_mode<synchronous>, transform_indices = @transform_8, window_bounds = array<i64: 4, 224, 192>}, {pipeline_mode = #tpu.pipeline_mode<synchronous>, transform_indices = @transform_9, window_bounds = array<i64: 1, 192>}, {pipeline_mode = #tpu.pipeline_mode<synchronous>, transform_indices = @transform_10, window_bounds = array<i64: 32, 8>}, {pipeline_mode = #tpu.pipeline_mode<synchronous>, transform_indices = @transform_11, window_bounds = array<i64: 4, 192, 128>}, {pipeline_mode = #tpu.pipeline_mode<synchronous>, transform_indices = @transform_12, window_bounds = array<i64: 1, 128>}, {pipeline_mode = #tpu.pipeline_mode<synchronous>, transform_indices = @transform_13, window_bounds = array<i64: 2, 128, 32>}, {pipeline_mode = #tpu.pipeline_mode<synchronous>, transform_indices = @transform_14, window_bounds = array<i64: 1, 32>}, {transform_indices = @transform_15, window_bounds = array<i64: 1, 1, 16>}, {transform_indices = @transform_16, window_bounds = array<i64: 1, 1, 16>}]} {
    %c0 = arith.constant 0 : index
    %c0_0 = arith.constant 0 : index
    %c0_1 = arith.constant 0 : index
    %0 = vector.load %arg1[%c0, %c0_0, %c0_1] : memref<1x64x192xbf16, #tpu.memory_space<vmem>>, vector<1x64x192xbf16>
    %1 = vector.shape_cast %0 : vector<1x64x192xbf16> to vector<64x192xbf16>
    %c0_2 = arith.constant 0 : index
    %c0_3 = arith.constant 0 : index
    %2 = vector.load %arg2[%c0_2, %c0_3] : memref<128x64xbf16, #tpu.memory_space<vmem>>, vector<128x64xbf16>
    %cst = arith.constant dense<0.000000e+00> : vector<128x192xf32>
    %3 = tpu.matmul %2, %1, %cst {dimension_numbers = #tpu.dot_dimension_numbers<[1], [0], [0], [1], [0, 0, 1, 1], [], []>} : vector<128x64xbf16>, vector<64x192xbf16>, vector<128x192xf32> -> vector<128x192xf32>
    %4 = arith.truncf %3 : vector<128x192xf32> to vector<128x192xbf16>
    %5 = vector.extract_strided_slice %4 {offsets = [0, 0], sizes = [32, 192], strides = [1, 1]} : vector<128x192xbf16> to vector<32x192xbf16>
    %c0_4 = arith.constant 0 : index
    %c0_5 = arith.constant 0 : index
    %c0_6 = arith.constant 0 : index
    %6 = vector.load %arg3[%c0_4, %c0_5, %c0_6] : memref<4x192x248xbf16, #tpu.memory_space<vmem>>, vector<1x192x248xbf16>
    %7 = vector.shape_cast %6 : vector<1x192x248xbf16> to vector<192x248xbf16>
    %cst_7 = arith.constant dense<0.000000e+00> : vector<32x248xf32>
    %8 = tpu.matmul %5, %7, %cst_7 {dimension_numbers = #tpu.dot_dimension_numbers<[1], [0], [0], [1], [0, 0, 1, 1], [], []>} : vector<32x192xbf16>, vector<192x248xbf16>, vector<32x248xf32> -> vector<32x248xf32>
    %9 = vector.extract_strided_slice %4 {offsets = [32, 0], sizes = [32, 192], strides = [1, 1]} : vector<128x192xbf16> to vector<32x192xbf16>
    %c1 = arith.constant 1 : index
    %c0_8 = arith.constant 0 : index
    %c0_9 = arith.constant 0 : index
    %10 = vector.load %arg3[%c1, %c0_8, %c0_9] : memref<4x192x248xbf16, #tpu.memory_space<vmem>>, vector<1x192x248xbf16>
    %11 = vector.shape_cast %10 : vector<1x192x248xbf16> to vector<192x248xbf16>
    %cst_10 = arith.constant dense<0.000000e+00> : vector<32x248xf32>
    %12 = tpu.matmul %9, %11, %cst_10 {dimension_numbers = #tpu.dot_dimension_numbers<[1], [0], [0], [1], [0, 0, 1, 1], [], []>} : vector<32x192xbf16>, vector<192x248xbf16>, vector<32x248xf32> -> vector<32x248xf32>
    %13 = arith.addf %8, %12 : vector<32x248xf32>
    %14 = vector.extract_strided_slice %4 {offsets = [64, 0], sizes = [32, 192], strides = [1, 1]} : vector<128x192xbf16> to vector<32x192xbf16>
    %c2 = arith.constant 2 : index
    %c0_11 = arith.constant 0 : index
    %c0_12 = arith.constant 0 : index
    %15 = vector.load %arg3[%c2, %c0_11, %c0_12] : memref<4x192x248xbf16, #tpu.memory_space<vmem>>, vector<1x192x248xbf16>
    %16 = vector.shape_cast %15 : vector<1x192x248xbf16> to vector<192x248xbf16>
    %cst_13 = arith.constant dense<0.000000e+00> : vector<32x248xf32>
    %17 = tpu.matmul %14, %16, %cst_13 {dimension_numbers = #tpu.dot_dimension_numbers<[1], [0], [0], [1], [0, 0, 1, 1], [], []>} : vector<32x192xbf16>, vector<192x248xbf16>, vector<32x248xf32> -> vector<32x248xf32>
    %18 = arith.addf %13, %17 : vector<32x248xf32>
    %19 = vector.extract_strided_slice %4 {offsets = [96, 0], sizes = [32, 192], strides = [1, 1]} : vector<128x192xbf16> to vector<32x192xbf16>
    %c3 = arith.constant 3 : index
    %c0_14 = arith.constant 0 : index
    %c0_15 = arith.constant 0 : index
    %20 = vector.load %arg3[%c3, %c0_14, %c0_15] : memref<4x192x248xbf16, #tpu.memory_space<vmem>>, vector<1x192x248xbf16>
    %21 = vector.shape_cast %20 : vector<1x192x248xbf16> to vector<192x248xbf16>
    %cst_16 = arith.constant dense<0.000000e+00> : vector<32x248xf32>
    %22 = tpu.matmul %19, %21, %cst_16 {dimension_numbers = #tpu.dot_dimension_numbers<[1], [0], [0], [1], [0, 0, 1, 1], [], []>} : vector<32x192xbf16>, vector<192x248xbf16>, vector<32x248xf32> -> vector<32x248xf32>
    %23 = arith.addf %18, %22 : vector<32x248xf32>
    %c0_17 = arith.constant 0 : index
    %c0_18 = arith.constant 0 : index
    %24 = vector.load %arg4[%c0_17, %c0_18] : memref<1x248xf32, #tpu.memory_space<vmem>>, vector<1x248xf32>
    %25 = vector.broadcast %24 : vector<1x248xf32> to vector<32x248xf32>
    %26 = arith.addf %23, %25 : vector<32x248xf32>
    %cst_19 = arith.constant 0.000000e+00 : f32
    %27 = vector.broadcast %cst_19 : f32 to vector<32x248xf32>
    %28 = arith.maximumf %26, %27 : vector<32x248xf32>
    %29 = arith.truncf %28 : vector<32x248xf32> to vector<32x248xbf16>
    %c0_20 = arith.constant 0 : index
    %c0_21 = arith.constant 0 : index
    %30 = vector.load %arg5[%c0_20, %c0_21] : memref<64x32xbf16, #tpu.memory_space<vmem>>, vector<64x32xbf16>
    %cst_22 = arith.constant dense<0.000000e+00> : vector<64x248xf32>
    %31 = tpu.matmul %30, %29, %cst_22 {dimension_numbers = #tpu.dot_dimension_numbers<[1], [0], [0], [1], [0, 0, 1, 1], [], []>} : vector<64x32xbf16>, vector<32x248xbf16>, vector<64x248xf32> -> vector<64x248xf32>
    %32 = arith.truncf %31 : vector<64x248xf32> to vector<64x248xbf16>
    %33 = vector.extract_strided_slice %32 {offsets = [0, 0], sizes = [16, 248], strides = [1, 1]} : vector<64x248xbf16> to vector<16x248xbf16>
    %c0_23 = arith.constant 0 : index
    %c0_24 = arith.constant 0 : index
    %c0_25 = arith.constant 0 : index
    %34 = vector.load %arg6[%c0_23, %c0_24, %c0_25] : memref<4x248x224xbf16, #tpu.memory_space<vmem>>, vector<1x248x224xbf16>
    %35 = vector.shape_cast %34 : vector<1x248x224xbf16> to vector<248x224xbf16>
    %cst_26 = arith.constant dense<0.000000e+00> : vector<16x224xf32>
    %36 = tpu.matmul %33, %35, %cst_26 {dimension_numbers = #tpu.dot_dimension_numbers<[1], [0], [0], [1], [0, 0, 1, 1], [], []>} : vector<16x248xbf16>, vector<248x224xbf16>, vector<16x224xf32> -> vector<16x224xf32>
    %37 = vector.extract_strided_slice %32 {offsets = [16, 0], sizes = [16, 248], strides = [1, 1]} : vector<64x248xbf16> to vector<16x248xbf16>
    %c1_27 = arith.constant 1 : index
    %c0_28 = arith.constant 0 : index
    %c0_29 = arith.constant 0 : index
    %38 = vector.load %arg6[%c1_27, %c0_28, %c0_29] : memref<4x248x224xbf16, #tpu.memory_space<vmem>>, vector<1x248x224xbf16>
    %39 = vector.shape_cast %38 : vector<1x248x224xbf16> to vector<248x224xbf16>
    %cst_30 = arith.constant dense<0.000000e+00> : vector<16x224xf32>
    %40 = tpu.matmul %37, %39, %cst_30 {dimension_numbers = #tpu.dot_dimension_numbers<[1], [0], [0], [1], [0, 0, 1, 1], [], []>} : vector<16x248xbf16>, vector<248x224xbf16>, vector<16x224xf32> -> vector<16x224xf32>
    %41 = arith.addf %36, %40 : vector<16x224xf32>
    %42 = vector.extract_strided_slice %32 {offsets = [32, 0], sizes = [16, 248], strides = [1, 1]} : vector<64x248xbf16> to vector<16x248xbf16>
    %c2_31 = arith.constant 2 : index
    %c0_32 = arith.constant 0 : index
    %c0_33 = arith.constant 0 : index
    %43 = vector.load %arg6[%c2_31, %c0_32, %c0_33] : memref<4x248x224xbf16, #tpu.memory_space<vmem>>, vector<1x248x224xbf16>
    %44 = vector.shape_cast %43 : vector<1x248x224xbf16> to vector<248x224xbf16>
    %cst_34 = arith.constant dense<0.000000e+00> : vector<16x224xf32>
    %45 = tpu.matmul %42, %44, %cst_34 {dimension_numbers = #tpu.dot_dimension_numbers<[1], [0], [0], [1], [0, 0, 1, 1], [], []>} : vector<16x248xbf16>, vector<248x224xbf16>, vector<16x224xf32> -> vector<16x224xf32>
    %46 = arith.addf %41, %45 : vector<16x224xf32>
    %47 = vector.extract_strided_slice %32 {offsets = [48, 0], sizes = [16, 248], strides = [1, 1]} : vector<64x248xbf16> to vector<16x248xbf16>
    %c3_35 = arith.constant 3 : index
    %c0_36 = arith.constant 0 : index
    %c0_37 = arith.constant 0 : index
    %48 = vector.load %arg6[%c3_35, %c0_36, %c0_37] : memref<4x248x224xbf16, #tpu.memory_space<vmem>>, vector<1x248x224xbf16>
    %49 = vector.shape_cast %48 : vector<1x248x224xbf16> to vector<248x224xbf16>
    %cst_38 = arith.constant dense<0.000000e+00> : vector<16x224xf32>
    %50 = tpu.matmul %47, %49, %cst_38 {dimension_numbers = #tpu.dot_dimension_numbers<[1], [0], [0], [1], [0, 0, 1, 1], [], []>} : vector<16x248xbf16>, vector<248x224xbf16>, vector<16x224xf32> -> vector<16x224xf32>
    %51 = arith.addf %46, %50 : vector<16x224xf32>
    %c0_39 = arith.constant 0 : index
    %c0_40 = arith.constant 0 : index
    %52 = vector.load %arg7[%c0_39, %c0_40] : memref<1x224xf32, #tpu.memory_space<vmem>>, vector<1x224xf32>
    %53 = vector.broadcast %52 : vector<1x224xf32> to vector<16x224xf32>
    %54 = arith.addf %51, %53 : vector<16x224xf32>
    %cst_41 = arith.constant 0.000000e+00 : f32
    %55 = vector.broadcast %cst_41 : f32 to vector<16x224xf32>
    %56 = arith.maximumf %54, %55 : vector<16x224xf32>
    %57 = arith.truncf %56 : vector<16x224xf32> to vector<16x224xbf16>
    %c0_42 = arith.constant 0 : index
    %c0_43 = arith.constant 0 : index
    %58 = vector.load %arg8[%c0_42, %c0_43] : memref<32x16xbf16, #tpu.memory_space<vmem>>, vector<32x16xbf16>
    %cst_44 = arith.constant dense<0.000000e+00> : vector<32x224xf32>
    %59 = tpu.matmul %58, %57, %cst_44 {dimension_numbers = #tpu.dot_dimension_numbers<[1], [0], [0], [1], [0, 0, 1, 1], [], []>} : vector<32x16xbf16>, vector<16x224xbf16>, vector<32x224xf32> -> vector<32x224xf32>
    %60 = arith.truncf %59 : vector<32x224xf32> to vector<32x224xbf16>
    %61 = vector.extract_strided_slice %60 {offsets = [0, 0], sizes = [8, 224], strides = [1, 1]} : vector<32x224xbf16> to vector<8x224xbf16>
    %c0_45 = arith.constant 0 : index
    %c0_46 = arith.constant 0 : index
    %c0_47 = arith.constant 0 : index
    %62 = vector.load %arg9[%c0_45, %c0_46, %c0_47] : memref<4x224x192xbf16, #tpu.memory_space<vmem>>, vector<1x224x192xbf16>
    %63 = vector.shape_cast %62 : vector<1x224x192xbf16> to vector<224x192xbf16>
    %cst_48 = arith.constant dense<0.000000e+00> : vector<8x192xf32>
    %64 = tpu.matmul %61, %63, %cst_48 {dimension_numbers = #tpu.dot_dimension_numbers<[1], [0], [0], [1], [0, 0, 1, 1], [], []>} : vector<8x224xbf16>, vector<224x192xbf16>, vector<8x192xf32> -> vector<8x192xf32>
    %65 = vector.extract_strided_slice %60 {offsets = [8, 0], sizes = [8, 224], strides = [1, 1]} : vector<32x224xbf16> to vector<8x224xbf16>
    %c1_49 = arith.constant 1 : index
    %c0_50 = arith.constant 0 : index
    %c0_51 = arith.constant 0 : index
    %66 = vector.load %arg9[%c1_49, %c0_50, %c0_51] : memref<4x224x192xbf16, #tpu.memory_space<vmem>>, vector<1x224x192xbf16>
    %67 = vector.shape_cast %66 : vector<1x224x192xbf16> to vector<224x192xbf16>
    %cst_52 = arith.constant dense<0.000000e+00> : vector<8x192xf32>
    %68 = tpu.matmul %65, %67, %cst_52 {dimension_numbers = #tpu.dot_dimension_numbers<[1], [0], [0], [1], [0, 0, 1, 1], [], []>} : vector<8x224xbf16>, vector<224x192xbf16>, vector<8x192xf32> -> vector<8x192xf32>
    %69 = arith.addf %64, %68 : vector<8x192xf32>
    %70 = vector.extract_strided_slice %60 {offsets = [16, 0], sizes = [8, 224], strides = [1, 1]} : vector<32x224xbf16> to vector<8x224xbf16>
    %c2_53 = arith.constant 2 : index
    %c0_54 = arith.constant 0 : index
    %c0_55 = arith.constant 0 : index
    %71 = vector.load %arg9[%c2_53, %c0_54, %c0_55] : memref<4x224x192xbf16, #tpu.memory_space<vmem>>, vector<1x224x192xbf16>
    %72 = vector.shape_cast %71 : vector<1x224x192xbf16> to vector<224x192xbf16>
    %cst_56 = arith.constant dense<0.000000e+00> : vector<8x192xf32>
    %73 = tpu.matmul %70, %72, %cst_56 {dimension_numbers = #tpu.dot_dimension_numbers<[1], [0], [0], [1], [0, 0, 1, 1], [], []>} : vector<8x224xbf16>, vector<224x192xbf16>, vector<8x192xf32> -> vector<8x192xf32>
    %74 = arith.addf %69, %73 : vector<8x192xf32>
    %75 = vector.extract_strided_slice %60 {offsets = [24, 0], sizes = [8, 224], strides = [1, 1]} : vector<32x224xbf16> to vector<8x224xbf16>
    %c3_57 = arith.constant 3 : index
    %c0_58 = arith.constant 0 : index
    %c0_59 = arith.constant 0 : index
    %76 = vector.load %arg9[%c3_57, %c0_58, %c0_59] : memref<4x224x192xbf16, #tpu.memory_space<vmem>>, vector<1x224x192xbf16>
    %77 = vector.shape_cast %76 : vector<1x224x192xbf16> to vector<224x192xbf16>
    %cst_60 = arith.constant dense<0.000000e+00> : vector<8x192xf32>
    %78 = tpu.matmul %75, %77, %cst_60 {dimension_numbers = #tpu.dot_dimension_numbers<[1], [0], [0], [1], [0, 0, 1, 1], [], []>} : vector<8x224xbf16>, vector<224x192xbf16>, vector<8x192xf32> -> vector<8x192xf32>
    %79 = arith.addf %74, %78 : vector<8x192xf32>
    %c0_61 = arith.constant 0 : index
    %c0_62 = arith.constant 0 : index
    %80 = vector.load %arg10[%c0_61, %c0_62] : memref<1x192xf32, #tpu.memory_space<vmem>>, vector<1x192xf32>
    %81 = vector.broadcast %80 : vector<1x192xf32> to vector<8x192xf32>
    %82 = arith.addf %79, %81 : vector<8x192xf32>
    %cst_63 = arith.constant 0.000000e+00 : f32
    %83 = vector.broadcast %cst_63 : f32 to vector<8x192xf32>
    %84 = arith.maximumf %82, %83 : vector<8x192xf32>
    %85 = arith.truncf %84 : vector<8x192xf32> to vector<8x192xbf16>
    %c0_64 = arith.constant 0 : index
    %c0_65 = arith.constant 0 : index
    %86 = vector.load %arg11[%c0_64, %c0_65] : memref<32x8xbf16, #tpu.memory_space<vmem>>, vector<32x8xbf16>
    %cst_66 = arith.constant dense<0.000000e+00> : vector<32x192xf32>
    %87 = tpu.matmul %86, %85, %cst_66 {dimension_numbers = #tpu.dot_dimension_numbers<[1], [0], [0], [1], [0, 0, 1, 1], [], []>} : vector<32x8xbf16>, vector<8x192xbf16>, vector<32x192xf32> -> vector<32x192xf32>
    %88 = arith.truncf %87 : vector<32x192xf32> to vector<32x192xbf16>
    %89 = vector.extract_strided_slice %88 {offsets = [0, 0], sizes = [8, 192], strides = [1, 1]} : vector<32x192xbf16> to vector<8x192xbf16>
    %c0_67 = arith.constant 0 : index
    %c0_68 = arith.constant 0 : index
    %c0_69 = arith.constant 0 : index
    %90 = vector.load %arg12[%c0_67, %c0_68, %c0_69] : memref<4x192x128xbf16, #tpu.memory_space<vmem>>, vector<1x192x128xbf16>
    %91 = vector.shape_cast %90 : vector<1x192x128xbf16> to vector<192x128xbf16>
    %cst_70 = arith.constant dense<0.000000e+00> : vector<8x128xf32>
    %92 = tpu.matmul %89, %91, %cst_70 {dimension_numbers = #tpu.dot_dimension_numbers<[1], [0], [0], [1], [0, 0, 1, 1], [], []>} : vector<8x192xbf16>, vector<192x128xbf16>, vector<8x128xf32> -> vector<8x128xf32>
    %93 = vector.extract_strided_slice %88 {offsets = [8, 0], sizes = [8, 192], strides = [1, 1]} : vector<32x192xbf16> to vector<8x192xbf16>
    %c1_71 = arith.constant 1 : index
    %c0_72 = arith.constant 0 : index
    %c0_73 = arith.constant 0 : index
    %94 = vector.load %arg12[%c1_71, %c0_72, %c0_73] : memref<4x192x128xbf16, #tpu.memory_space<vmem>>, vector<1x192x128xbf16>
    %95 = vector.shape_cast %94 : vector<1x192x128xbf16> to vector<192x128xbf16>
    %cst_74 = arith.constant dense<0.000000e+00> : vector<8x128xf32>
    %96 = tpu.matmul %93, %95, %cst_74 {dimension_numbers = #tpu.dot_dimension_numbers<[1], [0], [0], [1], [0, 0, 1, 1], [], []>} : vector<8x192xbf16>, vector<192x128xbf16>, vector<8x128xf32> -> vector<8x128xf32>
    %97 = arith.addf %92, %96 : vector<8x128xf32>
    %98 = vector.extract_strided_slice %88 {offsets = [16, 0], sizes = [8, 192], strides = [1, 1]} : vector<32x192xbf16> to vector<8x192xbf16>
    %c2_75 = arith.constant 2 : index
    %c0_76 = arith.constant 0 : index
    %c0_77 = arith.constant 0 : index
    %99 = vector.load %arg12[%c2_75, %c0_76, %c0_77] : memref<4x192x128xbf16, #tpu.memory_space<vmem>>, vector<1x192x128xbf16>
    %100 = vector.shape_cast %99 : vector<1x192x128xbf16> to vector<192x128xbf16>
    %cst_78 = arith.constant dense<0.000000e+00> : vector<8x128xf32>
    %101 = tpu.matmul %98, %100, %cst_78 {dimension_numbers = #tpu.dot_dimension_numbers<[1], [0], [0], [1], [0, 0, 1, 1], [], []>} : vector<8x192xbf16>, vector<192x128xbf16>, vector<8x128xf32> -> vector<8x128xf32>
    %102 = arith.addf %97, %101 : vector<8x128xf32>
    %103 = vector.extract_strided_slice %88 {offsets = [24, 0], sizes = [8, 192], strides = [1, 1]} : vector<32x192xbf16> to vector<8x192xbf16>
    %c3_79 = arith.constant 3 : index
    %c0_80 = arith.constant 0 : index
    %c0_81 = arith.constant 0 : index
    %104 = vector.load %arg12[%c3_79, %c0_80, %c0_81] : memref<4x192x128xbf16, #tpu.memory_space<vmem>>, vector<1x192x128xbf16>
    %105 = vector.shape_cast %104 : vector<1x192x128xbf16> to vector<192x128xbf16>
    %cst_82 = arith.constant dense<0.000000e+00> : vector<8x128xf32>
    %106 = tpu.matmul %103, %105, %cst_82 {dimension_numbers = #tpu.dot_dimension_numbers<[1], [0], [0], [1], [0, 0, 1, 1], [], []>} : vector<8x192xbf16>, vector<192x128xbf16>, vector<8x128xf32> -> vector<8x128xf32>
    %107 = arith.addf %102, %106 : vector<8x128xf32>
    %c0_83 = arith.constant 0 : index
    %c0_84 = arith.constant 0 : index
    %108 = vector.load %arg13[%c0_83, %c0_84] : memref<1x128xf32, #tpu.memory_space<vmem>>, vector<1x128xf32>
    %109 = vector.broadcast %108 : vector<1x128xf32> to vector<8x128xf32>
    %110 = arith.addf %107, %109 : vector<8x128xf32>
    %cst_85 = arith.constant 0.000000e+00 : f32
    %111 = vector.broadcast %cst_85 : f32 to vector<8x128xf32>
    %112 = arith.maximumf %110, %111 : vector<8x128xf32>
    %113 = arith.truncf %112 : vector<8x128xf32> to vector<8x128xbf16>
    %114 = vector.extract_strided_slice %113 {offsets = [0, 0], sizes = [1, 128], strides = [1, 1]} : vector<8x128xbf16> to vector<1x128xbf16>
    %c0_86 = arith.constant 0 : index
    %c0_87 = arith.constant 0 : index
    %c0_88 = arith.constant 0 : index
    %115 = vector.load %arg14[%c0_86, %c0_87, %c0_88] : memref<2x128x32xbf16, #tpu.memory_space<vmem>>, vector<1x128x32xbf16>
    %116 = vector.shape_cast %115 : vector<1x128x32xbf16> to vector<128x32xbf16>
    %cst_89 = arith.constant dense<0.000000e+00> : vector<1x32xf32>
    %117 = tpu.matmul %114, %116, %cst_89 {dimension_numbers = #tpu.dot_dimension_numbers<[1], [0], [0], [1], [0, 0, 1, 1], [], []>} : vector<1x128xbf16>, vector<128x32xbf16>, vector<1x32xf32> -> vector<1x32xf32>
    %118 = vector.extract_strided_slice %113 {offsets = [1, 0], sizes = [1, 128], strides = [1, 1]} : vector<8x128xbf16> to vector<1x128xbf16>
    %c1_90 = arith.constant 1 : index
    %c0_91 = arith.constant 0 : index
    %c0_92 = arith.constant 0 : index
    %119 = vector.load %arg14[%c1_90, %c0_91, %c0_92] : memref<2x128x32xbf16, #tpu.memory_space<vmem>>, vector<1x128x32xbf16>
    %120 = vector.shape_cast %119 : vector<1x128x32xbf16> to vector<128x32xbf16>
    %cst_93 = arith.constant dense<0.000000e+00> : vector<1x32xf32>
    %121 = tpu.matmul %118, %120, %cst_93 {dimension_numbers = #tpu.dot_dimension_numbers<[1], [0], [0], [1], [0, 0, 1, 1], [], []>} : vector<1x128xbf16>, vector<128x32xbf16>, vector<1x32xf32> -> vector<1x32xf32>
    %122 = arith.addf %117, %121 : vector<1x32xf32>
    %c0_94 = arith.constant 0 : index
    %c0_95 = arith.constant 0 : index
    %123 = vector.load %arg15[%c0_94, %c0_95] : memref<1x32xf32, #tpu.memory_space<vmem>>, vector<1x32xf32>
    %124 = arith.addf %122, %123 : vector<1x32xf32>
    %125 = vector.extract_strided_slice %124 {offsets = [0, 0], sizes = [1, 16], strides = [1, 1]} : vector<1x32xf32> to vector<1x16xf32>
    %126 = vector.shape_cast %125 : vector<1x16xf32> to vector<1x1x16xf32>
    %c0_96 = arith.constant 0 : index
    %c0_97 = arith.constant 0 : index
    %c0_98 = arith.constant 0 : index
    %127 = vector.load %arg16[%c0_96, %c0_97, %c0_98] : memref<1x1x16xf32, #tpu.memory_space<vmem>>, vector<1x1x16xf32>
    tpu.vector_store %arg16[%c0_96, %c0_97, %c0_98], %126 {strides = array<i32>} : memref<1x1x16xf32, #tpu.memory_space<vmem>>, vector<1x1x16xf32>,
    %128 = vector.extract_strided_slice %124 {offsets = [0, 16], sizes = [1, 16], strides = [1, 1]} : vector<1x32xf32> to vector<1x16xf32>
    %cst_99 = arith.constant 0.000000e+00 : f32
    %129 = vector.broadcast %cst_99 : f32 to vector<1x16xf32>
    %130 = arith.maximumf %128, %129 : vector<1x16xf32>
    %131 = math.absf %128 : vector<1x16xf32>
    %cst_100 = arith.constant 0.000000e+00 : f32
    %132 = vector.broadcast %cst_100 : f32 to vector<1x16xf32>
    %133 = arith.subf %132, %131 : vector<1x16xf32>
    %134 = math.exp %133 : vector<1x16xf32>
    %cst_101 = arith.constant 1.000000e+00 : f32
    %135 = vector.broadcast %cst_101 : f32 to vector<1x16xf32>
    %136 = arith.addf %135, %134 : vector<1x16xf32>
    %137 = math.log %136 : vector<1x16xf32>
    %138 = arith.addf %130, %137 : vector<1x16xf32>
    %cst_102 = arith.constant 9.99999974E-6 : f32
    %139 = vector.broadcast %cst_102 : f32 to vector<1x16xf32>
    %140 = arith.addf %138, %139 : vector<1x16xf32>
    %141 = vector.shape_cast %140 : vector<1x16xf32> to vector<1x1x16xf32>
    %c0_103 = arith.constant 0 : index
    %c0_104 = arith.constant 0 : index
    %c0_105 = arith.constant 0 : index
    %142 = vector.load %arg17[%c0_103, %c0_104, %c0_105] : memref<1x1x16xf32, #tpu.memory_space<vmem>>, vector<1x1x16xf32>
    tpu.vector_store %arg17[%c0_103, %c0_104, %c0_105], %141 {strides = array<i32>} : memref<1x1x16xf32, #tpu.memory_space<vmem>>, vector<1x1x16xf32>,
    return
  }
  func.func @transform_0(%arg0: i32) -> (i32, i32, i32) {
    %c0_i32 = arith.constant 0 : i32
    %c0_i32_0 = arith.constant 0 : i32
    %c0_i32_1 = arith.constant 0 : i32
    return %arg0, %c0_i32, %c0_i32_0 : i32, i32, i32
  }
  func.func @transform_1(%arg0: i32) -> (i32, i32) {
    %c0_i32 = arith.constant 0 : i32
    %c0_i32_0 = arith.constant 0 : i32
    %c0_i32_1 = arith.constant 0 : i32
    return %c0_i32, %c0_i32_0 : i32, i32
  }
  func.func @transform_2(%arg0: i32) -> (i32, i32, i32) {
    %c0_i32 = arith.constant 0 : i32
    %c0_i32_0 = arith.constant 0 : i32
    %c0_i32_1 = arith.constant 0 : i32
    %c0_i32_2 = arith.constant 0 : i32
    return %c0_i32, %c0_i32_0, %c0_i32_1 : i32, i32, i32
  }
  func.func @transform_3(%arg0: i32) -> (i32, i32) {
    %c0_i32 = arith.constant 0 : i32
    %c0_i32_0 = arith.constant 0 : i32
    %c0_i32_1 = arith.constant 0 : i32
    return %c0_i32, %c0_i32_0 : i32, i32
  }
  func.func @transform_4(%arg0: i32) -> (i32, i32) {
    %c0_i32 = arith.constant 0 : i32
    %c0_i32_0 = arith.constant 0 : i32
    %c0_i32_1 = arith.constant 0 : i32
    return %c0_i32, %c0_i32_0 : i32, i32
  }
  func.func @transform_5(%arg0: i32) -> (i32, i32, i32) {
    %c0_i32 = arith.constant 0 : i32
    %c0_i32_0 = arith.constant 0 : i32
    %c0_i32_1 = arith.constant 0 : i32
    %c0_i32_2 = arith.constant 0 : i32
    return %c0_i32, %c0_i32_0, %c0_i32_1 : i32, i32, i32
  }
  func.func @transform_6(%arg0: i32) -> (i32, i32) {
    %c0_i32 = arith.constant 0 : i32
    %c0_i32_0 = arith.constant 0 : i32
    %c0_i32_1 = arith.constant 0 : i32
    return %c0_i32, %c0_i32_0 : i32, i32
  }
  func.func @transform_7(%arg0: i32) -> (i32, i32) {
    %c0_i32 = arith.constant 0 : i32
    %c0_i32_0 = arith.constant 0 : i32
    %c0_i32_1 = arith.constant 0 : i32
    return %c0_i32, %c0_i32_0 : i32, i32
  }
  func.func @transform_8(%arg0: i32) -> (i32, i32, i32) {
    %c0_i32 = arith.constant 0 : i32
    %c0_i32_0 = arith.constant 0 : i32
    %c0_i32_1 = arith.constant 0 : i32
    %c0_i32_2 = arith.constant 0 : i32
    return %c0_i32, %c0_i32_0, %c0_i32_1 : i32, i32, i32
  }
  func.func @transform_9(%arg0: i32) -> (i32, i32) {
    %c0_i32 = arith.constant 0 : i32
    %c0_i32_0 = arith.constant 0 : i32
    %c0_i32_1 = arith.constant 0 : i32
    return %c0_i32, %c0_i32_0 : i32, i32
  }
  func.func @transform_10(%arg0: i32) -> (i32, i32) {
    %c0_i32 = arith.constant 0 : i32
    %c0_i32_0 = arith.constant 0 : i32
    %c0_i32_1 = arith.constant 0 : i32
    return %c0_i32, %c0_i32_0 : i32, i32
  }
  func.func @transform_11(%arg0: i32) -> (i32, i32, i32) {
    %c0_i32 = arith.constant 0 : i32
    %c0_i32_0 = arith.constant 0 : i32
    %c0_i32_1 = arith.constant 0 : i32
    %c0_i32_2 = arith.constant 0 : i32
    return %c0_i32, %c0_i32_0, %c0_i32_1 : i32, i32, i32
  }
  func.func @transform_12(%arg0: i32) -> (i32, i32) {
    %c0_i32 = arith.constant 0 : i32
    %c0_i32_0 = arith.constant 0 : i32
    %c0_i32_1 = arith.constant 0 : i32
    return %c0_i32, %c0_i32_0 : i32, i32
  }
  func.func @transform_13(%arg0: i32) -> (i32, i32, i32) {
    %c0_i32 = arith.constant 0 : i32
    %c0_i32_0 = arith.constant 0 : i32
    %c0_i32_1 = arith.constant 0 : i32
    %c0_i32_2 = arith.constant 0 : i32
    return %c0_i32, %c0_i32_0, %c0_i32_1 : i32, i32, i32
  }
  func.func @transform_14(%arg0: i32) -> (i32, i32) {
    %c0_i32 = arith.constant 0 : i32
    %c0_i32_0 = arith.constant 0 : i32
    %c0_i32_1 = arith.constant 0 : i32
    return %c0_i32, %c0_i32_0 : i32, i32
  }
  func.func @transform_15(%arg0: i32) -> (i32, i32, i32) {
    %c0_i32 = arith.constant 0 : i32
    %c0_i32_0 = arith.constant 0 : i32
    %c0_i32_1 = arith.constant 0 : i32
    return %arg0, %c0_i32, %c0_i32_0 : i32, i32, i32
  }
  func.func @transform_16(%arg0: i32) -> (i32, i32, i32) {
    %c0_i32 = arith.constant 0 : i32
    %c0_i32_0 = arith.constant 0 : i32
    %c0_i32_1 = arith.constant 0 : i32
    return %arg0, %c0_i32, %c0_i32_0 : i32, i32, i32
  }
}

</mosaic_0001>

<llo_original>
// kernel: conv_encoder_forward.1
$region0: #{conv_encoder_forward.1}
  #allocation0 [shape = 'u32[]', space=smem, size = 0x4, offset = 0x4, fixed_abs, tag = 'smem constant byte address 0x4 - core index']
  #allocation1 [shape = 'u32[144,128]{1,0:T(1,128)}', space=vmem, size = 0x12000, scoped, tag = 'internal scratch']
  %s0 = inlined_call_operand.vmem [shape: bf16[6,64,192], index: 0, kind: input, shape index: {}]
  %s1 = inlined_call_operand.vmem [shape: bf16[128,64], index: 1, kind: input, shape index: {}]
  %s2 = inlined_call_operand.vmem [shape: bf16[4,192,248], index: 2, kind: input, shape index: {}]
  %s3 = inlined_call_operand.vmem [shape: f32[1,248], index: 3, kind: input, shape index: {}]
  %s4 = inlined_call_operand.vmem [shape: bf16[64,32], index: 4, kind: input, shape index: {}]
  %s5 = inlined_call_operand.vmem [shape: bf16[4,248,224], index: 5, kind: input, shape index: {}]
  %s6 = inlined_call_operand.vmem [shape: f32[1,224], index: 6, kind: input, shape index: {}]
  %s7 = inlined_call_operand.vmem [shape: bf16[32,16], index: 7, kind: input, shape index: {}]
  %s8 = inlined_call_operand.vmem [shape: bf16[4,224,192], index: 8, kind: input, shape index: {}]
  %s9 = inlined_call_operand.vmem [shape: f32[1,192], index: 9, kind: input, shape index: {}]
  %s10 = inlined_call_operand.vmem [shape: bf16[32,8], index: 10, kind: input, shape index: {}]
  %s11 = inlined_call_operand.vmem [shape: bf16[4,192,128], index: 11, kind: input, shape index: {}]
  %s12 = inlined_call_operand.vmem [shape: f32[1,128], index: 12, kind: input, shape index: {}]
  %s13 = inlined_call_operand.vmem [shape: bf16[2,128,32], index: 13, kind: input, shape index: {}]
  %s14 = inlined_call_operand.vmem [shape: f32[1,32], index: 14, kind: input, shape index: {}]
  %s15 = inlined_call_operand.vmem [shape: f32[6,1,16], index: 15, kind: output, shape index: {0}]
  %s16 = inlined_call_operand.vmem [shape: f32[6,1,16], index: 16, kind: output, shape index: {1}]
  %17 = xla_tuple %s15, %s16
  %s18 = sld [smem:[#allocation0]]
  $region101: #{conv_encoder_forward.1} parent=0
    _
  %s20 = ssub.s32 1, %s18
  %s21 = scalar_select 0, %s20, %s18
  loop: start=0, step=1, limit=8
  $region2: #{conv_encoder_forward.1} parent=0 // loop_pre_header
    _
  $region3: #{conv_encoder_forward.1} parent=0 // loop_header
    %s23 = sphi 0, %s27
    %p24 = scmp.ge.s32.totalorder %s23, 8
    %s33 = sphi 0, %s35
    %s36 = sphi 0, %s33
    %s37 = sphi 0, %s36
    %s53 = sphi 0, %s37
    %s57 = sphi 0, %s57
    %s59 = sphi 0, %s57
    %s60 = sphi 0, %s59
    %s74 = sphi 0, %s60
    %s78 = sphi 0, %s78
    %s80 = sphi 0, %s78
    %s81 = sphi 0, %s80
    %s95 = sphi 0, %s81
    %s99 = sphi 0, %s99
    %s101 = sphi 0, %s99
    %s102 = sphi 0, %s101
    %s116 = sphi 0, %s102
    %s120 = sphi 0, %s120
    %s122 = sphi 0, %s120
    %s123 = sphi 0, %s122
    %s137 = sphi 0, %s123
    %s141 = sphi 0, %s141
    %s143 = sphi 0, %s141
    %s144 = sphi 0, %s143
    %s158 = sphi 0, %s144
    %s162 = sphi 0, %s162
    %s164 = sphi 0, %s162
    %s165 = sphi 0, %s164
    %s179 = sphi 0, %s165
    %s183 = sphi 0, %s183
    %s185 = sphi 0, %s183
    %s186 = sphi 0, %s185
    %s200 = sphi 0, %s186
    %s204 = sphi 0, %s204
    %s206 = sphi 0, %s204
    %s207 = sphi 0, %s206
    %s221 = sphi 0, %s207
    %s225 = sphi 0, %s225
    %s227 = sphi 0, %s225
    %s228 = sphi 0, %s227
    %s242 = sphi 0, %s228
    %s246 = sphi 0, %s246
    %s248 = sphi 0, %s246
    %s249 = sphi 0, %s248
    %s263 = sphi 0, %s249
    %s267 = sphi 0, %s267
    %s269 = sphi 0, %s267
    %s270 = sphi 0, %s269
    %s284 = sphi 0, %s270
    %s288 = sphi 0, %s288
    %s290 = sphi 0, %s288
    %s291 = sphi 0, %s290
    %s305 = sphi 0, %s291
    %s309 = sphi 0, %s309
    %s311 = sphi 0, %s309
    %s312 = sphi 0, %s311
    %s326 = sphi 0, %s312
    %s330 = sphi 0, %s330
    %s332 = sphi 0, %s330
    %s333 = sphi 0, %s332
    %s347 = sphi 0, %s333
    %s353 = sphi 0, %s355
    %s356 = sphi 0, %s353
    %s357 = sphi 0, %s356
    %s373 = sphi 0, %s357
    %s379 = sphi 0, %s381
    %s382 = sphi 0, %s379
    %s383 = sphi 0, %s382
    %s399 = sphi 0, %s383
  $region4: #{conv_encoder_forward.1} parent=0 // loop_header_branch
    %26 = sbr.rel (%p24) target = $region8
  $region5: #{conv_encoder_forward.1} parent=0 // loop_body
    %s28 = ssub.s32 %s23, 1
    %s29 = ssub.s32 %s23, 2
    %s30 = sadd.s32 %s23, 1
    %s31 = ssub.s32 %s23, %s30
    %p32 = scmp.eq.s32.totalorder %s31, 0
    %s34 = sadd.s32 %s33, 1
    %s35 = scalar_select %p32, %s33, %s34
    %p38 = pneg %p32
    %p39 = scmp.eq.s32.totalorder %s23, 5
    %p40 = por %p38, %p39
    %p41 = scmp.ne.s32.totalorder %s33, %s36
    %p42 = scmp.eq.s32.totalorder %s23, 0
    %p43 = por %p41, %p42
    %p44 = scmp.ne.s32.totalorder %s33, %s36
    %p45 = scmp.eq.s32.totalorder %s28, 5
    %p46 = por %p44, %p45
    %p47 = scmp.ne.s32.totalorder %s36, %s37
    %p48 = scmp.eq.s32.totalorder %s28, 0
    %p49 = por %p47, %p48
    %p50 = scmp.ne.s32.totalorder %s36, %s37
    %p51 = scmp.eq.s32.totalorder %s29, 5
    %p52 = por %p50, %p51
    %p54 = scmp.ne.s32.totalorder %s37, %s53
    %p55 = scmp.eq.s32.totalorder %s29, 0
    %p56 = por %p54, %p55
    %s58 = sadd.s32 %s57, 1
    %p61 = scmp.eq.s32.totalorder %s23, 5
    %p62 = scmp.ne.s32.totalorder %s57, %s59
    %p63 = scmp.eq.s32.totalorder %s23, 0
    %p64 = por %p62, %p63
    %p65 = scmp.ne.s32.totalorder %s57, %s59
    %p66 = scmp.eq.s32.totalorder %s28, 5
    %p67 = por %p65, %p66
    %p68 = scmp.ne.s32.totalorder %s59, %s60
    %p69 = scmp.eq.s32.totalorder %s28, 0
    %p70 = por %p68, %p69
    %p71 = scmp.ne.s32.totalorder %s59, %s60
    %p72 = scmp.eq.s32.totalorder %s29, 5
    %p73 = por %p71, %p72
    %p75 = scmp.ne.s32.totalorder %s60, %s74
    %p76 = scmp.eq.s32.totalorder %s29, 0
    %p77 = por %p75, %p76
    %s79 = sadd.s32 %s78, 1
    %p82 = scmp.eq.s32.totalorder %s23, 5
    %p83 = scmp.ne.s32.totalorder %s78, %s80
    %p84 = scmp.eq.s32.totalorder %s23, 0
    %p85 = por %p83, %p84
    %p86 = scmp.ne.s32.totalorder %s78, %s80
    %p87 = scmp.eq.s32.totalorder %s28, 5
    %p88 = por %p86, %p87
    %p89 = scmp.ne.s32.totalorder %s80, %s81
    %p90 = scmp.eq.s32.totalorder %s28, 0
    %p91 = por %p89, %p90
    %p92 = scmp.ne.s32.totalorder %s80, %s81
    %p93 = scmp.eq.s32.totalorder %s29, 5
    %p94 = por %p92, %p93
    %p96 = scmp.ne.s32.totalorder %s81, %s95
    %p97 = scmp.eq.s32.totalorder %s29, 0
    %p98 = por %p96, %p97
    %s100 = sadd.s32 %s99, 1
    %p103 = scmp.eq.s32.totalorder %s23, 5
    %p104 = scmp.ne.s32.totalorder %s99, %s101
    %p105 = scmp.eq.s32.totalorder %s23, 0
    %p106 = por %p104, %p105
    %p107 = scmp.ne.s32.totalorder %s99, %s101
    %p108 = scmp.eq.s32.totalorder %s28, 5
    %p109 = por %p107, %p108
    %p110 = scmp.ne.s32.totalorder %s101, %s102
    %p111 = scmp.eq.s32.totalorder %s28, 0
    %p112 = por %p110, %p111
    %p113 = scmp.ne.s32.totalorder %s101, %s102
    %p114 = scmp.eq.s32.totalorder %s29, 5
    %p115 = por %p113, %p114
    %p117 = scmp.ne.s32.totalorder %s102, %s116
    %p118 = scmp.eq.s32.totalorder %s29, 0
    %p119 = por %p117, %p118
    %s121 = sadd.s32 %s120, 1
    %p124 = scmp.eq.s32.totalorder %s23, 5
    %p125 = scmp.ne.s32.totalorder %s120, %s122
    %p126 = scmp.eq.s32.totalorder %s23, 0
    %p127 = por %p125, %p126
    %p128 = scmp.ne.s32.totalorder %s120, %s122
    %p129 = scmp.eq.s32.totalorder %s28, 5
    %p130 = por %p128, %p129
    %p131 = scmp.ne.s32.totalorder %s122, %s123
    %p132 = scmp.eq.s32.totalorder %s28, 0
    %p133 = por %p131, %p132
    %p134 = scmp.ne.s32.totalorder %s122, %s123
    %p135 = scmp.eq.s32.totalorder %s29, 5
    %p136 = por %p134, %p135
    %p138 = scmp.ne.s32.totalorder %s123, %s137
    %p139 = scmp.eq.s32.totalorder %s29, 0
    %p140 = por %p138, %p139
    %s142 = sadd.s32 %s141, 1
    %p145 = scmp.eq.s32.totalorder %s23, 5
    %p146 = scmp.ne.s32.totalorder %s141, %s143
    %p147 = scmp.eq.s32.totalorder %s23, 0
    %p148 = por %p146, %p147
    %p149 = scmp.ne.s32.totalorder %s141, %s143
    %p150 = scmp.eq.s32.totalorder %s28, 5
    %p151 = por %p149, %p150
    %p152 = scmp.ne.s32.totalorder %s143, %s144
    %p153 = scmp.eq.s32.totalorder %s28, 0
    %p154 = por %p152, %p153
    %p155 = scmp.ne.s32.totalorder %s143, %s144
    %p156 = scmp.eq.s32.totalorder %s29, 5
    %p157 = por %p155, %p156
    %p159 = scmp.ne.s32.totalorder %s144, %s158
    %p160 = scmp.eq.s32.totalorder %s29, 0
    %p161 = por %p159, %p160
    %s163 = sadd.s32 %s162, 1
    %p166 = scmp.eq.s32.totalorder %s23, 5
    %p167 = scmp.ne.s32.totalorder %s162, %s164
    %p168 = scmp.eq.s32.totalorder %s23, 0
    %p169 = por %p167, %p168
    %p170 = scmp.ne.s32.totalorder %s162, %s164
    %p171 = scmp.eq.s32.totalorder %s28, 5
    %p172 = por %p170, %p171
    %p173 = scmp.ne.s32.totalorder %s164, %s165
    %p174 = scmp.eq.s32.totalorder %s28, 0
    %p175 = por %p173, %p174
    %p176 = scmp.ne.s32.totalorder %s164, %s165
    %p177 = scmp.eq.s32.totalorder %s29, 5
    %p178 = por %p176, %p177
    %p180 = scmp.ne.s32.totalorder %s165, %s179
    %p181 = scmp.eq.s32.totalorder %s29, 0
    %p182 = por %p180, %p181
    %s184 = sadd.s32 %s183, 1
    %p187 = scmp.eq.s32.totalorder %s23, 5
    %p188 = scmp.ne.s32.totalorder %s183, %s185
    %p189 = scmp.eq.s32.totalorder %s23, 0
    %p190 = por %p188, %p189
    %p191 = scmp.ne.s32.totalorder %s183, %s185
    %p192 = scmp.eq.s32.totalorder %s28, 5
    %p193 = por %p191, %p192
    %p194 = scmp.ne.s32.totalorder %s185, %s186
    %p195 = scmp.eq.s32.totalorder %s28, 0
    %p196 = por %p194, %p195
    %p197 = scmp.ne.s32.totalorder %s185, %s186
    %p198 = scmp.eq.s32.totalorder %s29, 5
    %p199 = por %p197, %p198
    %p201 = scmp.ne.s32.totalorder %s186, %s200
    %p202 = scmp.eq.s32.totalorder %s29, 0
    %p203 = por %p201, %p202
    %s205 = sadd.s32 %s204, 1
    %p208 = scmp.eq.s32.totalorder %s23, 5
    %p209 = scmp.ne.s32.totalorder %s204, %s206
    %p210 = scmp.eq.s32.totalorder %s23, 0
    %p211 = por %p209, %p210
    %p212 = scmp.ne.s32.totalorder %s204, %s206
    %p213 = scmp.eq.s32.totalorder %s28, 5
    %p214 = por %p212, %p213
    %p215 = scmp.ne.s32.totalorder %s206, %s207
    %p216 = scmp.eq.s32.totalorder %s28, 0
    %p217 = por %p215, %p216
    %p218 = scmp.ne.s32.totalorder %s206, %s207
    %p219 = scmp.eq.s32.totalorder %s29, 5
    %p220 = por %p218, %p219
    %p222 = scmp.ne.s32.totalorder %s207, %s221
    %p223 = scmp.eq.s32.totalorder %s29, 0
    %p224 = por %p222, %p223
    %s226 = sadd.s32 %s225, 1
    %p229 = scmp.eq.s32.totalorder %s23, 5
    %p230 = scmp.ne.s32.totalorder %s225, %s227
    %p231 = scmp.eq.s32.totalorder %s23, 0
    %p232 = por %p230, %p231
    %p233 = scmp.ne.s32.totalorder %s225, %s227
    %p234 = scmp.eq.s32.totalorder %s28, 5
    %p235 = por %p233, %p234
    %p236 = scmp.ne.s32.totalorder %s227, %s228
    %p237 = scmp.eq.s32.totalorder %s28, 0
    %p238 = por %p236, %p237
    %p239 = scmp.ne.s32.totalorder %s227, %s228
    %p240 = scmp.eq.s32.totalorder %s29, 5
    %p241 = por %p239, %p240
    %p243 = scmp.ne.s32.totalorder %s228, %s242
    %p244 = scmp.eq.s32.totalorder %s29, 0
    %p245 = por %p243, %p244
    %s247 = sadd.s32 %s246, 1
    %p250 = scmp.eq.s32.totalorder %s23, 5
    %p251 = scmp.ne.s32.totalorder %s246, %s248
    %p252 = scmp.eq.s32.totalorder %s23, 0
    %p253 = por %p251, %p252
    %p254 = scmp.ne.s32.totalorder %s246, %s248
    %p255 = scmp.eq.s32.totalorder %s28, 5
    %p256 = por %p254, %p255
    %p257 = scmp.ne.s32.totalorder %s248, %s249
    %p258 = scmp.eq.s32.totalorder %s28, 0
    %p259 = por %p257, %p258
    %p260 = scmp.ne.s32.totalorder %s248, %s249
    %p261 = scmp.eq.s32.totalorder %s29, 5
    %p262 = por %p260, %p261
    %p264 = scmp.ne.s32.totalorder %s249, %s263
    %p265 = scmp.eq.s32.totalorder %s29, 0
    %p266 = por %p264, %p265
    %s268 = sadd.s32 %s267, 1
    %p271 = scmp.eq.s32.totalorder %s23, 5
    %p272 = scmp.ne.s32.totalorder %s267, %s269
    %p273 = scmp.eq.s32.totalorder %s23, 0
    %p274 = por %p272, %p273
    %p275 = scmp.ne.s32.totalorder %s267, %s269
    %p276 = scmp.eq.s32.totalorder %s28, 5
    %p277 = por %p275, %p276
    %p278 = scmp.ne.s32.totalorder %s269, %s270
    %p279 = scmp.eq.s32.totalorder %s28, 0
    %p280 = por %p278, %p279
    %p281 = scmp.ne.s32.totalorder %s269, %s270
    %p282 = scmp.eq.s32.totalorder %s29, 5
    %p283 = por %p281, %p282
    %p285 = scmp.ne.s32.totalorder %s270, %s284
    %p286 = scmp.eq.s32.totalorder %s29, 0
    %p287 = por %p285, %p286
    %s289 = sadd.s32 %s288, 1
    %p292 = scmp.eq.s32.totalorder %s23, 5
    %p293 = scmp.ne.s32.totalorder %s288, %s290
    %p294 = scmp.eq.s32.totalorder %s23, 0
    %p295 = por %p293, %p294
    %p296 = scmp.ne.s32.totalorder %s288, %s290
    %p297 = scmp.eq.s32.totalorder %s28, 5
    %p298 = por %p296, %p297
    %p299 = scmp.ne.s32.totalorder %s290, %s291
    %p300 = scmp.eq.s32.totalorder %s28, 0
    %p301 = por %p299, %p300
    %p302 = scmp.ne.s32.totalorder %s290, %s291
    %p303 = scmp.eq.s32.totalorder %s29, 5
    %p304 = por %p302, %p303
    %p306 = scmp.ne.s32.totalorder %s291, %s305
    %p307 = scmp.eq.s32.totalorder %s29, 0
    %p308 = por %p306, %p307
    %s310 = sadd.s32 %s309, 1
    %p313 = scmp.eq.s32.totalorder %s23, 5
    %p314 = scmp.ne.s32.totalorder %s309, %s311
    %p315 = scmp.eq.s32.totalorder %s23, 0
    %p316 = por %p314, %p315
    %p317 = scmp.ne.s32.totalorder %s309, %s311
    %p318 = scmp.eq.s32.totalorder %s28, 5
    %p319 = por %p317, %p318
    %p320 = scmp.ne.s32.totalorder %s311, %s312
    %p321 = scmp.eq.s32.totalorder %s28, 0
    %p322 = por %p320, %p321
    %p323 = scmp.ne.s32.totalorder %s311, %s312
    %p324 = scmp.eq.s32.totalorder %s29, 5
    %p325 = por %p323, %p324
    %p327 = scmp.ne.s32.totalorder %s312, %s326
    %p328 = scmp.eq.s32.totalorder %s29, 0
    %p329 = por %p327, %p328
    %s331 = sadd.s32 %s330, 1
    %p334 = scmp.eq.s32.totalorder %s23, 5
    %p335 = scmp.ne.s32.totalorder %s330, %s332
    %p336 = scmp.eq.s32.totalorder %s23, 0
    %p337 = por %p335, %p336
    %p338 = scmp.ne.s32.totalorder %s330, %s332
    %p339 = scmp.eq.s32.totalorder %s28, 5
    %p340 = por %p338, %p339
    %p341 = scmp.ne.s32.totalorder %s332, %s333
    %p342 = scmp.eq.s32.totalorder %s28, 0
    %p343 = por %p341, %p342
    %p344 = scmp.ne.s32.totalorder %s332, %s333
    %p345 = scmp.eq.s32.totalorder %s29, 5
    %p346 = por %p344, %p345
    %p348 = scmp.ne.s32.totalorder %s333, %s347
    %p349 = scmp.eq.s32.totalorder %s29, 0
    %p350 = por %p348, %p349
    %s351 = ssub.s32 %s23, %s30
    %p352 = scmp.eq.s32.totalorder %s351, 0
    %s354 = sadd.s32 %s353, 1
    %s355 = scalar_select %p352, %s353, %s354
    %p358 = pneg %p352
    %p359 = scmp.eq.s32.totalorder %s23, 5
    %p360 = por %p358, %p359
    %p361 = scmp.ne.s32.totalorder %s353, %s356
    %p362 = scmp.eq.s32.totalorder %s23, 0
    %p363 = por %p361, %p362
    %p364 = scmp.ne.s32.totalorder %s353, %s356
    %p365 = scmp.eq.s32.totalorder %s28, 5
    %p366 = por %p364, %p365
    %p367 = scmp.ne.s32.totalorder %s356, %s357
    %p368 = scmp.eq.s32.totalorder %s28, 0
    %p369 = por %p367, %p368
    %p370 = scmp.ne.s32.totalorder %s356, %s357
    %p371 = scmp.eq.s32.totalorder %s29, 5
    %p372 = por %p370, %p371
    %p374 = scmp.ne.s32.totalorder %s357, %s373
    %p375 = scmp.eq.s32.totalorder %s29, 0
    %p376 = por %p374, %p375
    %s377 = ssub.s32 %s23, %s30
    %p378 = scmp.eq.s32.totalorder %s377, 0
    %s380 = sadd.s32 %s379, 1
    %s381 = scalar_select %p378, %s379, %s380
    %p384 = pneg %p378
    %p385 = scmp.eq.s32.totalorder %s23, 5
    %p386 = por %p384, %p385
    %p387 = scmp.ne.s32.totalorder %s379, %s382
    %p388 = scmp.eq.s32.totalorder %s23, 0
    %p389 = por %p387, %p388
    %p390 = scmp.ne.s32.totalorder %s379, %s382
    %p391 = scmp.eq.s32.totalorder %s28, 5
    %p392 = por %p390, %p391
    %p393 = scmp.ne.s32.totalorder %s382, %s383
    %p394 = scmp.eq.s32.totalorder %s28, 0
    %p395 = por %p393, %p394
    %p396 = scmp.ne.s32.totalorder %s382, %s383
    %p397 = scmp.eq.s32.totalorder %s29, 5
    %p398 = por %p396, %p397
    %p400 = scmp.ne.s32.totalorder %s383, %s399
    %p401 = scmp.eq.s32.totalorder %s29, 0
    %p402 = por %p400, %p401
    %p403 = scmp.le.s32.totalorder 1, %s23
    %p404 = scmp.lt.s32.totalorder %s23, 7
    %p405 = pnand %p403, %p404
    %p406 = pneg %p405
    // Predicated region
    $region9: #{conv_encoder_forward.1} parent=5 // pred_check
      _
    $region10: #{conv_encoder_forward.1} parent=5 // pred_check_branch
      %408 = sbr.rel (%p405) target = $region12
    $region11: #{conv_encoder_forward.1} parent=5 // pred_region
      %s409 = ssub.s32 %s23, 1
      // Predicated region
      $region13: #{conv_encoder_forward.1} parent=11 // pred_check
        %p410 = pneg %p70
      $region14: #{conv_encoder_forward.1} parent=11 // pred_check_branch
        %412 = sbr.rel (%p410) target = $region16
      $region15: #{conv_encoder_forward.1} parent=11 // pred_region
        _
      $region16: #{conv_encoder_forward.1} parent=11 // pred_fallthru
        _
      // Predicated region
      $region17: #{conv_encoder_forward.1} parent=11 // pred_check
        %p413 = pneg %p91
      $region18: #{conv_encoder_forward.1} parent=11 // pred_check_branch
        %415 = sbr.rel (%p413) target = $region20
      $region19: #{conv_encoder_forward.1} parent=11 // pred_region
        _
      $region20: #{conv_encoder_forward.1} parent=11 // pred_fallthru
        _
      // Predicated region
      $region21: #{conv_encoder_forward.1} parent=11 // pred_check
        %p416 = pneg %p112
      $region22: #{conv_encoder_forward.1} parent=11 // pred_check_branch
        %418 = sbr.rel (%p416) target = $region24
      $region23: #{conv_encoder_forward.1} parent=11 // pred_region
        _
      $region24: #{conv_encoder_forward.1} parent=11 // pred_fallthru
        _
      // Predicated region
      $region25: #{conv_encoder_forward.1} parent=11 // pred_check
        %p419 = pneg %p133
      $region26: #{conv_encoder_forward.1} parent=11 // pred_check_branch
        %421 = sbr.rel (%p419) target = $region28
      $region27: #{conv_encoder_forward.1} parent=11 // pred_region
        _
      $region28: #{conv_encoder_forward.1} parent=11 // pred_fallthru
        _
      // Predicated region
      $region29: #{conv_encoder_forward.1} parent=11 // pred_check
        %p422 = pneg %p154
      $region30: #{conv_encoder_forward.1} parent=11 // pred_check_branch
        %424 = sbr.rel (%p422) target = $region32
      $region31: #{conv_encoder_forward.1} parent=11 // pred_region
        _
      $region32: #{conv_encoder_forward.1} parent=11 // pred_fallthru
        _
      // Predicated region
      $region33: #{conv_encoder_forward.1} parent=11 // pred_check
        %p425 = pneg %p175
      $region34: #{conv_encoder_forward.1} parent=11 // pred_check_branch
        %427 = sbr.rel (%p425) target = $region36
      $region35: #{conv_encoder_forward.1} parent=11 // pred_region
        _
      $region36: #{conv_encoder_forward.1} parent=11 // pred_fallthru
        _
      // Predicated region
      $region37: #{conv_encoder_forward.1} parent=11 // pred_check
        %p428 = pneg %p196
      $region38: #{conv_encoder_forward.1} parent=11 // pred_check_branch
        %430 = sbr.rel (%p428) target = $region40
      $region39: #{conv_encoder_forward.1} parent=11 // pred_region
        _
      $region40: #{conv_encoder_forward.1} parent=11 // pred_fallthru
        _
      // Predicated region
      $region41: #{conv_encoder_forward.1} parent=11 // pred_check
        %p431 = pneg %p217
      $region42: #{conv_encoder_forward.1} parent=11 // pred_check_branch
        %433 = sbr.rel (%p431) target = $region44
      $region43: #{conv_encoder_forward.1} parent=11 // pred_region
        _
      $region44: #{conv_encoder_forward.1} parent=11 // pred_fallthru
        _
      // Predicated region
      $region45: #{conv_encoder_forward.1} parent=11 // pred_check
        %p434 = pneg %p238
      $region46: #{conv_encoder_forward.1} parent=11 // pred_check_branch
        %436 = sbr.rel (%p434) target = $region48
      $region47: #{conv_encoder_forward.1} parent=11 // pred_region
        _
      $region48: #{conv_encoder_forward.1} parent=11 // pred_fallthru
        _
      // Predicated region
      $region49: #{conv_encoder_forward.1} parent=11 // pred_check
        %p437 = pneg %p259
      $region50: #{conv_encoder_forward.1} parent=11 // pred_check_branch
        %439 = sbr.rel (%p437) target = $region52
      $region51: #{conv_encoder_forward.1} parent=11 // pred_region
        _
      $region52: #{conv_encoder_forward.1} parent=11 // pred_fallthru
        _
      // Predicated region
      $region53: #{conv_encoder_forward.1} parent=11 // pred_check
        %p440 = pneg %p280
      $region54: #{conv_encoder_forward.1} parent=11 // pred_check_branch
        %442 = sbr.rel (%p440) target = $region56
      $region55: #{conv_encoder_forward.1} parent=11 // pred_region
        _
      $region56: #{conv_encoder_forward.1} parent=11 // pred_fallthru
        _
      // Predicated region
      $region57: #{conv_encoder_forward.1} parent=11 // pred_check
        %p443 = pneg %p301
      $region58: #{conv_encoder_forward.1} parent=11 // pred_check_branch
        %445 = sbr.rel (%p443) target = $region60
      $region59: #{conv_encoder_forward.1} parent=11 // pred_region
        _
      $region60: #{conv_encoder_forward.1} parent=11 // pred_fallthru
        _
      // Predicated region
      $region61: #{conv_encoder_forward.1} parent=11 // pred_check
        %p446 = pneg %p322
      $region62: #{conv_encoder_forward.1} parent=11 // pred_check_branch
        %448 = sbr.rel (%p446) target = $region64
      $region63: #{conv_encoder_forward.1} parent=11 // pred_region
        _
      $region64: #{conv_encoder_forward.1} parent=11 // pred_fallthru
        _
      // Predicated region
      $region65: #{conv_encoder_forward.1} parent=11 // pred_check
        %p449 = pneg %p343
      $region66: #{conv_encoder_forward.1} parent=11 // pred_check_branch
        %451 = sbr.rel (%p449) target = $region68
      $region67: #{conv_encoder_forward.1} parent=11 // pred_region
        _
      $region68: #{conv_encoder_forward.1} parent=11 // pred_fallthru
        _
    $region12: #{conv_encoder_forward.1} parent=5 // pred_fallthru
      _
    %p452 = scmp.lt.s32.totalorder %s23, 6
    // Predicated region
    $region69: #{conv_encoder_forward.1} parent=5 // pred_check
      %p453 = pneg %p452
    $region70: #{conv_encoder_forward.1} parent=5 // pred_check_branch
      %455 = sbr.rel (%p453) target = $region72
    $region71: #{conv_encoder_forward.1} parent=5 // pred_region
      // Predicated region
      $region73: #{conv_encoder_forward.1} parent=71 // pred_check
        %p456 = pneg %p43
      $region74: #{conv_encoder_forward.1} parent=71 // pred_check_branch
        %458 = sbr.rel (%p456) target = $region76
      $region75: #{conv_encoder_forward.1} parent=71 // pred_region
        %p459 = scmp.lt.s32.totalorder %s23, 5
        %s460 = scalar_select %p459, %s23, 5
        %s461 = smul.addr %s460, 16
        %s462 = smul.addr %s461, 4
        %s463 = scalar_lea.vmem %s0, %s462
      $region76: #{conv_encoder_forward.1} parent=71 // pred_fallthru
        _
    $region72: #{conv_encoder_forward.1} parent=5 // pred_fallthru
      _
    %p464 = scmp.le.s32.totalorder 1, %s23
    %p465 = scmp.lt.s32.totalorder %s23, 7
    %p466 = pnand %p464, %p465
    %p467 = pneg %p466
    // Predicated region
    $region77: #{conv_encoder_forward.1} parent=5 // pred_check
      _
    $region78: #{conv_encoder_forward.1} parent=5 // pred_check_branch
      %469 = sbr.rel (%p466) target = $region80
    $region79: #{conv_encoder_forward.1} parent=5 // pred_region
      %s470 = ssub.s32 %s23, 1
      %p471 = scmp.lt.s32.totalorder %s28, 5
      %s472 = scalar_select %p471, %s28, 5
      %s473 = smul.addr %s472, 16
      %s474 = smul.addr %s473, 4
      %s475 = scalar_lea.vmem %s0, %s474
      %p476 = pneg %p49
      %p477 = pneg %p46
      %p478 = pneg %p70
      %p479 = pneg %p67
      %p480 = pneg %p91
      %p481 = pneg %p88
      %p482 = pneg %p112
      %p483 = pneg %p109
      %p484 = pneg %p133
      %p485 = pneg %p130
      %p486 = pneg %p154
      %p487 = pneg %p151
      %p488 = pneg %p175
      %p489 = pneg %p172
      %p490 = pneg %p196
      %p491 = pneg %p193
      %p492 = pneg %p217
      %p493 = pneg %p214
      %p494 = pneg %p238
      %p495 = pneg %p235
      %p496 = pneg %p259
      %p497 = pneg %p256
      %p498 = pneg %p280
      %p499 = pneg %p277
      %p500 = pneg %p301
      %p501 = pneg %p298
      %p502 = pneg %p322
      %p503 = pneg %p319
      %p504 = pneg %p343
      %p505 = pneg %p340
      %p506 = pneg %p369
      %p507 = pneg %p366
      %p508 = scmp.lt.s32.totalorder %s28, 5
      %s509 = scalar_select %p508, %s28, 5
      %s510 = scalar_lea.vmem %s15, %s509
      %p511 = pneg %p395
      %p512 = pneg %p392
      %p513 = scmp.lt.s32.totalorder %s28, 5
      %s514 = scalar_select %p513, %s28, 5
      %s515 = scalar_lea.vmem %s16, %s514
      %p516 = scmp.lt.s32.totalorder %s28, 5
      %s517 = scalar_select %p516, %s28, 5
      %s518 = smul.addr %s517, 16
      %s519 = smul.addr %s518, 4
      %s520 = scalar_lea.vmem %s0, %s519
      %p521 = scmp.lt.s32.totalorder %s28, 5
      %s522 = scalar_select %p521, %s28, 5
      %s523 = scalar_lea.vmem %s15, %s522
      %p524 = scmp.lt.s32.totalorder %s28, 5
      %s525 = scalar_select %p524, %s28, 5
      %s526 = scalar_lea.vmem %s16, %s525
      %v528 = vld [vmem:[%s520] sm:$0xff]
      %v529 = vld [vmem:[%s520 + $0x8] sm:$0xff]
      %v530 = vld [vmem:[%s520 + $0x10] sm:$0xff]
      %v531 = vld [vmem:[%s520 + $0x18] sm:$0xff]
      %v532 = vld [vmem:[%s520 + $0x20] sm:$0xff]
      %v533 = vld [vmem:[%s520 + $0x28] sm:$0xff]
      %v534 = vld [vmem:[%s520 + $0x30] sm:$0xff]
      %v535 = vld [vmem:[%s520 + $0x38] sm:$0xff]
      %v536 = vld [vmem:[%s1] sm:$0xf]
      %v537 = vld [vmem:[%s1 + $0x4] sm:$0xf]
      %v538 = vld [vmem:[%s1 + $0x8] sm:$0xf]
      %v539 = vld [vmem:[%s1 + $0xc] sm:$0xf]
      %v540 = vld [vmem:[%s1 + $0x10] sm:$0xf]
      %v541 = vld [vmem:[%s1 + $0x14] sm:$0xf]
      %v542 = vld [vmem:[%s1 + $0x18] sm:$0xf]
      %v543 = vld [vmem:[%s1 + $0x1c] sm:$0xf]
      %v544 = vld [vmem:[%s1 + $0x20] sm:$0xf]
      %v545 = vld [vmem:[%s1 + $0x24] sm:$0xf]
      %v546 = vld [vmem:[%s1 + $0x28] sm:$0xf]
      %v547 = vld [vmem:[%s1 + $0x2c] sm:$0xf]
      %v548 = vld [vmem:[%s1 + $0x30] sm:$0xf]
      %v549 = vld [vmem:[%s1 + $0x34] sm:$0xf]
      %v550 = vld [vmem:[%s1 + $0x38] sm:$0xf]
      %v551 = vld [vmem:[%s1 + $0x3c] sm:$0xf]
      %v568 = vunpack.c.l.b16 %v536
      %v569 = vunpack.c.l.b16 %v537
      %v570 = vunpack.c.l.b16 %v538
      %v571 = vunpack.c.l.b16 %v539
      %v572 = vunpack.c.l.b16 %v540
      %v573 = vunpack.c.l.b16 %v541
      %v574 = vunpack.c.l.b16 %v542
      %v575 = vunpack.c.l.b16 %v543
      %v576 = vunpack.c.l.b16 %v544
      %v577 = vunpack.c.l.b16 %v545
      %v578 = vunpack.c.l.b16 %v546
      %v579 = vunpack.c.l.b16 %v547
      %v580 = vunpack.c.l.b16 %v548
      %v581 = vunpack.c.l.b16 %v549
      %v582 = vunpack.c.l.b16 %v550
      %v583 = vunpack.c.l.b16 %v551
      %v584 = vpack.c.b16 %v569, %v568
      %v585 = vpack.c.b16 %v571, %v570
      %v586 = vpack.c.b16 %v573, %v572
      %v587 = vpack.c.b16 %v575, %v574
      %v588 = vpack.c.b16 %v577, %v576
      %v589 = vpack.c.b16 %v579, %v578
      %v590 = vpack.c.b16 %v581, %v580
      %v591 = vpack.c.b16 %v583, %v582
      %v600 = vunpack.c.l.b16 %v528
      %v601 = vunpack.c.h.b16 %v528
      %v602 = vunpack.c.l.b16 %v529
      %v603 = vunpack.c.h.b16 %v529
      %v604 = vunpack.c.l.b16 %v530
      %v605 = vunpack.c.h.b16 %v530
      %v606 = vunpack.c.l.b16 %v531
      %v607 = vunpack.c.h.b16 %v531
      %v608 = vunpack.c.l.b16 %v532
      %v609 = vunpack.c.h.b16 %v532
      %v610 = vunpack.c.l.b16 %v533
      %v611 = vunpack.c.h.b16 %v533
      %v612 = vunpack.c.l.b16 %v534
      %v613 = vunpack.c.h.b16 %v534
      %v614 = vunpack.c.l.b16 %v535
      %v615 = vunpack.c.h.b16 %v535
      %v616 = vpack.c.b16 %v602, %v600
      %v617 = vpack.c.b16 %v603, %v601
      %v618 = vpack.c.b16 %v606, %v604
      %v619 = vpack.c.b16 %v607, %v605
      %v620 = vpack.c.b16 %v610, %v608
      %v621 = vpack.c.b16 %v611, %v609
      %v622 = vpack.c.b16 %v614, %v612
      %v623 = vpack.c.b16 %v615, %v613
      %vm632 = vcmask 523264
      %v634 = vsel %vm632, %v584, 0
      %v637 = vsel %vm632, %v585, 0
      %v640 = vsel %vm632, %v586, 0
      %v643 = vsel %vm632, %v587, 0
      %v646 = vsel %vm632, %v588, 0
      %v649 = vsel %vm632, %v589, 0
      %v652 = vsel %vm632, %v590, 0
      %v655 = vsel %vm632, %v591, 0
      %657 = vmatprep.subr.bf16.mxu0 %v617
      %658 = vmatpush1.bf16.msra.mxu0 %v616
      %659 = vmatprep.subr.bf16.mxu0 %v619
      %660 = vmatpush1.bf16.msra.mxu0 %v618
      %661 = vmatprep.subr.bf16.mxu0 %v621
      %662 = vmatpush1.bf16.msra.mxu0 %v620
      %663 = vmatprep.subr.bf16.mxu0 %v623
      %664 = vmatpush1.bf16.msra.mxu0 %v622
      %665 = vmatprep.subr.bf16.mxu0 0
      %666 = vmatpush1.bf16.msra.mxu0 0
      %667 = vmatprep.subr.bf16.mxu0 0
      %668 = vmatpush1.bf16.msra.mxu0 0
      %669 = vmatprep.subr.bf16.mxu0 0
      %670 = vmatpush1.bf16.msra.mxu0 0
      %671 = vmatprep.subr.bf16.mxu0 0
      %672 = vmatpush1.bf16.msra.mxu0 0
      %673 = vmatprep.subr.bf16.mxu0 0
      %674 = vmatpush1.bf16.msra.mxu0 0
      %675 = vmatprep.subr.bf16.mxu0 0
      %676 = vmatpush1.bf16.msra.mxu0 0
      %677 = vmatprep.subr.bf16.mxu0 0
      %678 = vmatpush1.bf16.msra.mxu0 0
      %679 = vmatprep.subr.bf16.mxu0 0
      %680 = vmatpush1.bf16.msra.mxu0 0
      %681 = vmatprep.subr.bf16.mxu0 0
      %682 = vmatpush1.bf16.msra.mxu0 0
      %683 = vmatprep.subr.bf16.mxu0 0
      %684 = vmatpush1.bf16.msra.mxu0 0
      %685 = vmatprep.subr.bf16.mxu0 0
      %686 = vmatpush1.bf16.msra.mxu0 0
      %687 = vmatprep.subr.bf16.mxu0 0
      %688 = vmatpush1.bf16.msra.mxu0 0
      %689 = vmatprep.mubr.bf16.mxu0 0
      %690 = vmatmul.mubr.bf16.gmra.mrb[0].mxu0 %v634
      %v691 = vpop.f32.mrb[0].mxu0
      %v692 = vadd.f32 0.0, %v691
      %v693 = vpop.f32.mrb[0].mxu0
      %v694 = vadd.f32 0.0, %v693
      %v695 = vpop.f32.mrb[0].mxu0
      %v696 = vadd.f32 0.0, %v695
      %v697 = vpop.f32.mrb[0].mxu0
      %v698 = vadd.f32 0.0, %v697
      %699 = vmatprep.mubr.bf16.mxu0 0
      %700 = vmatmul.mubr.bf16.gmra.mrb[0].mxu0 %v637
      %v701 = vpop.f32.mrb[0].mxu0
      %v702 = vadd.f32 0.0, %v701
      %v703 = vpop.f32.mrb[0].mxu0
      %v704 = vadd.f32 0.0, %v703
      %v705 = vpop.f32.mrb[0].mxu0
      %v706 = vadd.f32 0.0, %v705
      %v707 = vpop.f32.mrb[0].mxu0
      %v708 = vadd.f32 0.0, %v707
      %709 = vmatprep.mubr.bf16.mxu0 0
      %710 = vmatmul.mubr.bf16.gmra.mrb[0].mxu0 %v640
      %v711 = vpop.f32.mrb[0].mxu0
      %v712 = vadd.f32 0.0, %v711
      %v713 = vpop.f32.mrb[0].mxu0
      %v714 = vadd.f32 0.0, %v713
      %v715 = vpop.f32.mrb[0].mxu0
      %v716 = vadd.f32 0.0, %v715
      %v717 = vpop.f32.mrb[0].mxu0
      %v718 = vadd.f32 0.0, %v717
      %719 = vmatprep.mubr.bf16.mxu0 0
      %720 = vmatmul.mubr.bf16.gmra.mrb[0].mxu0 %v643
      %v721 = vpop.f32.mrb[0].mxu0
      %v722 = vadd.f32 0.0, %v721
      %v723 = vpop.f32.mrb[0].mxu0
      %v724 = vadd.f32 0.0, %v723
      %v725 = vpop.f32.mrb[0].mxu0
      %v726 = vadd.f32 0.0, %v725
      %v727 = vpop.f32.mrb[0].mxu0
      %v728 = vadd.f32 0.0, %v727
      %729 = vmatprep.mubr.bf16.mxu0 0
      %730 = vmatmul.mubr.bf16.gmra.mrb[0].mxu0 %v646
      %v731 = vpop.f32.mrb[0].mxu0
      %v732 = vadd.f32 0.0, %v731
      %v733 = vpop.f32.mrb[0].mxu0
      %v734 = vadd.f32 0.0, %v733
      %v735 = vpop.f32.mrb[0].mxu0
      %v736 = vadd.f32 0.0, %v735
      %v737 = vpop.f32.mrb[0].mxu0
      %v738 = vadd.f32 0.0, %v737
      %739 = vmatprep.mubr.bf16.mxu0 0
      %740 = vmatmul.mubr.bf16.gmra.mrb[0].mxu0 %v649
      %v741 = vpop.f32.mrb[0].mxu0
      %v742 = vadd.f32 0.0, %v741
      %v743 = vpop.f32.mrb[0].mxu0
      %v744 = vadd.f32 0.0, %v743
      %v745 = vpop.f32.mrb[0].mxu0
      %v746 = vadd.f32 0.0, %v745
      %v747 = vpop.f32.mrb[0].mxu0
      %v748 = vadd.f32 0.0, %v747
      %749 = vmatprep.mubr.bf16.mxu0 0
      %750 = vmatmul.mubr.bf16.gmra.mrb[0].mxu0 %v652
      %v751 = vpop.f32.mrb[0].mxu0
      %v752 = vadd.f32 0.0, %v751
      %v753 = vpop.f32.mrb[0].mxu0
      %v754 = vadd.f32 0.0, %v753
      %v755 = vpop.f32.mrb[0].mxu0
      %v756 = vadd.f32 0.0, %v755
      %v757 = vpop.f32.mrb[0].mxu0
      %v758 = vadd.f32 0.0, %v757
      %759 = vmatprep.mubr.bf16.mxu0 0
      %760 = vmatmul.mubr.bf16.gmra.mrb[0].mxu0 %v655
      %v761 = vpop.f32.mrb[0].mxu0
      %v762 = vadd.f32 0.0, %v761
      %v763 = vpop.f32.mrb[0].mxu0
      %v764 = vadd.f32 0.0, %v763
      %v765 = vpop.f32.mrb[0].mxu0
      %v766 = vadd.f32 0.0, %v765
      %v767 = vpop.f32.mrb[0].mxu0
      %v768 = vadd.f32 0.0, %v767
      %769 = vdwg.mxu0
      %v770 = vpack.c.bf16 %v696, %v692
      %v771 = vpack.c.bf16 %v698, %v694
      %v772 = vpack.c.bf16 %v706, %v702
      %v773 = vpack.c.bf16 %v708, %v704
      %v774 = vpack.c.bf16 %v716, %v712
      %v775 = vpack.c.bf16 %v718, %v714
      %v776 = vpack.c.bf16 %v726, %v722
      %v777 = vpack.c.bf16 %v728, %v724
      %v778 = vpack.c.bf16 %v736, %v732
      %v779 = vpack.c.bf16 %v738, %v734
      %v780 = vpack.c.bf16 %v746, %v742
      %v781 = vpack.c.bf16 %v748, %v744
      %v782 = vpack.c.bf16 %v756, %v752
      %v783 = vpack.c.bf16 %v758, %v754
      %v784 = vpack.c.bf16 %v766, %v762
      %v785 = vpack.c.bf16 %v768, %v764
      %v786 = vld [vmem:[%s2] sm:$0xff]
      %v787 = vld [vmem:[%s2 + $0x8] sm:$0xff]
      %v788 = vld [vmem:[%s2 + $0x10] sm:$0xff]
      %v789 = vld [vmem:[%s2 + $0x18] sm:$0xff]
      %v790 = vld [vmem:[%s2 + $0x20] sm:$0xff]
      %v791 = vld [vmem:[%s2 + $0x28] sm:$0xff]
      %v792 = vld [vmem:[%s2 + $0x30] sm:$0xff]
      %v793 = vld [vmem:[%s2 + $0x38] sm:$0xff]
      %v794 = vld [vmem:[%s2 + $0x40] sm:$0xff]
      %v795 = vld [vmem:[%s2 + $0x48] sm:$0xff]
      %v796 = vld [vmem:[%s2 + $0x50] sm:$0xff]
      %v797 = vld [vmem:[%s2 + $0x58] sm:$0xff]
      %v798 = vld [vmem:[%s2 + $0x60] sm:$0xff]
      %v799 = vld [vmem:[%s2 + $0x68] sm:$0xff]
      %v800 = vld [vmem:[%s2 + $0x70] sm:$0xff]
      %v801 = vld [vmem:[%s2 + $0x78] sm:$0xff]
      %v802 = vld [vmem:[%s2 + $0x80] sm:$0xff]
      %v803 = vld [vmem:[%s2 + $0x88] sm:$0xff]
      %v804 = vld [vmem:[%s2 + $0x90] sm:$0xff]
      %v805 = vld [vmem:[%s2 + $0x98] sm:$0xff]
      %v806 = vld [vmem:[%s2 + $0xa0] sm:$0xff]
      %v807 = vld [vmem:[%s2 + $0xa8] sm:$0xff]
      %v808 = vld [vmem:[%s2 + $0xb0] sm:$0xff]
      %v809 = vld [vmem:[%s2 + $0xb8] sm:$0xff]
      %s810 = scalar_lea.vmem %s2, 192
      %v811 = vld [vmem:[%s810] sm:$0xff]
      %v812 = vld [vmem:[%s810 + $0x8] sm:$0xff]
      %v813 = vld [vmem:[%s810 + $0x10] sm:$0xff]
      %v814 = vld [vmem:[%s810 + $0x18] sm:$0xff]
      %v815 = vld [vmem:[%s810 + $0x20] sm:$0xff]
      %v816 = vld [vmem:[%s810 + $0x28] sm:$0xff]
      %v817 = vld [vmem:[%s810 + $0x30] sm:$0xff]
      %v818 = vld [vmem:[%s810 + $0x38] sm:$0xff]
      %v819 = vld [vmem:[%s810 + $0x40] sm:$0xff]
      %v820 = vld [vmem:[%s810 + $0x48] sm:$0xff]
      %v821 = vld [vmem:[%s810 + $0x50] sm:$0xff]
      %v822 = vld [vmem:[%s810 + $0x58] sm:$0xff]
      %v823 = vld [vmem:[%s810 + $0x60] sm:$0xff]
      %v824 = vld [vmem:[%s810 + $0x68] sm:$0xff]
      %v825 = vld [vmem:[%s810 + $0x70] sm:$0xff]
      %v826 = vld [vmem:[%s810 + $0x78] sm:$0xff]
      %v827 = vld [vmem:[%s810 + $0x80] sm:$0xff]
      %v828 = vld [vmem:[%s810 + $0x88] sm:$0xff]
      %v829 = vld [vmem:[%s810 + $0x90] sm:$0xff]
      %v830 = vld [vmem:[%s810 + $0x98] sm:$0xff]
      %v831 = vld [vmem:[%s810 + $0xa0] sm:$0xff]
      %v832 = vld [vmem:[%s810 + $0xa8] sm:$0xff]
      %v833 = vld [vmem:[%s810 + $0xb0] sm:$0xff]
      %v834 = vld [vmem:[%s810 + $0xb8] sm:$0xff]
      %v859 = vunpack.c.l.b16 %v811
      %v860 = vunpack.c.h.b16 %v811
      %v861 = vunpack.c.l.b16 %v812
      %v862 = vunpack.c.h.b16 %v812
      %v863 = vunpack.c.l.b16 %v813
      %v864 = vunpack.c.h.b16 %v813
      %v865 = vunpack.c.l.b16 %v814
      %v866 = vunpack.c.h.b16 %v814
      %v867 = vunpack.c.l.b16 %v815
      %v868 = vunpack.c.h.b16 %v815
      %v869 = vunpack.c.l.b16 %v816
      %v870 = vunpack.c.h.b16 %v816
      %v871 = vunpack.c.l.b16 %v817
      %v872 = vunpack.c.h.b16 %v817
      %v873 = vunpack.c.l.b16 %v818
      %v874 = vunpack.c.h.b16 %v818
      %v875 = vunpack.c.l.b16 %v819
      %v876 = vunpack.c.h.b16 %v819
      %v877 = vunpack.c.l.b16 %v820
      %v878 = vunpack.c.h.b16 %v820
      %v879 = vunpack.c.l.b16 %v821
      %v880 = vunpack.c.h.b16 %v821
      %v881 = vunpack.c.l.b16 %v822
      %v882 = vunpack.c.h.b16 %v822
      %v883 = vunpack.c.l.b16 %v823
      %v884 = vunpack.c.h.b16 %v823
      %v885 = vunpack.c.l.b16 %v824
      %v886 = vunpack.c.h.b16 %v824
      %v887 = vunpack.c.l.b16 %v825
      %v888 = vunpack.c.h.b16 %v825
      %v889 = vunpack.c.l.b16 %v826
      %v890 = vunpack.c.h.b16 %v826
      %v891 = vunpack.c.l.b16 %v827
      %v892 = vunpack.c.h.b16 %v827
      %v893 = vunpack.c.l.b16 %v828
      %v894 = vunpack.c.h.b16 %v828
      %v895 = vunpack.c.l.b16 %v829
      %v896 = vunpack.c.h.b16 %v829
      %v897 = vunpack.c.l.b16 %v830
      %v898 = vunpack.c.h.b16 %v830
      %v899 = vunpack.c.l.b16 %v831
      %v900 = vunpack.c.h.b16 %v831
      %v901 = vunpack.c.l.b16 %v832
      %v902 = vunpack.c.h.b16 %v832
      %v903 = vunpack.c.l.b16 %v833
      %v904 = vunpack.c.h.b16 %v833
      %v905 = vunpack.c.l.b16 %v834
      %v906 = vunpack.c.h.b16 %v834
      %v907 = vpack.c.b16 %v861, %v859
      %v908 = vpack.c.b16 %v862, %v860
      %v909 = vpack.c.b16 %v865, %v863
      %v910 = vpack.c.b16 %v866, %v864
      %v911 = vpack.c.b16 %v869, %v867
      %v912 = vpack.c.b16 %v870, %v868
      %v913 = vpack.c.b16 %v873, %v871
      %v914 = vpack.c.b16 %v874, %v872
      %v915 = vpack.c.b16 %v877, %v875
      %v916 = vpack.c.b16 %v878, %v876
      %v917 = vpack.c.b16 %v881, %v879
      %v918 = vpack.c.b16 %v882, %v880
      %v919 = vpack.c.b16 %v885, %v883
      %v920 = vpack.c.b16 %v886, %v884
      %v921 = vpack.c.b16 %v889, %v887
      %v922 = vpack.c.b16 %v890, %v888
      %v923 = vpack.c.b16 %v893, %v891
      %v924 = vpack.c.b16 %v894, %v892
      %v925 = vpack.c.b16 %v897, %v895
      %v926 = vpack.c.b16 %v898, %v896
      %v927 = vpack.c.b16 %v901, %v899
      %v928 = vpack.c.b16 %v902, %v900
      %v929 = vpack.c.b16 %v905, %v903
      %v930 = vpack.c.b16 %v906, %v904
      %v956 = vsel %vm632, %v775, 0
      %v959 = vsel %vm632, %v777, 0
      %961 = vmatprep.subr.bf16.mxu0 %v908
      %962 = vmatpush1.bf16.msra.mxu0 %v907
      %963 = vmatprep.subr.bf16.mxu0 %v910
      %964 = vmatpush1.bf16.msra.mxu0 %v909
      %965 = vmatprep.subr.bf16.mxu0 %v912
      %966 = vmatpush1.bf16.msra.mxu0 %v911
      %967 = vmatprep.subr.bf16.mxu0 %v914
      %968 = vmatpush1.bf16.msra.mxu0 %v913
      %969 = vmatprep.subr.bf16.mxu0 %v916
      %970 = vmatpush1.bf16.msra.mxu0 %v915
      %971 = vmatprep.subr.bf16.mxu0 %v918
      %972 = vmatpush1.bf16.msra.mxu0 %v917
      %973 = vmatprep.subr.bf16.mxu0 %v920
      %974 = vmatpush1.bf16.msra.mxu0 %v919
      %975 = vmatprep.subr.bf16.mxu0 %v922
      %976 = vmatpush1.bf16.msra.mxu0 %v921
      %977 = vmatprep.subr.bf16.mxu0 %v924
      %978 = vmatpush1.bf16.msra.mxu0 %v923
      %979 = vmatprep.subr.bf16.mxu0 %v926
      %980 = vmatpush1.bf16.msra.mxu0 %v925
      %981 = vmatprep.subr.bf16.mxu0 %v928
      %982 = vmatpush1.bf16.msra.mxu0 %v927
      %983 = vmatprep.subr.bf16.mxu0 %v930
      %984 = vmatpush1.bf16.msra.mxu0 %v929
      %985 = vmatprep.subr.bf16.mxu0 0
      %986 = vmatpush1.bf16.msra.mxu0 0
      %987 = vmatprep.subr.bf16.mxu0 0
      %988 = vmatpush1.bf16.msra.mxu0 0
      %989 = vmatprep.subr.bf16.mxu0 0
      %990 = vmatpush1.bf16.msra.mxu0 0
      %991 = vmatprep.subr.bf16.mxu0 0
      %992 = vmatpush1.bf16.msra.mxu0 0
      %993 = vmatprep.mubr.bf16.mxu0 %v956
      %994 = vmatmul.mubr.bf16.gmra.mrb[0].mxu0 %v774
      %v995 = vpop.f32.mrb[0].mxu0
      %v996 = vadd.f32 0.0, %v995
      %v997 = vpop.f32.mrb[0].mxu0
      %v998 = vadd.f32 0.0, %v997
      %v999 = vpop.f32.mrb[0].mxu0
      %v1000 = vadd.f32 0.0, %v999
      %v1001 = vpop.f32.mrb[0].mxu0
      %v1002 = vadd.f32 0.0, %v1001
      %1003 = vmatprep.mubr.bf16.mxu0 %v959
      %1004 = vmatmul.mubr.bf16.gmra.mrb[0].mxu0 %v776
      %v1005 = vpop.f32.mrb[0].mxu0
      %v1006 = vadd.f32 0.0, %v1005
      %v1007 = vpop.f32.mrb[0].mxu0
      %v1008 = vadd.f32 0.0, %v1007
      %v1009 = vpop.f32.mrb[0].mxu0
      %v1010 = vadd.f32 0.0, %v1009
      %v1011 = vpop.f32.mrb[0].mxu0
      %v1012 = vadd.f32 0.0, %v1011
      %1013 = vdwg.mxu0
      %v1038 = vunpack.c.l.b16 %v786
      %v1039 = vunpack.c.h.b16 %v786
      %v1040 = vunpack.c.l.b16 %v787
      %v1041 = vunpack.c.h.b16 %v787
      %v1042 = vunpack.c.l.b16 %v788
      %v1043 = vunpack.c.h.b16 %v788
      %v1044 = vunpack.c.l.b16 %v789
      %v1045 = vunpack.c.h.b16 %v789
      %v1046 = vunpack.c.l.b16 %v790
      %v1047 = vunpack.c.h.b16 %v790
      %v1048 = vunpack.c.l.b16 %v791
      %v1049 = vunpack.c.h.b16 %v791
      %v1050 = vunpack.c.l.b16 %v792
      %v1051 = vunpack.c.h.b16 %v792
      %v1052 = vunpack.c.l.b16 %v793
      %v1053 = vunpack.c.h.b16 %v793
      %v1054 = vunpack.c.l.b16 %v794
      %v1055 = vunpack.c.h.b16 %v794
      %v1056 = vunpack.c.l.b16 %v795
      %v1057 = vunpack.c.h.b16 %v795
      %v1058 = vunpack.c.l.b16 %v796
      %v1059 = vunpack.c.h.b16 %v796
      %v1060 = vunpack.c.l.b16 %v797
      %v1061 = vunpack.c.h.b16 %v797
      %v1062 = vunpack.c.l.b16 %v798
      %v1063 = vunpack.c.h.b16 %v798
      %v1064 = vunpack.c.l.b16 %v799
      %v1065 = vunpack.c.h.b16 %v799
      %v1066 = vunpack.c.l.b16 %v800
      %v1067 = vunpack.c.h.b16 %v800
      %v1068 = vunpack.c.l.b16 %v801
      %v1069 = vunpack.c.h.b16 %v801
      %v1070 = vunpack.c.l.b16 %v802
      %v1071 = vunpack.c.h.b16 %v802
      %v1072 = vunpack.c.l.b16 %v803
      %v1073 = vunpack.c.h.b16 %v803
      %v1074 = vunpack.c.l.b16 %v804
      %v1075 = vunpack.c.h.b16 %v804
      %v1076 = vunpack.c.l.b16 %v805
      %v1077 = vunpack.c.h.b16 %v805
      %v1078 = vunpack.c.l.b16 %v806
      %v1079 = vunpack.c.h.b16 %v806
      %v1080 = vunpack.c.l.b16 %v807
      %v1081 = vunpack.c.h.b16 %v807
      %v1082 = vunpack.c.l.b16 %v808
      %v1083 = vunpack.c.h.b16 %v808
      %v1084 = vunpack.c.l.b16 %v809
      %v1085 = vunpack.c.h.b16 %v809
      %v1086 = vpack.c.b16 %v1040, %v1038
      %v1087 = vpack.c.b16 %v1041, %v1039
      %v1088 = vpack.c.b16 %v1044, %v1042
      %v1089 = vpack.c.b16 %v1045, %v1043
      %v1090 = vpack.c.b16 %v1048, %v1046
      %v1091 = vpack.c.b16 %v1049, %v1047
      %v1092 = vpack.c.b16 %v1052, %v1050
      %v1093 = vpack.c.b16 %v1053, %v1051
      %v1094 = vpack.c.b16 %v1056, %v1054
      %v1095 = vpack.c.b16 %v1057, %v1055
      %v1096 = vpack.c.b16 %v1060, %v1058
      %v1097 = vpack.c.b16 %v1061, %v1059
      %v1098 = vpack.c.b16 %v1064, %v1062
      %v1099 = vpack.c.b16 %v1065, %v1063
      %v1100 = vpack.c.b16 %v1068, %v1066
      %v1101 = vpack.c.b16 %v1069, %v1067
      %v1102 = vpack.c.b16 %v1072, %v1070
      %v1103 = vpack.c.b16 %v1073, %v1071
      %v1104 = vpack.c.b16 %v1076, %v1074
      %v1105 = vpack.c.b16 %v1077, %v1075
      %v1106 = vpack.c.b16 %v1080, %v1078
      %v1107 = vpack.c.b16 %v1081, %v1079
      %v1108 = vpack.c.b16 %v1084, %v1082
      %v1109 = vpack.c.b16 %v1085, %v1083
      %v1135 = vsel %vm632, %v771, 0
      %v1138 = vsel %vm632, %v773, 0
      %1140 = vmatprep.subr.bf16.mxu0 %v1087
      %1141 = vmatpush1.bf16.msra.mxu0 %v1086
      %1142 = vmatprep.subr.bf16.mxu0 %v1089
      %1143 = vmatpush1.bf16.msra.mxu0 %v1088
      %1144 = vmatprep.subr.bf16.mxu0 %v1091
      %1145 = vmatpush1.bf16.msra.mxu0 %v1090
      %1146 = vmatprep.subr.bf16.mxu0 %v1093
      %1147 = vmatpush1.bf16.msra.mxu0 %v1092
      %1148 = vmatprep.subr.bf16.mxu0 %v1095
      %1149 = vmatpush1.bf16.msra.mxu0 %v1094
      %1150 = vmatprep.subr.bf16.mxu0 %v1097
      %1151 = vmatpush1.bf16.msra.mxu0 %v1096
      %1152 = vmatprep.subr.bf16.mxu0 %v1099
      %1153 = vmatpush1.bf16.msra.mxu0 %v1098
      %1154 = vmatprep.subr.bf16.mxu0 %v1101
      %1155 = vmatpush1.bf16.msra.mxu0 %v1100
      %1156 = vmatprep.subr.bf16.mxu0 %v1103
      %1157 = vmatpush1.bf16.msra.mxu0 %v1102
      %1158 = vmatprep.subr.bf16.mxu0 %v1105
      %1159 = vmatpush1.bf16.msra.mxu0 %v1104
      %1160 = vmatprep.subr.bf16.mxu0 %v1107
      %1161 = vmatpush1.bf16.msra.mxu0 %v1106
      %1162 = vmatprep.subr.bf16.mxu0 %v1109
      %1163 = vmatpush1.bf16.msra.mxu0 %v1108
      %1164 = vmatprep.subr.bf16.mxu0 0
      %1165 = vmatpush1.bf16.msra.mxu0 0
      %1166 = vmatprep.subr.bf16.mxu0 0
      %1167 = vmatpush1.bf16.msra.mxu0 0
      %1168 = vmatprep.subr.bf16.mxu0 0
      %1169 = vmatpush1.bf16.msra.mxu0 0
      %1170 = vmatprep.subr.bf16.mxu0 0
      %1171 = vmatpush1.bf16.msra.mxu0 0
      %1172 = vmatprep.mubr.bf16.mxu0 %v1135
      %1173 = vmatmul.mubr.bf16.gmra.mrb[0].mxu0 %v770
      %v1174 = vpop.f32.mrb[0].mxu0
      %v1175 = vadd.f32 %v996, %v1174
      %v1176 = vpop.f32.mrb[0].mxu0
      %v1177 = vadd.f32 %v998, %v1176
      %v1178 = vpop.f32.mrb[0].mxu0
      %v1179 = vadd.f32 %v1000, %v1178
      %v1180 = vpop.f32.mrb[0].mxu0
      %v1181 = vadd.f32 %v1002, %v1180
      %1182 = vmatprep.mubr.bf16.mxu0 %v1138
      %1183 = vmatmul.mubr.bf16.gmra.mrb[0].mxu0 %v772
      %v1184 = vpop.f32.mrb[0].mxu0
      %v1185 = vadd.f32 %v1006, %v1184
      %v1186 = vpop.f32.mrb[0].mxu0
      %v1187 = vadd.f32 %v1008, %v1186
      %v1188 = vpop.f32.mrb[0].mxu0
      %v1189 = vadd.f32 %v1010, %v1188
      %v1190 = vpop.f32.mrb[0].mxu0
      %v1191 = vadd.f32 %v1012, %v1190
      %1192 = vdwg.mxu0
      %s1193 = scalar_lea.vmem %s2, 384
      %v1194 = vld [vmem:[%s1193] sm:$0xff]
      %v1195 = vld [vmem:[%s1193 + $0x8] sm:$0xff]
      %v1196 = vld [vmem:[%s1193 + $0x10] sm:$0xff]
      %v1197 = vld [vmem:[%s1193 + $0x18] sm:$0xff]
      %v1198 = vld [vmem:[%s1193 + $0x20] sm:$0xff]
      %v1199 = vld [vmem:[%s1193 + $0x28] sm:$0xff]
      %v1200 = vld [vmem:[%s1193 + $0x30] sm:$0xff]
      %v1201 = vld [vmem:[%s1193 + $0x38] sm:$0xff]
      %v1202 = vld [vmem:[%s1193 + $0x40] sm:$0xff]
      %v1203 = vld [vmem:[%s1193 + $0x48] sm:$0xff]
      %v1204 = vld [vmem:[%s1193 + $0x50] sm:$0xff]
      %v1205 = vld [vmem:[%s1193 + $0x58] sm:$0xff]
      %v1206 = vld [vmem:[%s1193 + $0x60] sm:$0xff]
      %v1207 = vld [vmem:[%s1193 + $0x68] sm:$0xff]
      %v1208 = vld [vmem:[%s1193 + $0x70] sm:$0xff]
      %v1209 = vld [vmem:[%s1193 + $0x78] sm:$0xff]
      %v1210 = vld [vmem:[%s1193 + $0x80] sm:$0xff]
      %v1211 = vld [vmem:[%s1193 + $0x88] sm:$0xff]
      %v1212 = vld [vmem:[%s1193 + $0x90] sm:$0xff]
      %v1213 = vld [vmem:[%s1193 + $0x98] sm:$0xff]
      %v1214 = vld [vmem:[%s1193 + $0xa0] sm:$0xff]
      %v1215 = vld [vmem:[%s1193 + $0xa8] sm:$0xff]
      %v1216 = vld [vmem:[%s1193 + $0xb0] sm:$0xff]
      %v1217 = vld [vmem:[%s1193 + $0xb8] sm:$0xff]
      %v1242 = vunpack.c.l.b16 %v1194
      %v1243 = vunpack.c.h.b16 %v1194
      %v1244 = vunpack.c.l.b16 %v1195
      %v1245 = vunpack.c.h.b16 %v1195
      %v1246 = vunpack.c.l.b16 %v1196
      %v1247 = vunpack.c.h.b16 %v1196
      %v1248 = vunpack.c.l.b16 %v1197
      %v1249 = vunpack.c.h.b16 %v1197
      %v1250 = vunpack.c.l.b16 %v1198
      %v1251 = vunpack.c.h.b16 %v1198
      %v1252 = vunpack.c.l.b16 %v1199
      %v1253 = vunpack.c.h.b16 %v1199
      %v1254 = vunpack.c.l.b16 %v1200
      %v1255 = vunpack.c.h.b16 %v1200
      %v1256 = vunpack.c.l.b16 %v1201
      %v1257 = vunpack.c.h.b16 %v1201
      %v1258 = vunpack.c.l.b16 %v1202
      %v1259 = vunpack.c.h.b16 %v1202
      %v1260 = vunpack.c.l.b16 %v1203
      %v1261 = vunpack.c.h.b16 %v1203
      %v1262 = vunpack.c.l.b16 %v1204
      %v1263 = vunpack.c.h.b16 %v1204
      %v1264 = vunpack.c.l.b16 %v1205
      %v1265 = vunpack.c.h.b16 %v1205
      %v1266 = vunpack.c.l.b16 %v1206
      %v1267 = vunpack.c.h.b16 %v1206
      %v1268 = vunpack.c.l.b16 %v1207
      %v1269 = vunpack.c.h.b16 %v1207
      %v1270 = vunpack.c.l.b16 %v1208
      %v1271 = vunpack.c.h.b16 %v1208
      %v1272 = vunpack.c.l.b16 %v1209
      %v1273 = vunpack.c.h.b16 %v1209
      %v1274 = vunpack.c.l.b16 %v1210
      %v1275 = vunpack.c.h.b16 %v1210
      %v1276 = vunpack.c.l.b16 %v1211
      %v1277 = vunpack.c.h.b16 %v1211
      %v1278 = vunpack.c.l.b16 %v1212
      %v1279 = vunpack.c.h.b16 %v1212
      %v1280 = vunpack.c.l.b16 %v1213
      %v1281 = vunpack.c.h.b16 %v1213
      %v1282 = vunpack.c.l.b16 %v1214
      %v1283 = vunpack.c.h.b16 %v1214
      %v1284 = vunpack.c.l.b16 %v1215
      %v1285 = vunpack.c.h.b16 %v1215
      %v1286 = vunpack.c.l.b16 %v1216
      %v1287 = vunpack.c.h.b16 %v1216
      %v1288 = vunpack.c.l.b16 %v1217
      %v1289 = vunpack.c.h.b16 %v1217
      %v1290 = vpack.c.b16 %v1244, %v1242
      %v1291 = vpack.c.b16 %v1245, %v1243
      %v1292 = vpack.c.b16 %v1248, %v1246
      %v1293 = vpack.c.b16 %v1249, %v1247
      %v1294 = vpack.c.b16 %v1252, %v1250
      %v1295 = vpack.c.b16 %v1253, %v1251
      %v1296 = vpack.c.b16 %v1256, %v1254
      %v1297 = vpack.c.b16 %v1257, %v1255
      %v1298 = vpack.c.b16 %v1260, %v1258
      %v1299 = vpack.c.b16 %v1261, %v1259
      %v1300 = vpack.c.b16 %v1264, %v1262
      %v1301 = vpack.c.b16 %v1265, %v1263
      %v1302 = vpack.c.b16 %v1268, %v1266
      %v1303 = vpack.c.b16 %v1269, %v1267
      %v1304 = vpack.c.b16 %v1272, %v1270
      %v1305 = vpack.c.b16 %v1273, %v1271
      %v1306 = vpack.c.b16 %v1276, %v1274
      %v1307 = vpack.c.b16 %v1277, %v1275
      %v1308 = vpack.c.b16 %v1280, %v1278
      %v1309 = vpack.c.b16 %v1281, %v1279
      %v1310 = vpack.c.b16 %v1284, %v1282
      %v1311 = vpack.c.b16 %v1285, %v1283
      %v1312 = vpack.c.b16 %v1288, %v1286
      %v1313 = vpack.c.b16 %v1289, %v1287
      %v1339 = vsel %vm632, %v779, 0
      %v1342 = vsel %vm632, %v781, 0
      %1344 = vmatprep.subr.bf16.mxu0 %v1291
      %1345 = vmatpush1.bf16.msra.mxu0 %v1290
      %1346 = vmatprep.subr.bf16.mxu0 %v1293
      %1347 = vmatpush1.bf16.msra.mxu0 %v1292
      %1348 = vmatprep.subr.bf16.mxu0 %v1295
      %1349 = vmatpush1.bf16.msra.mxu0 %v1294
      %1350 = vmatprep.subr.bf16.mxu0 %v1297
      %1351 = vmatpush1.bf16.msra.mxu0 %v1296
      %1352 = vmatprep.subr.bf16.mxu0 %v1299
      %1353 = vmatpush1.bf16.msra.mxu0 %v1298
      %1354 = vmatprep.subr.bf16.mxu0 %v1301
      %1355 = vmatpush1.bf16.msra.mxu0 %v1300
      %1356 = vmatprep.subr.bf16.mxu0 %v1303
      %1357 = vmatpush1.bf16.msra.mxu0 %v1302
      %1358 = vmatprep.subr.bf16.mxu0 %v1305
      %1359 = vmatpush1.bf16.msra.mxu0 %v1304
      %1360 = vmatprep.subr.bf16.mxu0 %v1307
      %1361 = vmatpush1.bf16.msra.mxu0 %v1306
      %1362 = vmatprep.subr.bf16.mxu0 %v1309
      %1363 = vmatpush1.bf16.msra.mxu0 %v1308
      %1364 = vmatprep.subr.bf16.mxu0 %v1311
      %1365 = vmatpush1.bf16.msra.mxu0 %v1310
      %1366 = vmatprep.subr.bf16.mxu0 %v1313
      %1367 = vmatpush1.bf16.msra.mxu0 %v1312
      %1368 = vmatprep.subr.bf16.mxu0 0
      %1369 = vmatpush1.bf16.msra.mxu0 0
      %1370 = vmatprep.subr.bf16.mxu0 0
      %1371 = vmatpush1.bf16.msra.mxu0 0
      %1372 = vmatprep.subr.bf16.mxu0 0
      %1373 = vmatpush1.bf16.msra.mxu0 0
      %1374 = vmatprep.subr.bf16.mxu0 0
      %1375 = vmatpush1.bf16.msra.mxu0 0
      %1376 = vmatprep.mubr.bf16.mxu0 %v1339
      %1377 = vmatmul.mubr.bf16.gmra.mrb[0].mxu0 %v778
      %v1378 = vpop.f32.mrb[0].mxu0
      %v1379 = vadd.f32 0.0, %v1378
      %v1380 = vpop.f32.mrb[0].mxu0
      %v1381 = vadd.f32 0.0, %v1380
      %v1382 = vpop.f32.mrb[0].mxu0
      %v1383 = vadd.f32 0.0, %v1382
      %v1384 = vpop.f32.mrb[0].mxu0
      %v1385 = vadd.f32 0.0, %v1384
      %1386 = vmatprep.mubr.bf16.mxu0 %v1342
      %1387 = vmatmul.mubr.bf16.gmra.mrb[0].mxu0 %v780
      %v1388 = vpop.f32.mrb[0].mxu0
      %v1389 = vadd.f32 0.0, %v1388
      %v1390 = vpop.f32.mrb[0].mxu0
      %v1391 = vadd.f32 0.0, %v1390
      %v1392 = vpop.f32.mrb[0].mxu0
      %v1393 = vadd.f32 0.0, %v1392
      %v1394 = vpop.f32.mrb[0].mxu0
      %v1395 = vadd.f32 0.0, %v1394
      %1396 = vdwg.mxu0
      %v1397 = vadd.f32 %v1175, %v1379
      %v1398 = vadd.f32 %v1177, %v1381
      %v1399 = vadd.f32 %v1179, %v1383
      %v1400 = vadd.f32 %v1181, %v1385
      %v1401 = vadd.f32 %v1185, %v1389
      %v1402 = vadd.f32 %v1187, %v1391
      %v1403 = vadd.f32 %v1189, %v1393
      %v1404 = vadd.f32 %v1191, %v1395
      %s1405 = scalar_lea.vmem %s2, 576
      %v1406 = vld [vmem:[%s1405] sm:$0xff]
      %v1407 = vld [vmem:[%s1405 + $0x8] sm:$0xff]
      %v1408 = vld [vmem:[%s1405 + $0x10] sm:$0xff]
      %v1409 = vld [vmem:[%s1405 + $0x18] sm:$0xff]
      %v1410 = vld [vmem:[%s1405 + $0x20] sm:$0xff]
      %v1411 = vld [vmem:[%s1405 + $0x28] sm:$0xff]
      %v1412 = vld [vmem:[%s1405 + $0x30] sm:$0xff]
      %v1413 = vld [vmem:[%s1405 + $0x38] sm:$0xff]
      %v1414 = vld [vmem:[%s1405 + $0x40] sm:$0xff]
      %v1415 = vld [vmem:[%s1405 + $0x48] sm:$0xff]
      %v1416 = vld [vmem:[%s1405 + $0x50] sm:$0xff]
      %v1417 = vld [vmem:[%s1405 + $0x58] sm:$0xff]
      %v1418 = vld [vmem:[%s1405 + $0x60] sm:$0xff]
      %v1419 = vld [vmem:[%s1405 + $0x68] sm:$0xff]
      %v1420 = vld [vmem:[%s1405 + $0x70] sm:$0xff]
      %v1421 = vld [vmem:[%s1405 + $0x78] sm:$0xff]
      %v1422 = vld [vmem:[%s1405 + $0x80] sm:$0xff]
      %v1423 = vld [vmem:[%s1405 + $0x88] sm:$0xff]
      %v1424 = vld [vmem:[%s1405 + $0x90] sm:$0xff]
      %v1425 = vld [vmem:[%s1405 + $0x98] sm:$0xff]
      %v1426 = vld [vmem:[%s1405 + $0xa0] sm:$0xff]
      %v1427 = vld [vmem:[%s1405 + $0xa8] sm:$0xff]
      %v1428 = vld [vmem:[%s1405 + $0xb0] sm:$0xff]
      %v1429 = vld [vmem:[%s1405 + $0xb8] sm:$0xff]
      %v1454 = vunpack.c.l.b16 %v1406
      %v1455 = vunpack.c.h.b16 %v1406
      %v1456 = vunpack.c.l.b16 %v1407
      %v1457 = vunpack.c.h.b16 %v1407
      %v1458 = vunpack.c.l.b16 %v1408
      %v1459 = vunpack.c.h.b16 %v1408
      %v1460 = vunpack.c.l.b16 %v1409
      %v1461 = vunpack.c.h.b16 %v1409
      %v1462 = vunpack.c.l.b16 %v1410
      %v1463 = vunpack.c.h.b16 %v1410
      %v1464 = vunpack.c.l.b16 %v1411
      %v1465 = vunpack.c.h.b16 %v1411
      %v1466 = vunpack.c.l.b16 %v1412
      %v1467 = vunpack.c.h.b16 %v1412
      %v1468 = vunpack.c.l.b16 %v1413
      %v1469 = vunpack.c.h.b16 %v1413
      %v1470 = vunpack.c.l.b16 %v1414
      %v1471 = vunpack.c.h.b16 %v1414
      %v1472 = vunpack.c.l.b16 %v1415
      %v1473 = vunpack.c.h.b16 %v1415
      %v1474 = vunpack.c.l.b16 %v1416
      %v1475 = vunpack.c.h.b16 %v1416
      %v1476 = vunpack.c.l.b16 %v1417
      %v1477 = vunpack.c.h.b16 %v1417
      %v1478 = vunpack.c.l.b16 %v1418
      %v1479 = vunpack.c.h.b16 %v1418
      %v1480 = vunpack.c.l.b16 %v1419
      %v1481 = vunpack.c.h.b16 %v1419
      %v1482 = vunpack.c.l.b16 %v1420
      %v1483 = vunpack.c.h.b16 %v1420
      %v1484 = vunpack.c.l.b16 %v1421
      %v1485 = vunpack.c.h.b16 %v1421
      %v1486 = vunpack.c.l.b16 %v1422
      %v1487 = vunpack.c.h.b16 %v1422
      %v1488 = vunpack.c.l.b16 %v1423
      %v1489 = vunpack.c.h.b16 %v1423
      %v1490 = vunpack.c.l.b16 %v1424
      %v1491 = vunpack.c.h.b16 %v1424
      %v1492 = vunpack.c.l.b16 %v1425
      %v1493 = vunpack.c.h.b16 %v1425
      %v1494 = vunpack.c.l.b16 %v1426
      %v1495 = vunpack.c.h.b16 %v1426
      %v1496 = vunpack.c.l.b16 %v1427
      %v1497 = vunpack.c.h.b16 %v1427
      %v1498 = vunpack.c.l.b16 %v1428
      %v1499 = vunpack.c.h.b16 %v1428
      %v1500 = vunpack.c.l.b16 %v1429
      %v1501 = vunpack.c.h.b16 %v1429
      %v1502 = vpack.c.b16 %v1456, %v1454
      %v1503 = vpack.c.b16 %v1457, %v1455
      %v1504 = vpack.c.b16 %v1460, %v1458
      %v1505 = vpack.c.b16 %v1461, %v1459
      %v1506 = vpack.c.b16 %v1464, %v1462
      %v1507 = vpack.c.b16 %v1465, %v1463
      %v1508 = vpack.c.b16 %v1468, %v1466
      %v1509 = vpack.c.b16 %v1469, %v1467
      %v1510 = vpack.c.b16 %v1472, %v1470
      %v1511 = vpack.c.b16 %v1473, %v1471
      %v1512 = vpack.c.b16 %v1476, %v1474
      %v1513 = vpack.c.b16 %v1477, %v1475
      %v1514 = vpack.c.b16 %v1480, %v1478
      %v1515 = vpack.c.b16 %v1481, %v1479
      %v1516 = vpack.c.b16 %v1484, %v1482
      %v1517 = vpack.c.b16 %v1485, %v1483
      %v1518 = vpack.c.b16 %v1488, %v1486
      %v1519 = vpack.c.b16 %v1489, %v1487
      %v1520 = vpack.c.b16 %v1492, %v1490
      %v1521 = vpack.c.b16 %v1493, %v1491
      %v1522 = vpack.c.b16 %v1496, %v1494
      %v1523 = vpack.c.b16 %v1497, %v1495
      %v1524 = vpack.c.b16 %v1500, %v1498
      %v1525 = vpack.c.b16 %v1501, %v1499
      %v1551 = vsel %vm632, %v783, 0
      %v1554 = vsel %vm632, %v785, 0
      %1556 = vmatprep.subr.bf16.mxu0 %v1503
      %1557 = vmatpush1.bf16.msra.mxu0 %v1502
      %1558 = vmatprep.subr.bf16.mxu0 %v1505
      %1559 = vmatpush1.bf16.msra.mxu0 %v1504
      %1560 = vmatprep.subr.bf16.mxu0 %v1507
      %1561 = vmatpush1.bf16.msra.mxu0 %v1506
      %1562 = vmatprep.subr.bf16.mxu0 %v1509
      %1563 = vmatpush1.bf16.msra.mxu0 %v1508
      %1564 = vmatprep.subr.bf16.mxu0 %v1511
      %1565 = vmatpush1.bf16.msra.mxu0 %v1510
      %1566 = vmatprep.subr.bf16.mxu0 %v1513
      %1567 = vmatpush1.bf16.msra.mxu0 %v1512
      %1568 = vmatprep.subr.bf16.mxu0 %v1515
      %1569 = vmatpush1.bf16.msra.mxu0 %v1514
      %1570 = vmatprep.subr.bf16.mxu0 %v1517
      %1571 = vmatpush1.bf16.msra.mxu0 %v1516
      %1572 = vmatprep.subr.bf16.mxu0 %v1519
      %1573 = vmatpush1.bf16.msra.mxu0 %v1518
      %1574 = vmatprep.subr.bf16.mxu0 %v1521
      %1575 = vmatpush1.bf16.msra.mxu0 %v1520
      %1576 = vmatprep.subr.bf16.mxu0 %v1523
      %1577 = vmatpush1.bf16.msra.mxu0 %v1522
      %1578 = vmatprep.subr.bf16.mxu0 %v1525
      %1579 = vmatpush1.bf16.msra.mxu0 %v1524
      %1580 = vmatprep.subr.bf16.mxu0 0
      %1581 = vmatpush1.bf16.msra.mxu0 0
      %1582 = vmatprep.subr.bf16.mxu0 0
      %1583 = vmatpush1.bf16.msra.mxu0 0
      %1584 = vmatprep.subr.bf16.mxu0 0
      %1585 = vmatpush1.bf16.msra.mxu0 0
      %1586 = vmatprep.subr.bf16.mxu0 0
      %1587 = vmatpush1.bf16.msra.mxu0 0
      %1588 = vmatprep.mubr.bf16.mxu0 %v1551
      %1589 = vmatmul.mubr.bf16.gmra.mrb[0].mxu0 %v782
      %v1590 = vpop.f32.mrb[0].mxu0
      %v1591 = vadd.f32 0.0, %v1590
      %v1592 = vpop.f32.mrb[0].mxu0
      %v1593 = vadd.f32 0.0, %v1592
      %v1594 = vpop.f32.mrb[0].mxu0
      %v1595 = vadd.f32 0.0, %v1594
      %v1596 = vpop.f32.mrb[0].mxu0
      %v1597 = vadd.f32 0.0, %v1596
      %1598 = vmatprep.mubr.bf16.mxu0 %v1554
      %1599 = vmatmul.mubr.bf16.gmra.mrb[0].mxu0 %v784
      %v1600 = vpop.f32.mrb[0].mxu0
      %v1601 = vadd.f32 0.0, %v1600
      %v1602 = vpop.f32.mrb[0].mxu0
      %v1603 = vadd.f32 0.0, %v1602
      %v1604 = vpop.f32.mrb[0].mxu0
      %v1605 = vadd.f32 0.0, %v1604
      %v1606 = vpop.f32.mrb[0].mxu0
      %v1607 = vadd.f32 0.0, %v1606
      %1608 = vdwg.mxu0
      %v1609 = vadd.f32 %v1397, %v1591
      %v1610 = vadd.f32 %v1398, %v1593
      %v1611 = vadd.f32 %v1399, %v1595
      %v1612 = vadd.f32 %v1400, %v1597
      %v1613 = vadd.f32 %v1401, %v1601
      %v1614 = vadd.f32 %v1402, %v1603
      %v1615 = vadd.f32 %v1403, %v1605
      %v1616 = vadd.f32 %v1404, %v1607
      %v1617 = vld [vmem:[%s3] sm:$0x3]
      %v1619 = vlaneseq
      %v1620 = vshrl.u32 %v1619, 7
      %v1621 = vsub.s32 0, %v1620
      %v1622 = vrot.slane %v1617, %v1621
      %v1623 = vlaneseq
      %v1624 = vshrl.u32 %v1623, 7
      %v1625 = vsub.s32 1, %v1624
      %v1626 = vrot.slane %v1617, %v1625
      %v1629 = vadd.f32 %v1609, %v1622
      %v1630 = vadd.f32 %v1610, %v1626
      %v1631 = vadd.f32 %v1611, %v1622
      %v1632 = vadd.f32 %v1612, %v1626
      %v1633 = vadd.f32 %v1613, %v1622
      %v1634 = vadd.f32 %v1614, %v1626
      %v1635 = vadd.f32 %v1615, %v1622
      %v1636 = vadd.f32 %v1616, %v1626
      %v1637 = vmax.f32 %v1629, 0.0
      %v1638 = vmax.f32 %v1630, 0.0
      %v1639 = vmax.f32 %v1631, 0.0
      %v1640 = vmax.f32 %v1632, 0.0
      %v1641 = vmax.f32 %v1633, 0.0
      %v1642 = vmax.f32 %v1634, 0.0
      %v1643 = vmax.f32 %v1635, 0.0
      %v1644 = vmax.f32 %v1636, 0.0
      %v1645 = vpack.c.bf16 %v1639, %v1637
      %v1646 = vpack.c.bf16 %v1640, %v1638
      %v1647 = vpack.c.bf16 %v1643, %v1641
      %v1648 = vpack.c.bf16 %v1644, %v1642
      %v1649 = vld [vmem:[%s4] sm:$0xf]
      %v1650 = vld [vmem:[%s4 + $0x4] sm:$0xf]
      %v1651 = vld [vmem:[%s4 + $0x8] sm:$0xf]
      %v1652 = vld [vmem:[%s4 + $0xc] sm:$0xf]
      %v1653 = vld [vmem:[%s4 + $0x10] sm:$0xf]
      %v1654 = vld [vmem:[%s4 + $0x14] sm:$0xf]
      %v1655 = vld [vmem:[%s4 + $0x18] sm:$0xf]
      %v1656 = vld [vmem:[%s4 + $0x1c] sm:$0xf]
      %v1665 = vunpack.c.l.b16 %v1649
      %v1666 = vunpack.c.l.b16 %v1650
      %v1667 = vunpack.c.l.b16 %v1651
      %v1668 = vunpack.c.l.b16 %v1652
      %v1669 = vunpack.c.l.b16 %v1653
      %v1670 = vunpack.c.l.b16 %v1654
      %v1671 = vunpack.c.l.b16 %v1655
      %v1672 = vunpack.c.l.b16 %v1656
      %v1673 = vpack.c.b16 %v1666, %v1665
      %v1674 = vpack.c.b16 %v1668, %v1667
      %v1675 = vpack.c.b16 %v1670, %v1669
      %v1676 = vpack.c.b16 %v1672, %v1671
      %vm1677 = vcmask 261120
      %v1679 = vsel %vm1677, %v1673, 0
      %v1682 = vsel %vm1677, %v1674, 0
      %v1685 = vsel %vm1677, %v1675, 0
      %v1688 = vsel %vm1677, %v1676, 0
      %1690 = vmatprep.subr.bf16.mxu0 %v1646
      %1691 = vmatpush1.bf16.msra.mxu0 %v1645
      %1692 = vmatprep.subr.bf16.mxu0 %v1648
      %1693 = vmatpush1.bf16.msra.mxu0 %v1647
      %1694 = vmatprep.subr.bf16.mxu0 0
      %1695 = vmatpush1.bf16.msra.mxu0 0
      %1696 = vmatprep.subr.bf16.mxu0 0
      %1697 = vmatpush1.bf16.msra.mxu0 0
      %1698 = vmatprep.subr.bf16.mxu0 0
      %1699 = vmatpush1.bf16.msra.mxu0 0
      %1700 = vmatprep.subr.bf16.mxu0 0
      %1701 = vmatpush1.bf16.msra.mxu0 0
      %1702 = vmatprep.subr.bf16.mxu0 0
      %1703 = vmatpush1.bf16.msra.mxu0 0
      %1704 = vmatprep.subr.bf16.mxu0 0
      %1705 = vmatpush1.bf16.msra.mxu0 0
      %1706 = vmatprep.subr.bf16.mxu0 0
      %1707 = vmatpush1.bf16.msra.mxu0 0
      %1708 = vmatprep.subr.bf16.mxu0 0
      %1709 = vmatpush1.bf16.msra.mxu0 0
      %1710 = vmatprep.subr.bf16.mxu0 0
      %1711 = vmatpush1.bf16.msra.mxu0 0
      %1712 = vmatprep.subr.bf16.mxu0 0
      %1713 = vmatpush1.bf16.msra.mxu0 0
      %1714 = vmatprep.subr.bf16.mxu0 0
      %1715 = vmatpush1.bf16.msra.mxu0 0
      %1716 = vmatprep.subr.bf16.mxu0 0
      %1717 = vmatpush1.bf16.msra.mxu0 0
      %1718 = vmatprep.subr.bf16.mxu0 0
      %1719 = vmatpush1.bf16.msra.mxu0 0
      %1720 = vmatprep.subr.bf16.mxu0 0
      %1721 = vmatpush1.bf16.msra.mxu0 0
      %1722 = vmatprep.mubr.bf16.mxu0 0
      %1723 = vmatmul.mubr.bf16.gmra.mrb[0].mxu0 %v1679
      %v1724 = vpop.f32.mrb[0].mxu0
      %v1725 = vadd.f32 0.0, %v1724
      %v1726 = vpop.f32.mrb[0].mxu0
      %v1727 = vadd.f32 0.0, %v1726
      %v1728 = vpop.f32.mrb[0].mxu0
      %v1729 = vadd.f32 0.0, %v1728
      %v1730 = vpop.f32.mrb[0].mxu0
      %v1731 = vadd.f32 0.0, %v1730
      %1732 = vmatprep.mubr.bf16.mxu0 0
      %1733 = vmatmul.mubr.bf16.gmra.mrb[0].mxu0 %v1682
      %v1734 = vpop.f32.mrb[0].mxu0
      %v1735 = vadd.f32 0.0, %v1734
      %v1736 = vpop.f32.mrb[0].mxu0
      %v1737 = vadd.f32 0.0, %v1736
      %v1738 = vpop.f32.mrb[0].mxu0
      %v1739 = vadd.f32 0.0, %v1738
      %v1740 = vpop.f32.mrb[0].mxu0
      %v1741 = vadd.f32 0.0, %v1740
      %1742 = vmatprep.mubr.bf16.mxu0 0
      %1743 = vmatmul.mubr.bf16.gmra.mrb[0].mxu0 %v1685
      %v1744 = vpop.f32.mrb[0].mxu0
      %v1745 = vadd.f32 0.0, %v1744
      %v1746 = vpop.f32.mrb[0].mxu0
      %v1747 = vadd.f32 0.0, %v1746
      %v1748 = vpop.f32.mrb[0].mxu0
      %v1749 = vadd.f32 0.0, %v1748
      %v1750 = vpop.f32.mrb[0].mxu0
      %v1751 = vadd.f32 0.0, %v1750
      %1752 = vmatprep.mubr.bf16.mxu0 0
      %1753 = vmatmul.mubr.bf16.gmra.mrb[0].mxu0 %v1688
      %v1754 = vpop.f32.mrb[0].mxu0
      %v1755 = vadd.f32 0.0, %v1754
      %v1756 = vpop.f32.mrb[0].mxu0
      %v1757 = vadd.f32 0.0, %v1756
      %v1758 = vpop.f32.mrb[0].mxu0
      %v1759 = vadd.f32 0.0, %v1758
      %v1760 = vpop.f32.mrb[0].mxu0
      %v1761 = vadd.f32 0.0, %v1760
      %1762 = vdwg.mxu0
      %v1763 = vpack.c.bf16 %v1729, %v1725
      %v1764 = vpack.c.bf16 %v1731, %v1727
      %v1765 = vpack.c.bf16 %v1739, %v1735
      %v1766 = vpack.c.bf16 %v1741, %v1737
      %v1767 = vpack.c.bf16 %v1749, %v1745
      %v1768 = vpack.c.bf16 %v1751, %v1747
      %v1769 = vpack.c.bf16 %v1759, %v1755
      %v1770 = vpack.c.bf16 %v1761, %v1757
      %v1771 = vld [vmem:[%s5] sm:$0xff]
      %v1772 = vld [vmem:[%s5 + $0x8] sm:$0xff]
      %v1773 = vld [vmem:[%s5 + $0x10] sm:$0xff]
      %v1774 = vld [vmem:[%s5 + $0x18] sm:$0xff]
      %v1775 = vld [vmem:[%s5 + $0x20] sm:$0xff]
      %v1776 = vld [vmem:[%s5 + $0x28] sm:$0xff]
      %v1777 = vld [vmem:[%s5 + $0x30] sm:$0xff]
      %v1778 = vld [vmem:[%s5 + $0x38] sm:$0xff]
      %v1779 = vld [vmem:[%s5 + $0x40] sm:$0xff]
      %v1780 = vld [vmem:[%s5 + $0x48] sm:$0xff]
      %v1781 = vld [vmem:[%s5 + $0x50] sm:$0xff]
      %v1782 = vld [vmem:[%s5 + $0x58] sm:$0xff]
      %v1783 = vld [vmem:[%s5 + $0x60] sm:$0xff]
      %v1784 = vld [vmem:[%s5 + $0x68] sm:$0xff]
      %v1785 = vld [vmem:[%s5 + $0x70] sm:$0xff]
      %v1786 = vld [vmem:[%s5 + $0x78] sm:$0xff]
      %v1787 = vld [vmem:[%s5 + $0x80] sm:$0xff]
      %v1788 = vld [vmem:[%s5 + $0x88] sm:$0xff]
      %v1789 = vld [vmem:[%s5 + $0x90] sm:$0xff]
      %v1790 = vld [vmem:[%s5 + $0x98] sm:$0xff]
      %v1791 = vld [vmem:[%s5 + $0xa0] sm:$0xff]
      %v1792 = vld [vmem:[%s5 + $0xa8] sm:$0xff]
      %v1793 = vld [vmem:[%s5 + $0xb0] sm:$0xff]
      %v1794 = vld [vmem:[%s5 + $0xb8] sm:$0xff]
      %v1795 = vld [vmem:[%s5 + $0xc0] sm:$0xff]
      %v1796 = vld [vmem:[%s5 + $0xc8] sm:$0xff]
      %v1797 = vld [vmem:[%s5 + $0xd0] sm:$0xff]
      %v1798 = vld [vmem:[%s5 + $0xd8] sm:$0xff]
      %v1799 = vld [vmem:[%s5 + $0xe0] sm:$0xff]
      %v1800 = vld [vmem:[%s5 + $0xe8] sm:$0xff]
      %v1801 = vld [vmem:[%s5 + $0xf0] sm:$0xff]
      %s1802 = scalar_lea.vmem %s5, 248
      %v1803 = vld [vmem:[%s1802] sm:$0xff]
      %v1804 = vld [vmem:[%s1802 + $0x8] sm:$0xff]
      %v1805 = vld [vmem:[%s1802 + $0x10] sm:$0xff]
      %v1806 = vld [vmem:[%s1802 + $0x18] sm:$0xff]
      %v1807 = vld [vmem:[%s1802 + $0x20] sm:$0xff]
      %v1808 = vld [vmem:[%s1802 + $0x28] sm:$0xff]
      %v1809 = vld [vmem:[%s1802 + $0x30] sm:$0xff]
      %v1810 = vld [vmem:[%s1802 + $0x38] sm:$0xff]
      %v1811 = vld [vmem:[%s1802 + $0x40] sm:$0xff]
      %v1812 = vld [vmem:[%s1802 + $0x48] sm:$0xff]
      %v1813 = vld [vmem:[%s1802 + $0x50] sm:$0xff]
      %v1814 = vld [vmem:[%s1802 + $0x58] sm:$0xff]
      %v1815 = vld [vmem:[%s1802 + $0x60] sm:$0xff]
      %v1816 = vld [vmem:[%s1802 + $0x68] sm:$0xff]
      %v1817 = vld [vmem:[%s1802 + $0x70] sm:$0xff]
      %v1818 = vld [vmem:[%s1802 + $0x78] sm:$0xff]
      %v1819 = vld [vmem:[%s1802 + $0x80] sm:$0xff]
      %v1820 = vld [vmem:[%s1802 + $0x88] sm:$0xff]
      %v1821 = vld [vmem:[%s1802 + $0x90] sm:$0xff]
      %v1822 = vld [vmem:[%s1802 + $0x98] sm:$0xff]
      %v1823 = vld [vmem:[%s1802 + $0xa0] sm:$0xff]
      %v1824 = vld [vmem:[%s1802 + $0xa8] sm:$0xff]
      %v1825 = vld [vmem:[%s1802 + $0xb0] sm:$0xff]
      %v1826 = vld [vmem:[%s1802 + $0xb8] sm:$0xff]
      %v1827 = vld [vmem:[%s1802 + $0xc0] sm:$0xff]
      %v1828 = vld [vmem:[%s1802 + $0xc8] sm:$0xff]
      %v1829 = vld [vmem:[%s1802 + $0xd0] sm:$0xff]
      %v1830 = vld [vmem:[%s1802 + $0xd8] sm:$0xff]
      %v1831 = vld [vmem:[%s1802 + $0xe0] sm:$0xff]
      %v1832 = vld [vmem:[%s1802 + $0xe8] sm:$0xff]
      %v1833 = vld [vmem:[%s1802 + $0xf0] sm:$0xff]
      %v1865 = vunpack.c.l.b16 %v1803
      %v1866 = vunpack.c.h.b16 %v1803
      %v1867 = vunpack.c.l.b16 %v1804
      %v1868 = vunpack.c.h.b16 %v1804
      %v1869 = vunpack.c.l.b16 %v1805
      %v1870 = vunpack.c.h.b16 %v1805
      %v1871 = vunpack.c.l.b16 %v1806
      %v1872 = vunpack.c.h.b16 %v1806
      %v1873 = vunpack.c.l.b16 %v1807
      %v1874 = vunpack.c.h.b16 %v1807
      %v1875 = vunpack.c.l.b16 %v1808
      %v1876 = vunpack.c.h.b16 %v1808
      %v1877 = vunpack.c.l.b16 %v1809
      %v1878 = vunpack.c.h.b16 %v1809
      %v1879 = vunpack.c.l.b16 %v1810
      %v1880 = vunpack.c.h.b16 %v1810
      %v1881 = vunpack.c.l.b16 %v1811
      %v1882 = vunpack.c.h.b16 %v1811
      %v1883 = vunpack.c.l.b16 %v1812
      %v1884 = vunpack.c.h.b16 %v1812
      %v1885 = vunpack.c.l.b16 %v1813
      %v1886 = vunpack.c.h.b16 %v1813
      %v1887 = vunpack.c.l.b16 %v1814
      %v1888 = vunpack.c.h.b16 %v1814
      %v1889 = vunpack.c.l.b16 %v1815
      %v1890 = vunpack.c.h.b16 %v1815
      %v1891 = vunpack.c.l.b16 %v1816
      %v1892 = vunpack.c.h.b16 %v1816
      %v1893 = vunpack.c.l.b16 %v1817
      %v1894 = vunpack.c.h.b16 %v1817
      %v1895 = vunpack.c.l.b16 %v1818
      %v1896 = vunpack.c.h.b16 %v1818
      %v1897 = vunpack.c.l.b16 %v1819
      %v1898 = vunpack.c.h.b16 %v1819
      %v1899 = vunpack.c.l.b16 %v1820
      %v1900 = vunpack.c.h.b16 %v1820
      %v1901 = vunpack.c.l.b16 %v1821
      %v1902 = vunpack.c.h.b16 %v1821
      %v1903 = vunpack.c.l.b16 %v1822
      %v1904 = vunpack.c.h.b16 %v1822
      %v1905 = vunpack.c.l.b16 %v1823
      %v1906 = vunpack.c.h.b16 %v1823
      %v1907 = vunpack.c.l.b16 %v1824
      %v1908 = vunpack.c.h.b16 %v1824
      %v1909 = vunpack.c.l.b16 %v1825
      %v1910 = vunpack.c.h.b16 %v1825
      %v1911 = vunpack.c.l.b16 %v1826
      %v1912 = vunpack.c.h.b16 %v1826
      %v1913 = vunpack.c.l.b16 %v1827
      %v1914 = vunpack.c.h.b16 %v1827
      %v1915 = vunpack.c.l.b16 %v1828
      %v1916 = vunpack.c.h.b16 %v1828
      %v1917 = vunpack.c.l.b16 %v1829
      %v1918 = vunpack.c.h.b16 %v1829
      %v1919 = vunpack.c.l.b16 %v1830
      %v1920 = vunpack.c.h.b16 %v1830
      %v1921 = vunpack.c.l.b16 %v1831
      %v1922 = vunpack.c.h.b16 %v1831
      %v1923 = vunpack.c.l.b16 %v1832
      %v1924 = vunpack.c.h.b16 %v1832
      %v1925 = vunpack.c.l.b16 %v1833
      %v1926 = vunpack.c.h.b16 %v1833
      %v1927 = vpack.c.b16 %v1867, %v1865
      %v1928 = vpack.c.b16 %v1868, %v1866
      %v1929 = vpack.c.b16 %v1871, %v1869
      %v1930 = vpack.c.b16 %v1872, %v1870
      %v1931 = vpack.c.b16 %v1875, %v1873
      %v1932 = vpack.c.b16 %v1876, %v1874
      %v1933 = vpack.c.b16 %v1879, %v1877
      %v1934 = vpack.c.b16 %v1880, %v1878
      %v1935 = vpack.c.b16 %v1883, %v1881
      %v1936 = vpack.c.b16 %v1884, %v1882
      %v1937 = vpack.c.b16 %v1887, %v1885
      %v1938 = vpack.c.b16 %v1888, %v1886
      %v1939 = vpack.c.b16 %v1891, %v1889
      %v1940 = vpack.c.b16 %v1892, %v1890
      %v1941 = vpack.c.b16 %v1895, %v1893
      %v1942 = vpack.c.b16 %v1896, %v1894
      %v1943 = vpack.c.b16 %v1899, %v1897
      %v1944 = vpack.c.b16 %v1900, %v1898
      %v1945 = vpack.c.b16 %v1903, %v1901
      %v1946 = vpack.c.b16 %v1904, %v1902
      %v1947 = vpack.c.b16 %v1907, %v1905
      %v1948 = vpack.c.b16 %v1908, %v1906
      %v1949 = vpack.c.b16 %v1911, %v1909
      %v1950 = vpack.c.b16 %v1912, %v1910
      %v1951 = vpack.c.b16 %v1915, %v1913
      %v1952 = vpack.c.b16 %v1916, %v1914
      %v1953 = vpack.c.b16 %v1919, %v1917
      %v1954 = vpack.c.b16 %v1920, %v1918
      %v1955 = vpack.c.b16 %v1923, %v1921
      %v1956 = vpack.c.b16 %v1924, %v1922
      %v1957 = vpack.c.b16 %v1925, %v1925
      %v1958 = vpack.c.b16 %v1926, %v1926
      %vm1989 = vcmask 982016
      %v1991 = vsel %vm1989, %v1766, 0
      %vm1993 = vcmask 1043456
      %v1995 = vsel %vm1993, %v1957, 0
      %v1998 = vsel %vm1993, %v1958, 0
      %2000 = vmatprep.subr.bf16.mxu0 %v1928
      %2001 = vmatpush1.bf16.msra.mxu0 %v1927
      %2002 = vmatprep.subr.bf16.mxu0 %v1930
      %2003 = vmatpush1.bf16.msra.mxu0 %v1929
      %2004 = vmatprep.subr.bf16.mxu0 %v1932
      %2005 = vmatpush1.bf16.msra.mxu0 %v1931
      %2006 = vmatprep.subr.bf16.mxu0 %v1934
      %2007 = vmatpush1.bf16.msra.mxu0 %v1933
      %2008 = vmatprep.subr.bf16.mxu0 %v1936
      %2009 = vmatpush1.bf16.msra.mxu0 %v1935
      %2010 = vmatprep.subr.bf16.mxu0 %v1938
      %2011 = vmatpush1.bf16.msra.mxu0 %v1937
      %2012 = vmatprep.subr.bf16.mxu0 %v1940
      %2013 = vmatpush1.bf16.msra.mxu0 %v1939
      %2014 = vmatprep.subr.bf16.mxu0 %v1942
      %2015 = vmatpush1.bf16.msra.mxu0 %v1941
      %2016 = vmatprep.subr.bf16.mxu0 %v1944
      %2017 = vmatpush1.bf16.msra.mxu0 %v1943
      %2018 = vmatprep.subr.bf16.mxu0 %v1946
      %2019 = vmatpush1.bf16.msra.mxu0 %v1945
      %2020 = vmatprep.subr.bf16.mxu0 %v1948
      %2021 = vmatpush1.bf16.msra.mxu0 %v1947
      %2022 = vmatprep.subr.bf16.mxu0 %v1950
      %2023 = vmatpush1.bf16.msra.mxu0 %v1949
      %2024 = vmatprep.subr.bf16.mxu0 %v1952
      %2025 = vmatpush1.bf16.msra.mxu0 %v1951
      %2026 = vmatprep.subr.bf16.mxu0 %v1954
      %2027 = vmatpush1.bf16.msra.mxu0 %v1953
      %2028 = vmatprep.subr.bf16.mxu0 %v1956
      %2029 = vmatpush1.bf16.msra.mxu0 %v1955
      %2030 = vmatprep.subr.bf16.mxu0 %v1998
      %2031 = vmatpush1.bf16.msra.mxu0 %v1995
      %2032 = vmatprep.mubr.bf16.mxu0 %v1991
      %2033 = vmatmul.mubr.bf16.gmra.mrb[0].mxu0 %v1765
      %v2034 = vpop.f32.mrb[0].mxu0
      %v2035 = vadd.f32 0.0, %v2034
      %v2036 = vpop.f32.mrb[0].mxu0
      %v2037 = vadd.f32 0.0, %v2036
      %v2038 = vpop.f32.mrb[0].mxu0
      %v2039 = vadd.f32 0.0, %v2038
      %v2040 = vpop.f32.mrb[0].mxu0
      %v2041 = vadd.f32 0.0, %v2040
      %2042 = vdwg.mxu0
      %v2074 = vunpack.c.l.b16 %v1771
      %v2075 = vunpack.c.h.b16 %v1771
      %v2076 = vunpack.c.l.b16 %v1772
      %v2077 = vunpack.c.h.b16 %v1772
      %v2078 = vunpack.c.l.b16 %v1773
      %v2079 = vunpack.c.h.b16 %v1773
      %v2080 = vunpack.c.l.b16 %v1774
      %v2081 = vunpack.c.h.b16 %v1774
      %v2082 = vunpack.c.l.b16 %v1775
      %v2083 = vunpack.c.h.b16 %v1775
      %v2084 = vunpack.c.l.b16 %v1776
      %v2085 = vunpack.c.h.b16 %v1776
      %v2086 = vunpack.c.l.b16 %v1777
      %v2087 = vunpack.c.h.b16 %v1777
      %v2088 = vunpack.c.l.b16 %v1778
      %v2089 = vunpack.c.h.b16 %v1778
      %v2090 = vunpack.c.l.b16 %v1779
      %v2091 = vunpack.c.h.b16 %v1779
      %v2092 = vunpack.c.l.b16 %v1780
      %v2093 = vunpack.c.h.b16 %v1780
      %v2094 = vunpack.c.l.b16 %v1781
      %v2095 = vunpack.c.h.b16 %v1781
      %v2096 = vunpack.c.l.b16 %v1782
      %v2097 = vunpack.c.h.b16 %v1782
      %v2098 = vunpack.c.l.b16 %v1783
      %v2099 = vunpack.c.h.b16 %v1783
      %v2100 = vunpack.c.l.b16 %v1784
      %v2101 = vunpack.c.h.b16 %v1784
      %v2102 = vunpack.c.l.b16 %v1785
      %v2103 = vunpack.c.h.b16 %v1785
      %v2104 = vunpack.c.l.b16 %v1786
      %v2105 = vunpack.c.h.b16 %v1786
      %v2106 = vunpack.c.l.b16 %v1787
      %v2107 = vunpack.c.h.b16 %v1787
      %v2108 = vunpack.c.l.b16 %v1788
      %v2109 = vunpack.c.h.b16 %v1788
      %v2110 = vunpack.c.l.b16 %v1789
      %v2111 = vunpack.c.h.b16 %v1789
      %v2112 = vunpack.c.l.b16 %v1790
      %v2113 = vunpack.c.h.b16 %v1790
      %v2114 = vunpack.c.l.b16 %v1791
      %v2115 = vunpack.c.h.b16 %v1791
      %v2116 = vunpack.c.l.b16 %v1792
      %v2117 = vunpack.c.h.b16 %v1792
      %v2118 = vunpack.c.l.b16 %v1793
      %v2119 = vunpack.c.h.b16 %v1793
      %v2120 = vunpack.c.l.b16 %v1794
      %v2121 = vunpack.c.h.b16 %v1794
      %v2122 = vunpack.c.l.b16 %v1795
      %v2123 = vunpack.c.h.b16 %v1795
      %v2124 = vunpack.c.l.b16 %v1796
      %v2125 = vunpack.c.h.b16 %v1796
      %v2126 = vunpack.c.l.b16 %v1797
      %v2127 = vunpack.c.h.b16 %v1797
      %v2128 = vunpack.c.l.b16 %v1798
      %v2129 = vunpack.c.h.b16 %v1798
      %v2130 = vunpack.c.l.b16 %v1799
      %v2131 = vunpack.c.h.b16 %v1799
      %v2132 = vunpack.c.l.b16 %v1800
      %v2133 = vunpack.c.h.b16 %v1800
      %v2134 = vunpack.c.l.b16 %v1801
      %v2135 = vunpack.c.h.b16 %v1801
      %v2136 = vpack.c.b16 %v2076, %v2074
      %v2137 = vpack.c.b16 %v2077, %v2075
      %v2138 = vpack.c.b16 %v2080, %v2078
      %v2139 = vpack.c.b16 %v2081, %v2079
      %v2140 = vpack.c.b16 %v2084, %v2082
      %v2141 = vpack.c.b16 %v2085, %v2083
      %v2142 = vpack.c.b16 %v2088, %v2086
      %v2143 = vpack.c.b16 %v2089, %v2087
      %v2144 = vpack.c.b16 %v2092, %v2090
      %v2145 = vpack.c.b16 %v2093, %v2091
      %v2146 = vpack.c.b16 %v2096, %v2094
      %v2147 = vpack.c.b16 %v2097, %v2095
      %v2148 = vpack.c.b16 %v2100, %v2098
      %v2149 = vpack.c.b16 %v2101, %v2099
      %v2150 = vpack.c.b16 %v2104, %v2102
      %v2151 = vpack.c.b16 %v2105, %v2103
      %v2152 = vpack.c.b16 %v2108, %v2106
      %v2153 = vpack.c.b16 %v2109, %v2107
      %v2154 = vpack.c.b16 %v2112, %v2110
      %v2155 = vpack.c.b16 %v2113, %v2111
      %v2156 = vpack.c.b16 %v2116, %v2114
      %v2157 = vpack.c.b16 %v2117, %v2115
      %v2158 = vpack.c.b16 %v2120, %v2118
      %v2159 = vpack.c.b16 %v2121, %v2119
      %v2160 = vpack.c.b16 %v2124, %v2122
      %v2161 = vpack.c.b16 %v2125, %v2123
      %v2162 = vpack.c.b16 %v2128, %v2126
      %v2163 = vpack.c.b16 %v2129, %v2127
      %v2164 = vpack.c.b16 %v2132, %v2130
      %v2165 = vpack.c.b16 %v2133, %v2131
      %v2166 = vpack.c.b16 %v2134, %v2134
      %v2167 = vpack.c.b16 %v2135, %v2135
      %v2199 = vsel %vm1989, %v1764, 0
      %v2202 = vsel %vm1993, %v2166, 0
      %v2205 = vsel %vm1993, %v2167, 0
      %2207 = vmatprep.subr.bf16.mxu0 %v2137
      %2208 = vmatpush1.bf16.msra.mxu0 %v2136
      %2209 = vmatprep.subr.bf16.mxu0 %v2139
      %2210 = vmatpush1.bf16.msra.mxu0 %v2138
      %2211 = vmatprep.subr.bf16.mxu0 %v2141
      %2212 = vmatpush1.bf16.msra.mxu0 %v2140
      %2213 = vmatprep.subr.bf16.mxu0 %v2143
      %2214 = vmatpush1.bf16.msra.mxu0 %v2142
      %2215 = vmatprep.subr.bf16.mxu0 %v2145
      %2216 = vmatpush1.bf16.msra.mxu0 %v2144
      %2217 = vmatprep.subr.bf16.mxu0 %v2147
      %2218 = vmatpush1.bf16.msra.mxu0 %v2146
      %2219 = vmatprep.subr.bf16.mxu0 %v2149
      %2220 = vmatpush1.bf16.msra.mxu0 %v2148
      %2221 = vmatprep.subr.bf16.mxu0 %v2151
      %2222 = vmatpush1.bf16.msra.mxu0 %v2150
      %2223 = vmatprep.subr.bf16.mxu0 %v2153
      %2224 = vmatpush1.bf16.msra.mxu0 %v2152
      %2225 = vmatprep.subr.bf16.mxu0 %v2155
      %2226 = vmatpush1.bf16.msra.mxu0 %v2154
      %2227 = vmatprep.subr.bf16.mxu0 %v2157
      %2228 = vmatpush1.bf16.msra.mxu0 %v2156
      %2229 = vmatprep.subr.bf16.mxu0 %v2159
      %2230 = vmatpush1.bf16.msra.mxu0 %v2158
      %2231 = vmatprep.subr.bf16.mxu0 %v2161
      %2232 = vmatpush1.bf16.msra.mxu0 %v2160
      %2233 = vmatprep.subr.bf16.mxu0 %v2163
      %2234 = vmatpush1.bf16.msra.mxu0 %v2162
      %2235 = vmatprep.subr.bf16.mxu0 %v2165
      %2236 = vmatpush1.bf16.msra.mxu0 %v2164
      %2237 = vmatprep.subr.bf16.mxu0 %v2205
      %2238 = vmatpush1.bf16.msra.mxu0 %v2202
      %2239 = vmatprep.mubr.bf16.mxu0 %v2199
      %2240 = vmatmul.mubr.bf16.gmra.mrb[0].mxu0 %v1763
      %v2241 = vpop.f32.mrb[0].mxu0
      %v2242 = vadd.f32 %v2035, %v2241
      %v2243 = vpop.f32.mrb[0].mxu0
      %v2244 = vadd.f32 %v2037, %v2243
      %v2245 = vpop.f32.mrb[0].mxu0
      %v2246 = vadd.f32 %v2039, %v2245
      %v2247 = vpop.f32.mrb[0].mxu0
      %v2248 = vadd.f32 %v2041, %v2247
      %2249 = vdwg.mxu0
      %s2250 = scalar_lea.vmem %s5, 496
      %v2251 = vld [vmem:[%s2250] sm:$0xff]
      %v2252 = vld [vmem:[%s2250 + $0x8] sm:$0xff]
      %v2253 = vld [vmem:[%s2250 + $0x10] sm:$0xff]
      %v2254 = vld [vmem:[%s2250 + $0x18] sm:$0xff]
      %v2255 = vld [vmem:[%s2250 + $0x20] sm:$0xff]
      %v2256 = vld [vmem:[%s2250 + $0x28] sm:$0xff]
      %v2257 = vld [vmem:[%s2250 + $0x30] sm:$0xff]
      %v2258 = vld [vmem:[%s2250 + $0x38] sm:$0xff]
      %v2259 = vld [vmem:[%s2250 + $0x40] sm:$0xff]
      %v2260 = vld [vmem:[%s2250 + $0x48] sm:$0xff]
      %v2261 = vld [vmem:[%s2250 + $0x50] sm:$0xff]
      %v2262 = vld [vmem:[%s2250 + $0x58] sm:$0xff]
      %v2263 = vld [vmem:[%s2250 + $0x60] sm:$0xff]
      %v2264 = vld [vmem:[%s2250 + $0x68] sm:$0xff]
      %v2265 = vld [vmem:[%s2250 + $0x70] sm:$0xff]
      %v2266 = vld [vmem:[%s2250 + $0x78] sm:$0xff]
      %v2267 = vld [vmem:[%s2250 + $0x80] sm:$0xff]
      %v2268 = vld [vmem:[%s2250 + $0x88] sm:$0xff]
      %v2269 = vld [vmem:[%s2250 + $0x90] sm:$0xff]
      %v2270 = vld [vmem:[%s2250 + $0x98] sm:$0xff]
      %v2271 = vld [vmem:[%s2250 + $0xa0] sm:$0xff]
      %v2272 = vld [vmem:[%s2250 + $0xa8] sm:$0xff]
      %v2273 = vld [vmem:[%s2250 + $0xb0] sm:$0xff]
      %v2274 = vld [vmem:[%s2250 + $0xb8] sm:$0xff]
      %v2275 = vld [vmem:[%s2250 + $0xc0] sm:$0xff]
      %v2276 = vld [vmem:[%s2250 + $0xc8] sm:$0xff]
      %v2277 = vld [vmem:[%s2250 + $0xd0] sm:$0xff]
      %v2278 = vld [vmem:[%s2250 + $0xd8] sm:$0xff]
      %v2279 = vld [vmem:[%s2250 + $0xe0] sm:$0xff]
      %v2280 = vld [vmem:[%s2250 + $0xe8] sm:$0xff]
      %v2281 = vld [vmem:[%s2250 + $0xf0] sm:$0xff]
      %v2313 = vunpack.c.l.b16 %v2251
      %v2314 = vunpack.c.h.b16 %v2251
      %v2315 = vunpack.c.l.b16 %v2252
      %v2316 = vunpack.c.h.b16 %v2252
      %v2317 = vunpack.c.l.b16 %v2253
      %v2318 = vunpack.c.h.b16 %v2253
      %v2319 = vunpack.c.l.b16 %v2254
      %v2320 = vunpack.c.h.b16 %v2254
      %v2321 = vunpack.c.l.b16 %v2255
      %v2322 = vunpack.c.h.b16 %v2255
      %v2323 = vunpack.c.l.b16 %v2256
      %v2324 = vunpack.c.h.b16 %v2256
      %v2325 = vunpack.c.l.b16 %v2257
      %v2326 = vunpack.c.h.b16 %v2257
      %v2327 = vunpack.c.l.b16 %v2258
      %v2328 = vunpack.c.h.b16 %v2258
      %v2329 = vunpack.c.l.b16 %v2259
      %v2330 = vunpack.c.h.b16 %v2259
      %v2331 = vunpack.c.l.b16 %v2260
      %v2332 = vunpack.c.h.b16 %v2260
      %v2333 = vunpack.c.l.b16 %v2261
      %v2334 = vunpack.c.h.b16 %v2261
      %v2335 = vunpack.c.l.b16 %v2262
      %v2336 = vunpack.c.h.b16 %v2262
      %v2337 = vunpack.c.l.b16 %v2263
      %v2338 = vunpack.c.h.b16 %v2263
      %v2339 = vunpack.c.l.b16 %v2264
      %v2340 = vunpack.c.h.b16 %v2264
      %v2341 = vunpack.c.l.b16 %v2265
      %v2342 = vunpack.c.h.b16 %v2265
      %v2343 = vunpack.c.l.b16 %v2266
      %v2344 = vunpack.c.h.b16 %v2266
      %v2345 = vunpack.c.l.b16 %v2267
      %v2346 = vunpack.c.h.b16 %v2267
      %v2347 = vunpack.c.l.b16 %v2268
      %v2348 = vunpack.c.h.b16 %v2268
      %v2349 = vunpack.c.l.b16 %v2269
      %v2350 = vunpack.c.h.b16 %v2269
      %v2351 = vunpack.c.l.b16 %v2270
      %v2352 = vunpack.c.h.b16 %v2270
      %v2353 = vunpack.c.l.b16 %v2271
      %v2354 = vunpack.c.h.b16 %v2271
      %v2355 = vunpack.c.l.b16 %v2272
      %v2356 = vunpack.c.h.b16 %v2272
      %v2357 = vunpack.c.l.b16 %v2273
      %v2358 = vunpack.c.h.b16 %v2273
      %v2359 = vunpack.c.l.b16 %v2274
      %v2360 = vunpack.c.h.b16 %v2274
      %v2361 = vunpack.c.l.b16 %v2275
      %v2362 = vunpack.c.h.b16 %v2275
      %v2363 = vunpack.c.l.b16 %v2276
      %v2364 = vunpack.c.h.b16 %v2276
      %v2365 = vunpack.c.l.b16 %v2277
      %v2366 = vunpack.c.h.b16 %v2277
      %v2367 = vunpack.c.l.b16 %v2278
      %v2368 = vunpack.c.h.b16 %v2278
      %v2369 = vunpack.c.l.b16 %v2279
      %v2370 = vunpack.c.h.b16 %v2279
      %v2371 = vunpack.c.l.b16 %v2280
      %v2372 = vunpack.c.h.b16 %v2280
      %v2373 = vunpack.c.l.b16 %v2281
      %v2374 = vunpack.c.h.b16 %v2281
      %v2375 = vpack.c.b16 %v2315, %v2313
      %v2376 = vpack.c.b16 %v2316, %v2314
      %v2377 = vpack.c.b16 %v2319, %v2317
      %v2378 = vpack.c.b16 %v2320, %v2318
      %v2379 = vpack.c.b16 %v2323, %v2321
      %v2380 = vpack.c.b16 %v2324, %v2322
      %v2381 = vpack.c.b16 %v2327, %v2325
      %v2382 = vpack.c.b16 %v2328, %v2326
      %v2383 = vpack.c.b16 %v2331, %v2329
      %v2384 = vpack.c.b16 %v2332, %v2330
      %v2385 = vpack.c.b16 %v2335, %v2333
      %v2386 = vpack.c.b16 %v2336, %v2334
      %v2387 = vpack.c.b16 %v2339, %v2337
      %v2388 = vpack.c.b16 %v2340, %v2338
      %v2389 = vpack.c.b16 %v2343, %v2341
      %v2390 = vpack.c.b16 %v2344, %v2342
      %v2391 = vpack.c.b16 %v2347, %v2345
      %v2392 = vpack.c.b16 %v2348, %v2346
      %v2393 = vpack.c.b16 %v2351, %v2349
      %v2394 = vpack.c.b16 %v2352, %v2350
      %v2395 = vpack.c.b16 %v2355, %v2353
      %v2396 = vpack.c.b16 %v2356, %v2354
      %v2397 = vpack.c.b16 %v2359, %v2357
      %v2398 = vpack.c.b16 %v2360, %v2358
      %v2399 = vpack.c.b16 %v2363, %v2361
      %v2400 = vpack.c.b16 %v2364, %v2362
      %v2401 = vpack.c.b16 %v2367, %v2365
      %v2402 = vpack.c.b16 %v2368, %v2366
      %v2403 = vpack.c.b16 %v2371, %v2369
      %v2404 = vpack.c.b16 %v2372, %v2370
      %v2405 = vpack.c.b16 %v2373, %v2373
      %v2406 = vpack.c.b16 %v2374, %v2374
      %v2438 = vsel %vm1989, %v1768, 0
      %v2441 = vsel %vm1993, %v2405, 0
      %v2444 = vsel %vm1993, %v2406, 0
      %2446 = vmatprep.subr.bf16.mxu0 %v2376
      %2447 = vmatpush1.bf16.msra.mxu0 %v2375
      %2448 = vmatprep.subr.bf16.mxu0 %v2378
      %2449 = vmatpush1.bf16.msra.mxu0 %v2377
      %2450 = vmatprep.subr.bf16.mxu0 %v2380
      %2451 = vmatpush1.bf16.msra.mxu0 %v2379
      %2452 = vmatprep.subr.bf16.mxu0 %v2382
      %2453 = vmatpush1.bf16.msra.mxu0 %v2381
      %2454 = vmatprep.subr.bf16.mxu0 %v2384
      %2455 = vmatpush1.bf16.msra.mxu0 %v2383
      %2456 = vmatprep.subr.bf16.mxu0 %v2386
      %2457 = vmatpush1.bf16.msra.mxu0 %v2385
      %2458 = vmatprep.subr.bf16.mxu0 %v2388
      %2459 = vmatpush1.bf16.msra.mxu0 %v2387
      %2460 = vmatprep.subr.bf16.mxu0 %v2390
      %2461 = vmatpush1.bf16.msra.mxu0 %v2389
      %2462 = vmatprep.subr.bf16.mxu0 %v2392
      %2463 = vmatpush1.bf16.msra.mxu0 %v2391
      %2464 = vmatprep.subr.bf16.mxu0 %v2394
      %2465 = vmatpush1.bf16.msra.mxu0 %v2393
      %2466 = vmatprep.subr.bf16.mxu0 %v2396
      %2467 = vmatpush1.bf16.msra.mxu0 %v2395
      %2468 = vmatprep.subr.bf16.mxu0 %v2398
      %2469 = vmatpush1.bf16.msra.mxu0 %v2397
      %2470 = vmatprep.subr.bf16.mxu0 %v2400
      %2471 = vmatpush1.bf16.msra.mxu0 %v2399
      %2472 = vmatprep.subr.bf16.mxu0 %v2402
      %2473 = vmatpush1.bf16.msra.mxu0 %v2401
      %2474 = vmatprep.subr.bf16.mxu0 %v2404
      %2475 = vmatpush1.bf16.msra.mxu0 %v2403
      %2476 = vmatprep.subr.bf16.mxu0 %v2444
      %2477 = vmatpush1.bf16.msra.mxu0 %v2441
      %2478 = vmatprep.mubr.bf16.mxu0 %v2438
      %2479 = vmatmul.mubr.bf16.gmra.mrb[0].mxu0 %v1767
      %v2480 = vpop.f32.mrb[0].mxu0
      %v2481 = vadd.f32 0.0, %v2480
      %v2482 = vpop.f32.mrb[0].mxu0
      %v2483 = vadd.f32 0.0, %v2482
      %v2484 = vpop.f32.mrb[0].mxu0
      %v2485 = vadd.f32 0.0, %v2484
      %v2486 = vpop.f32.mrb[0].mxu0
      %v2487 = vadd.f32 0.0, %v2486
      %2488 = vdwg.mxu0
      %v2489 = vadd.f32 %v2242, %v2481
      %v2490 = vadd.f32 %v2244, %v2483
      %v2491 = vadd.f32 %v2246, %v2485
      %v2492 = vadd.f32 %v2248, %v2487
      %s2493 = scalar_lea.vmem %s5, 744
      %v2494 = vld [vmem:[%s2493] sm:$0xff]
      %v2495 = vld [vmem:[%s2493 + $0x8] sm:$0xff]
      %v2496 = vld [vmem:[%s2493 + $0x10] sm:$0xff]
      %v2497 = vld [vmem:[%s2493 + $0x18] sm:$0xff]
      %v2498 = vld [vmem:[%s2493 + $0x20] sm:$0xff]
      %v2499 = vld [vmem:[%s2493 + $0x28] sm:$0xff]
      %v2500 = vld [vmem:[%s2493 + $0x30] sm:$0xff]
      %v2501 = vld [vmem:[%s2493 + $0x38] sm:$0xff]
      %v2502 = vld [vmem:[%s2493 + $0x40] sm:$0xff]
      %v2503 = vld [vmem:[%s2493 + $0x48] sm:$0xff]
      %v2504 = vld [vmem:[%s2493 + $0x50] sm:$0xff]
      %v2505 = vld [vmem:[%s2493 + $0x58] sm:$0xff]
      %v2506 = vld [vmem:[%s2493 + $0x60] sm:$0xff]
      %v2507 = vld [vmem:[%s2493 + $0x68] sm:$0xff]
      %v2508 = vld [vmem:[%s2493 + $0x70] sm:$0xff]
      %v2509 = vld [vmem:[%s2493 + $0x78] sm:$0xff]
      %v2510 = vld [vmem:[%s2493 + $0x80] sm:$0xff]
      %v2511 = vld [vmem:[%s2493 + $0x88] sm:$0xff]
      %v2512 = vld [vmem:[%s2493 + $0x90] sm:$0xff]
      %v2513 = vld [vmem:[%s2493 + $0x98] sm:$0xff]
      %v2514 = vld [vmem:[%s2493 + $0xa0] sm:$0xff]
      %v2515 = vld [vmem:[%s2493 + $0xa8] sm:$0xff]
      %v2516 = vld [vmem:[%s2493 + $0xb0] sm:$0xff]
      %v2517 = vld [vmem:[%s2493 + $0xb8] sm:$0xff]
      %v2518 = vld [vmem:[%s2493 + $0xc0] sm:$0xff]
      %v2519 = vld [vmem:[%s2493 + $0xc8] sm:$0xff]
      %v2520 = vld [vmem:[%s2493 + $0xd0] sm:$0xff]
      %v2521 = vld [vmem:[%s2493 + $0xd8] sm:$0xff]
      %v2522 = vld [vmem:[%s2493 + $0xe0] sm:$0xff]
      %v2523 = vld [vmem:[%s2493 + $0xe8] sm:$0xff]
      %v2524 = vld [vmem:[%s2493 + $0xf0] sm:$0xff]
      %v2556 = vunpack.c.l.b16 %v2494
      %v2557 = vunpack.c.h.b16 %v2494
      %v2558 = vunpack.c.l.b16 %v2495
      %v2559 = vunpack.c.h.b16 %v2495
      %v2560 = vunpack.c.l.b16 %v2496
      %v2561 = vunpack.c.h.b16 %v2496
      %v2562 = vunpack.c.l.b16 %v2497
      %v2563 = vunpack.c.h.b16 %v2497
      %v2564 = vunpack.c.l.b16 %v2498
      %v2565 = vunpack.c.h.b16 %v2498
      %v2566 = vunpack.c.l.b16 %v2499
      %v2567 = vunpack.c.h.b16 %v2499
      %v2568 = vunpack.c.l.b16 %v2500
      %v2569 = vunpack.c.h.b16 %v2500
      %v2570 = vunpack.c.l.b16 %v2501
      %v2571 = vunpack.c.h.b16 %v2501
      %v2572 = vunpack.c.l.b16 %v2502
      %v2573 = vunpack.c.h.b16 %v2502
      %v2574 = vunpack.c.l.b16 %v2503
      %v2575 = vunpack.c.h.b16 %v2503
      %v2576 = vunpack.c.l.b16 %v2504
      %v2577 = vunpack.c.h.b16 %v2504
      %v2578 = vunpack.c.l.b16 %v2505
      %v2579 = vunpack.c.h.b16 %v2505
      %v2580 = vunpack.c.l.b16 %v2506
      %v2581 = vunpack.c.h.b16 %v2506
      %v2582 = vunpack.c.l.b16 %v2507
      %v2583 = vunpack.c.h.b16 %v2507
      %v2584 = vunpack.c.l.b16 %v2508
      %v2585 = vunpack.c.h.b16 %v2508
      %v2586 = vunpack.c.l.b16 %v2509
      %v2587 = vunpack.c.h.b16 %v2509
      %v2588 = vunpack.c.l.b16 %v2510
      %v2589 = vunpack.c.h.b16 %v2510
      %v2590 = vunpack.c.l.b16 %v2511
      %v2591 = vunpack.c.h.b16 %v2511
      %v2592 = vunpack.c.l.b16 %v2512
      %v2593 = vunpack.c.h.b16 %v2512
      %v2594 = vunpack.c.l.b16 %v2513
      %v2595 = vunpack.c.h.b16 %v2513
      %v2596 = vunpack.c.l.b16 %v2514
      %v2597 = vunpack.c.h.b16 %v2514
      %v2598 = vunpack.c.l.b16 %v2515
      %v2599 = vunpack.c.h.b16 %v2515
      %v2600 = vunpack.c.l.b16 %v2516
      %v2601 = vunpack.c.h.b16 %v2516
      %v2602 = vunpack.c.l.b16 %v2517
      %v2603 = vunpack.c.h.b16 %v2517
      %v2604 = vunpack.c.l.b16 %v2518
      %v2605 = vunpack.c.h.b16 %v2518
      %v2606 = vunpack.c.l.b16 %v2519
      %v2607 = vunpack.c.h.b16 %v2519
      %v2608 = vunpack.c.l.b16 %v2520
      %v2609 = vunpack.c.h.b16 %v2520
      %v2610 = vunpack.c.l.b16 %v2521
      %v2611 = vunpack.c.h.b16 %v2521
      %v2612 = vunpack.c.l.b16 %v2522
      %v2613 = vunpack.c.h.b16 %v2522
      %v2614 = vunpack.c.l.b16 %v2523
      %v2615 = vunpack.c.h.b16 %v2523
      %v2616 = vunpack.c.l.b16 %v2524
      %v2617 = vunpack.c.h.b16 %v2524
      %v2618 = vpack.c.b16 %v2558, %v2556
      %v2619 = vpack.c.b16 %v2559, %v2557
      %v2620 = vpack.c.b16 %v2562, %v2560
      %v2621 = vpack.c.b16 %v2563, %v2561
      %v2622 = vpack.c.b16 %v2566, %v2564
      %v2623 = vpack.c.b16 %v2567, %v2565
      %v2624 = vpack.c.b16 %v2570, %v2568
      %v2625 = vpack.c.b16 %v2571, %v2569
      %v2626 = vpack.c.b16 %v2574, %v2572
      %v2627 = vpack.c.b16 %v2575, %v2573
      %v2628 = vpack.c.b16 %v2578, %v2576
      %v2629 = vpack.c.b16 %v2579, %v2577
      %v2630 = vpack.c.b16 %v2582, %v2580
      %v2631 = vpack.c.b16 %v2583, %v2581
      %v2632 = vpack.c.b16 %v2586, %v2584
      %v2633 = vpack.c.b16 %v2587, %v2585
      %v2634 = vpack.c.b16 %v2590, %v2588
      %v2635 = vpack.c.b16 %v2591, %v2589
      %v2636 = vpack.c.b16 %v2594, %v2592
      %v2637 = vpack.c.b16 %v2595, %v2593
      %v2638 = vpack.c.b16 %v2598, %v2596
      %v2639 = vpack.c.b16 %v2599, %v2597
      %v2640 = vpack.c.b16 %v2602, %v2600
      %v2641 = vpack.c.b16 %v2603, %v2601
      %v2642 = vpack.c.b16 %v2606, %v2604
      %v2643 = vpack.c.b16 %v2607, %v2605
      %v2644 = vpack.c.b16 %v2610, %v2608
      %v2645 = vpack.c.b16 %v2611, %v2609
      %v2646 = vpack.c.b16 %v2614, %v2612
      %v2647 = vpack.c.b16 %v2615, %v2613
      %v2648 = vpack.c.b16 %v2616, %v2616
      %v2649 = vpack.c.b16 %v2617, %v2617
      %v2681 = vsel %vm1989, %v1770, 0
      %v2684 = vsel %vm1993, %v2648, 0
      %v2687 = vsel %vm1993, %v2649, 0
      %2689 = vmatprep.subr.bf16.mxu0 %v2619
      %2690 = vmatpush1.bf16.msra.mxu0 %v2618
      %2691 = vmatprep.subr.bf16.mxu0 %v2621
      %2692 = vmatpush1.bf16.msra.mxu0 %v2620
      %2693 = vmatprep.subr.bf16.mxu0 %v2623
      %2694 = vmatpush1.bf16.msra.mxu0 %v2622
      %2695 = vmatprep.subr.bf16.mxu0 %v2625
      %2696 = vmatpush1.bf16.msra.mxu0 %v2624
      %2697 = vmatprep.subr.bf16.mxu0 %v2627
      %2698 = vmatpush1.bf16.msra.mxu0 %v2626
      %2699 = vmatprep.subr.bf16.mxu0 %v2629
      %2700 = vmatpush1.bf16.msra.mxu0 %v2628
      %2701 = vmatprep.subr.bf16.mxu0 %v2631
      %2702 = vmatpush1.bf16.msra.mxu0 %v2630
      %2703 = vmatprep.subr.bf16.mxu0 %v2633
      %2704 = vmatpush1.bf16.msra.mxu0 %v2632
      %2705 = vmatprep.subr.bf16.mxu0 %v2635
      %2706 = vmatpush1.bf16.msra.mxu0 %v2634
      %2707 = vmatprep.subr.bf16.mxu0 %v2637
      %2708 = vmatpush1.bf16.msra.mxu0 %v2636
      %2709 = vmatprep.subr.bf16.mxu0 %v2639
      %2710 = vmatpush1.bf16.msra.mxu0 %v2638
      %2711 = vmatprep.subr.bf16.mxu0 %v2641
      %2712 = vmatpush1.bf16.msra.mxu0 %v2640
      %2713 = vmatprep.subr.bf16.mxu0 %v2643
      %2714 = vmatpush1.bf16.msra.mxu0 %v2642
      %2715 = vmatprep.subr.bf16.mxu0 %v2645
      %2716 = vmatpush1.bf16.msra.mxu0 %v2644
      %2717 = vmatprep.subr.bf16.mxu0 %v2647
      %2718 = vmatpush1.bf16.msra.mxu0 %v2646
      %2719 = vmatprep.subr.bf16.mxu0 %v2687
      %2720 = vmatpush1.bf16.msra.mxu0 %v2684
      %2721 = vmatprep.mubr.bf16.mxu0 %v2681
      %2722 = vmatmul.mubr.bf16.gmra.mrb[0].mxu0 %v1769
      %v2723 = vpop.f32.mrb[0].mxu0
      %v2724 = vadd.f32 0.0, %v2723
      %v2725 = vpop.f32.mrb[0].mxu0
      %v2726 = vadd.f32 0.0, %v2725
      %v2727 = vpop.f32.mrb[0].mxu0
      %v2728 = vadd.f32 0.0, %v2727
      %v2729 = vpop.f32.mrb[0].mxu0
      %v2730 = vadd.f32 0.0, %v2729
      %2731 = vdwg.mxu0
      %v2732 = vadd.f32 %v2489, %v2724
      %v2733 = vadd.f32 %v2490, %v2726
      %v2734 = vadd.f32 %v2491, %v2728
      %v2735 = vadd.f32 %v2492, %v2730
      %v2736 = vld [vmem:[%s6] sm:$0x3]
      %v2738 = vlaneseq
      %v2739 = vshrl.u32 %v2738, 7
      %v2740 = vsub.s32 0, %v2739
      %v2741 = vrot.slane %v2736, %v2740
      %v2742 = vlaneseq
      %v2743 = vshrl.u32 %v2742, 7
      %v2744 = vsub.s32 1, %v2743
      %v2745 = vrot.slane %v2736, %v2744
      %v2748 = vadd.f32 %v2732, %v2741
      %v2749 = vadd.f32 %v2733, %v2745
      %v2750 = vadd.f32 %v2734, %v2741
      %v2751 = vadd.f32 %v2735, %v2745
      %v2752 = vmax.f32 %v2748, 0.0
      %v2753 = vmax.f32 %v2749, 0.0
      %v2754 = vmax.f32 %v2750, 0.0
      %v2755 = vmax.f32 %v2751, 0.0
      %v2756 = vpack.c.bf16 %v2754, %v2752
      %v2757 = vpack.c.bf16 %v2755, %v2753
      %v2758 = vld [vmem:[%s7] sm:$0xf]
      %v2759 = vld [vmem:[%s7 + $0x4] sm:$0xf]
      %v2760 = vld [vmem:[%s7 + $0x8] sm:$0xf]
      %v2761 = vld [vmem:[%s7 + $0xc] sm:$0xf]
      %v2766 = vunpack.c.l.b16 %v2758
      %v2767 = vunpack.c.l.b16 %v2759
      %v2768 = vunpack.c.l.b16 %v2760
      %v2769 = vunpack.c.l.b16 %v2761
      %v2770 = vpack.c.b16 %v2767, %v2766
      %v2771 = vpack.c.b16 %v2769, %v2768
      %vm2772 = vcmask 130048
      %v2774 = vsel %vm2772, %v2770, 0
      %v2777 = vsel %vm2772, %v2771, 0
      %2779 = vmatprep.subr.bf16.mxu0 %v2757
      %2780 = vmatpush1.bf16.msra.mxu0 %v2756
      %2781 = vmatprep.subr.bf16.mxu0 0
      %2782 = vmatpush1.bf16.msra.mxu0 0
      %2783 = vmatprep.subr.bf16.mxu0 0
      %2784 = vmatpush1.bf16.msra.mxu0 0
      %2785 = vmatprep.subr.bf16.mxu0 0
      %2786 = vmatpush1.bf16.msra.mxu0 0
      %2787 = vmatprep.subr.bf16.mxu0 0
      %2788 = vmatpush1.bf16.msra.mxu0 0
      %2789 = vmatprep.subr.bf16.mxu0 0
      %2790 = vmatpush1.bf16.msra.mxu0 0
      %2791 = vmatprep.subr.bf16.mxu0 0
      %2792 = vmatpush1.bf16.msra.mxu0 0
      %2793 = vmatprep.subr.bf16.mxu0 0
      %2794 = vmatpush1.bf16.msra.mxu0 0
      %2795 = vmatprep.subr.bf16.mxu0 0
      %2796 = vmatpush1.bf16.msra.mxu0 0
      %2797 = vmatprep.subr.bf16.mxu0 0
      %2798 = vmatpush1.bf16.msra.mxu0 0
      %2799 = vmatprep.subr.bf16.mxu0 0
      %2800 = vmatpush1.bf16.msra.mxu0 0
      %2801 = vmatprep.subr.bf16.mxu0 0
      %2802 = vmatpush1.bf16.msra.mxu0 0
      %2803 = vmatprep.subr.bf16.mxu0 0
      %2804 = vmatpush1.bf16.msra.mxu0 0
      %2805 = vmatprep.subr.bf16.mxu0 0
      %2806 = vmatpush1.bf16.msra.mxu0 0
      %2807 = vmatprep.subr.bf16.mxu0 0
      %2808 = vmatpush1.bf16.msra.mxu0 0
      %2809 = vmatprep.subr.bf16.mxu0 0
      %2810 = vmatpush1.bf16.msra.mxu0 0
      %2811 = vmatprep.mubr.bf16.mxu0 0
      %2812 = vmatmul.mubr.bf16.gmra.mrb[0].mxu0 %v2774
      %v2813 = vpop.f32.mrb[0].mxu0
      %v2814 = vadd.f32 0.0, %v2813
      %v2815 = vpop.f32.mrb[0].mxu0
      %v2816 = vadd.f32 0.0, %v2815
      %v2817 = vpop.f32.mrb[0].mxu0
      %v2818 = vadd.f32 0.0, %v2817
      %v2819 = vpop.f32.mrb[0].mxu0
      %v2820 = vadd.f32 0.0, %v2819
      %2821 = vmatprep.mubr.bf16.mxu0 0
      %2822 = vmatmul.mubr.bf16.gmra.mrb[0].mxu0 %v2777
      %v2823 = vpop.f32.mrb[0].mxu0
      %v2824 = vadd.f32 0.0, %v2823
      %v2825 = vpop.f32.mrb[0].mxu0
      %v2826 = vadd.f32 0.0, %v2825
      %v2827 = vpop.f32.mrb[0].mxu0
      %v2828 = vadd.f32 0.0, %v2827
      %v2829 = vpop.f32.mrb[0].mxu0
      %v2830 = vadd.f32 0.0, %v2829
      %2831 = vdwg.mxu0
      %v2832 = vpack.c.bf16 %v2818, %v2814
      %v2833 = vpack.c.bf16 %v2820, %v2816
      %v2834 = vpack.c.bf16 %v2828, %v2824
      %v2835 = vpack.c.bf16 %v2830, %v2826
      %v2836 = vld [vmem:[%s8] sm:$0xff]
      %v2837 = vld [vmem:[%s8 + $0x8] sm:$0xff]
      %v2838 = vld [vmem:[%s8 + $0x10] sm:$0xff]
      %v2839 = vld [vmem:[%s8 + $0x18] sm:$0xff]
      %v2840 = vld [vmem:[%s8 + $0x20] sm:$0xff]
      %v2841 = vld [vmem:[%s8 + $0x28] sm:$0xff]
      %v2842 = vld [vmem:[%s8 + $0x30] sm:$0xff]
      %v2843 = vld [vmem:[%s8 + $0x38] sm:$0xff]
      %v2844 = vld [vmem:[%s8 + $0x40] sm:$0xff]
      %v2845 = vld [vmem:[%s8 + $0x48] sm:$0xff]
      %v2846 = vld [vmem:[%s8 + $0x50] sm:$0xff]
      %v2847 = vld [vmem:[%s8 + $0x58] sm:$0xff]
      %v2848 = vld [vmem:[%s8 + $0x60] sm:$0xff]
      %v2849 = vld [vmem:[%s8 + $0x68] sm:$0xff]
      %v2850 = vld [vmem:[%s8 + $0x70] sm:$0xff]
      %v2851 = vld [vmem:[%s8 + $0x78] sm:$0xff]
      %v2852 = vld [vmem:[%s8 + $0x80] sm:$0xff]
      %v2853 = vld [vmem:[%s8 + $0x88] sm:$0xff]
      %v2854 = vld [vmem:[%s8 + $0x90] sm:$0xff]
      %v2855 = vld [vmem:[%s8 + $0x98] sm:$0xff]
      %v2856 = vld [vmem:[%s8 + $0xa0] sm:$0xff]
      %v2857 = vld [vmem:[%s8 + $0xa8] sm:$0xff]
      %v2858 = vld [vmem:[%s8 + $0xb0] sm:$0xff]
      %v2859 = vld [vmem:[%s8 + $0xb8] sm:$0xff]
      %v2860 = vld [vmem:[%s8 + $0xc0] sm:$0xff]
      %v2861 = vld [vmem:[%s8 + $0xc8] sm:$0xff]
      %v2862 = vld [vmem:[%s8 + $0xd0] sm:$0xff]
      %v2863 = vld [vmem:[%s8 + $0xd8] sm:$0xff]
      %s2864 = scalar_lea.vmem %s8, 224
      %v2865 = vld [vmem:[%s2864] sm:$0xff]
      %v2866 = vld [vmem:[%s2864 + $0x8] sm:$0xff]
      %v2867 = vld [vmem:[%s2864 + $0x10] sm:$0xff]
      %v2868 = vld [vmem:[%s2864 + $0x18] sm:$0xff]
      %v2869 = vld [vmem:[%s2864 + $0x20] sm:$0xff]
      %v2870 = vld [vmem:[%s2864 + $0x28] sm:$0xff]
      %v2871 = vld [vmem:[%s2864 + $0x30] sm:$0xff]
      %v2872 = vld [vmem:[%s2864 + $0x38] sm:$0xff]
      %v2873 = vld [vmem:[%s2864 + $0x40] sm:$0xff]
      %v2874 = vld [vmem:[%s2864 + $0x48] sm:$0xff]
      %v2875 = vld [vmem:[%s2864 + $0x50] sm:$0xff]
      %v2876 = vld [vmem:[%s2864 + $0x58] sm:$0xff]
      %v2877 = vld [vmem:[%s2864 + $0x60] sm:$0xff]
      %v2878 = vld [vmem:[%s2864 + $0x68] sm:$0xff]
      %v2879 = vld [vmem:[%s2864 + $0x70] sm:$0xff]
      %v2880 = vld [vmem:[%s2864 + $0x78] sm:$0xff]
      %v2881 = vld [vmem:[%s2864 + $0x80] sm:$0xff]
      %v2882 = vld [vmem:[%s2864 + $0x88] sm:$0xff]
      %v2883 = vld [vmem:[%s2864 + $0x90] sm:$0xff]
      %v2884 = vld [vmem:[%s2864 + $0x98] sm:$0xff]
      %v2885 = vld [vmem:[%s2864 + $0xa0] sm:$0xff]
      %v2886 = vld [vmem:[%s2864 + $0xa8] sm:$0xff]
      %v2887 = vld [vmem:[%s2864 + $0xb0] sm:$0xff]
      %v2888 = vld [vmem:[%s2864 + $0xb8] sm:$0xff]
      %v2889 = vld [vmem:[%s2864 + $0xc0] sm:$0xff]
      %v2890 = vld [vmem:[%s2864 + $0xc8] sm:$0xff]
      %v2891 = vld [vmem:[%s2864 + $0xd0] sm:$0xff]
      %v2892 = vld [vmem:[%s2864 + $0xd8] sm:$0xff]
      %v2895 = vrot.slane %v2832, 4
      %v2896 = vrot.slane %v2833, 4
      %v2926 = vunpack.c.l.b16 %v2865
      %v2927 = vunpack.c.h.b16 %v2865
      %v2928 = vunpack.c.l.b16 %v2866
      %v2929 = vunpack.c.h.b16 %v2866
      %v2930 = vunpack.c.l.b16 %v2867
      %v2931 = vunpack.c.h.b16 %v2867
      %v2932 = vunpack.c.l.b16 %v2868
      %v2933 = vunpack.c.h.b16 %v2868
      %v2934 = vunpack.c.l.b16 %v2869
      %v2935 = vunpack.c.h.b16 %v2869
      %v2936 = vunpack.c.l.b16 %v2870
      %v2937 = vunpack.c.h.b16 %v2870
      %v2938 = vunpack.c.l.b16 %v2871
      %v2939 = vunpack.c.h.b16 %v2871
      %v2940 = vunpack.c.l.b16 %v2872
      %v2941 = vunpack.c.h.b16 %v2872
      %v2942 = vunpack.c.l.b16 %v2873
      %v2943 = vunpack.c.h.b16 %v2873
      %v2944 = vunpack.c.l.b16 %v2874
      %v2945 = vunpack.c.h.b16 %v2874
      %v2946 = vunpack.c.l.b16 %v2875
      %v2947 = vunpack.c.h.b16 %v2875
      %v2948 = vunpack.c.l.b16 %v2876
      %v2949 = vunpack.c.h.b16 %v2876
      %v2950 = vunpack.c.l.b16 %v2877
      %v2951 = vunpack.c.h.b16 %v2877
      %v2952 = vunpack.c.l.b16 %v2878
      %v2953 = vunpack.c.h.b16 %v2878
      %v2954 = vunpack.c.l.b16 %v2879
      %v2955 = vunpack.c.h.b16 %v2879
      %v2956 = vunpack.c.l.b16 %v2880
      %v2957 = vunpack.c.h.b16 %v2880
      %v2958 = vunpack.c.l.b16 %v2881
      %v2959 = vunpack.c.h.b16 %v2881
      %v2960 = vunpack.c.l.b16 %v2882
      %v2961 = vunpack.c.h.b16 %v2882
      %v2962 = vunpack.c.l.b16 %v2883
      %v2963 = vunpack.c.h.b16 %v2883
      %v2964 = vunpack.c.l.b16 %v2884
      %v2965 = vunpack.c.h.b16 %v2884
      %v2966 = vunpack.c.l.b16 %v2885
      %v2967 = vunpack.c.h.b16 %v2885
      %v2968 = vunpack.c.l.b16 %v2886
      %v2969 = vunpack.c.h.b16 %v2886
      %v2970 = vunpack.c.l.b16 %v2887
      %v2971 = vunpack.c.h.b16 %v2887
      %v2972 = vunpack.c.l.b16 %v2888
      %v2973 = vunpack.c.h.b16 %v2888
      %v2974 = vunpack.c.l.b16 %v2889
      %v2975 = vunpack.c.h.b16 %v2889
      %v2976 = vunpack.c.l.b16 %v2890
      %v2977 = vunpack.c.h.b16 %v2890
      %v2978 = vunpack.c.l.b16 %v2891
      %v2979 = vunpack.c.h.b16 %v2891
      %v2980 = vunpack.c.l.b16 %v2892
      %v2981 = vunpack.c.h.b16 %v2892
      %v2982 = vpack.c.b16 %v2928, %v2926
      %v2983 = vpack.c.b16 %v2929, %v2927
      %v2984 = vpack.c.b16 %v2932, %v2930
      %v2985 = vpack.c.b16 %v2933, %v2931
      %v2986 = vpack.c.b16 %v2936, %v2934
      %v2987 = vpack.c.b16 %v2937, %v2935
      %v2988 = vpack.c.b16 %v2940, %v2938
      %v2989 = vpack.c.b16 %v2941, %v2939
      %v2990 = vpack.c.b16 %v2944, %v2942
      %v2991 = vpack.c.b16 %v2945, %v2943
      %v2992 = vpack.c.b16 %v2948, %v2946
      %v2993 = vpack.c.b16 %v2949, %v2947
      %v2994 = vpack.c.b16 %v2952, %v2950
      %v2995 = vpack.c.b16 %v2953, %v2951
      %v2996 = vpack.c.b16 %v2956, %v2954
      %v2997 = vpack.c.b16 %v2957, %v2955
      %v2998 = vpack.c.b16 %v2960, %v2958
      %v2999 = vpack.c.b16 %v2961, %v2959
      %v3000 = vpack.c.b16 %v2964, %v2962
      %v3001 = vpack.c.b16 %v2965, %v2963
      %v3002 = vpack.c.b16 %v2968, %v2966
      %v3003 = vpack.c.b16 %v2969, %v2967
      %v3004 = vpack.c.b16 %v2972, %v2970
      %v3005 = vpack.c.b16 %v2973, %v2971
      %v3006 = vpack.c.b16 %v2976, %v2974
      %v3007 = vpack.c.b16 %v2977, %v2975
      %v3008 = vpack.c.b16 %v2980, %v2978
      %v3009 = vpack.c.b16 %v2981, %v2979
      %vm3038 = vcmask 785408
      %v3040 = vsel %vm3038, %v2896, 0
      %3042 = vmatprep.subr.bf16.mxu0 %v2983
      %3043 = vmatpush1.bf16.msra.mxu0 %v2982
      %3044 = vmatprep.subr.bf16.mxu0 %v2985
      %3045 = vmatpush1.bf16.msra.mxu0 %v2984
      %3046 = vmatprep.subr.bf16.mxu0 %v2987
      %3047 = vmatpush1.bf16.msra.mxu0 %v2986
      %3048 = vmatprep.subr.bf16.mxu0 %v2989
      %3049 = vmatpush1.bf16.msra.mxu0 %v2988
      %3050 = vmatprep.subr.bf16.mxu0 %v2991
      %3051 = vmatpush1.bf16.msra.mxu0 %v2990
      %3052 = vmatprep.subr.bf16.mxu0 %v2993
      %3053 = vmatpush1.bf16.msra.mxu0 %v2992
      %3054 = vmatprep.subr.bf16.mxu0 %v2995
      %3055 = vmatpush1.bf16.msra.mxu0 %v2994
      %3056 = vmatprep.subr.bf16.mxu0 %v2997
      %3057 = vmatpush1.bf16.msra.mxu0 %v2996
      %3058 = vmatprep.subr.bf16.mxu0 %v2999
      %3059 = vmatpush1.bf16.msra.mxu0 %v2998
      %3060 = vmatprep.subr.bf16.mxu0 %v3001
      %3061 = vmatpush1.bf16.msra.mxu0 %v3000
      %3062 = vmatprep.subr.bf16.mxu0 %v3003
      %3063 = vmatpush1.bf16.msra.mxu0 %v3002
      %3064 = vmatprep.subr.bf16.mxu0 %v3005
      %3065 = vmatpush1.bf16.msra.mxu0 %v3004
      %3066 = vmatprep.subr.bf16.mxu0 %v3007
      %3067 = vmatpush1.bf16.msra.mxu0 %v3006
      %3068 = vmatprep.subr.bf16.mxu0 %v3009
      %3069 = vmatpush1.bf16.msra.mxu0 %v3008
      %3070 = vmatprep.subr.bf16.mxu0 0
      %3071 = vmatpush1.bf16.msra.mxu0 0
      %3072 = vmatprep.subr.bf16.mxu0 0
      %3073 = vmatpush1.bf16.msra.mxu0 0
      %3074 = vmatprep.mubr.bf16.mxu0 %v3040
      %3075 = vmatmul.mubr.bf16.gmra.mrb[0].mxu0 %v2895
      %v3076 = vpop.f32.mrb[0].mxu0
      %v3077 = vadd.f32 0.0, %v3076
      %v3078 = vpop.f32.mrb[0].mxu0
      %v3079 = vadd.f32 0.0, %v3078
      %v3080 = vpop.f32.mrb[0].mxu0
      %v3081 = vpop.f32.mrb[0].mxu0
      %3082 = vdwg.mxu0
      %v3111 = vunpack.c.l.b16 %v2836
      %v3112 = vunpack.c.h.b16 %v2836
      %v3113 = vunpack.c.l.b16 %v2837
      %v3114 = vunpack.c.h.b16 %v2837
      %v3115 = vunpack.c.l.b16 %v2838
      %v3116 = vunpack.c.h.b16 %v2838
      %v3117 = vunpack.c.l.b16 %v2839
      %v3118 = vunpack.c.h.b16 %v2839
      %v3119 = vunpack.c.l.b16 %v2840
      %v3120 = vunpack.c.h.b16 %v2840
      %v3121 = vunpack.c.l.b16 %v2841
      %v3122 = vunpack.c.h.b16 %v2841
      %v3123 = vunpack.c.l.b16 %v2842
      %v3124 = vunpack.c.h.b16 %v2842
      %v3125 = vunpack.c.l.b16 %v2843
      %v3126 = vunpack.c.h.b16 %v2843
      %v3127 = vunpack.c.l.b16 %v2844
      %v3128 = vunpack.c.h.b16 %v2844
      %v3129 = vunpack.c.l.b16 %v2845
      %v3130 = vunpack.c.h.b16 %v2845
      %v3131 = vunpack.c.l.b16 %v2846
      %v3132 = vunpack.c.h.b16 %v2846
      %v3133 = vunpack.c.l.b16 %v2847
      %v3134 = vunpack.c.h.b16 %v2847
      %v3135 = vunpack.c.l.b16 %v2848
      %v3136 = vunpack.c.h.b16 %v2848
      %v3137 = vunpack.c.l.b16 %v2849
      %v3138 = vunpack.c.h.b16 %v2849
      %v3139 = vunpack.c.l.b16 %v2850
      %v3140 = vunpack.c.h.b16 %v2850
      %v3141 = vunpack.c.l.b16 %v2851
      %v3142 = vunpack.c.h.b16 %v2851
      %v3143 = vunpack.c.l.b16 %v2852
      %v3144 = vunpack.c.h.b16 %v2852
      %v3145 = vunpack.c.l.b16 %v2853
      %v3146 = vunpack.c.h.b16 %v2853
      %v3147 = vunpack.c.l.b16 %v2854
      %v3148 = vunpack.c.h.b16 %v2854
      %v3149 = vunpack.c.l.b16 %v2855
      %v3150 = vunpack.c.h.b16 %v2855
      %v3151 = vunpack.c.l.b16 %v2856
      %v3152 = vunpack.c.h.b16 %v2856
      %v3153 = vunpack.c.l.b16 %v2857
      %v3154 = vunpack.c.h.b16 %v2857
      %v3155 = vunpack.c.l.b16 %v2858
      %v3156 = vunpack.c.h.b16 %v2858
      %v3157 = vunpack.c.l.b16 %v2859
      %v3158 = vunpack.c.h.b16 %v2859
      %v3159 = vunpack.c.l.b16 %v2860
      %v3160 = vunpack.c.h.b16 %v2860
      %v3161 = vunpack.c.l.b16 %v2861
      %v3162 = vunpack.c.h.b16 %v2861
      %v3163 = vunpack.c.l.b16 %v2862
      %v3164 = vunpack.c.h.b16 %v2862
      %v3165 = vunpack.c.l.b16 %v2863
      %v3166 = vunpack.c.h.b16 %v2863
      %v3167 = vpack.c.b16 %v3113, %v3111
      %v3168 = vpack.c.b16 %v3114, %v3112
      %v3169 = vpack.c.b16 %v3117, %v3115
      %v3170 = vpack.c.b16 %v3118, %v3116
      %v3171 = vpack.c.b16 %v3121, %v3119
      %v3172 = vpack.c.b16 %v3122, %v3120
      %v3173 = vpack.c.b16 %v3125, %v3123
      %v3174 = vpack.c.b16 %v3126, %v3124
      %v3175 = vpack.c.b16 %v3129, %v3127
      %v3176 = vpack.c.b16 %v3130, %v3128
      %v3177 = vpack.c.b16 %v3133, %v3131
      %v3178 = vpack.c.b16 %v3134, %v3132
      %v3179 = vpack.c.b16 %v3137, %v3135
      %v3180 = vpack.c.b16 %v3138, %v3136
      %v3181 = vpack.c.b16 %v3141, %v3139
      %v3182 = vpack.c.b16 %v3142, %v3140
      %v3183 = vpack.c.b16 %v3145, %v3143
      %v3184 = vpack.c.b16 %v3146, %v3144
      %v3185 = vpack.c.b16 %v3149, %v3147
      %v3186 = vpack.c.b16 %v3150, %v3148
      %v3187 = vpack.c.b16 %v3153, %v3151
      %v3188 = vpack.c.b16 %v3154, %v3152
      %v3189 = vpack.c.b16 %v3157, %v3155
      %v3190 = vpack.c.b16 %v3158, %v3156
      %v3191 = vpack.c.b16 %v3161, %v3159
      %v3192 = vpack.c.b16 %v3162, %v3160
      %v3193 = vpack.c.b16 %v3165, %v3163
      %v3194 = vpack.c.b16 %v3166, %v3164
      %v3224 = vsel %vm3038, %v2833, 0
      %3226 = vmatprep.subr.bf16.mxu0 %v3168
      %3227 = vmatpush1.bf16.msra.mxu0 %v3167
      %3228 = vmatprep.subr.bf16.mxu0 %v3170
      %3229 = vmatpush1.bf16.msra.mxu0 %v3169
      %3230 = vmatprep.subr.bf16.mxu0 %v3172
      %3231 = vmatpush1.bf16.msra.mxu0 %v3171
      %3232 = vmatprep.subr.bf16.mxu0 %v3174
      %3233 = vmatpush1.bf16.msra.mxu0 %v3173
      %3234 = vmatprep.subr.bf16.mxu0 %v3176
      %3235 = vmatpush1.bf16.msra.mxu0 %v3175
      %3236 = vmatprep.subr.bf16.mxu0 %v3178
      %3237 = vmatpush1.bf16.msra.mxu0 %v3177
      %3238 = vmatprep.subr.bf16.mxu0 %v3180
      %3239 = vmatpush1.bf16.msra.mxu0 %v3179
      %3240 = vmatprep.subr.bf16.mxu0 %v3182
      %3241 = vmatpush1.bf16.msra.mxu0 %v3181
      %3242 = vmatprep.subr.bf16.mxu0 %v3184
      %3243 = vmatpush1.bf16.msra.mxu0 %v3183
      %3244 = vmatprep.subr.bf16.mxu0 %v3186
      %3245 = vmatpush1.bf16.msra.mxu0 %v3185
      %3246 = vmatprep.subr.bf16.mxu0 %v3188
      %3247 = vmatpush1.bf16.msra.mxu0 %v3187
      %3248 = vmatprep.subr.bf16.mxu0 %v3190
      %3249 = vmatpush1.bf16.msra.mxu0 %v3189
      %3250 = vmatprep.subr.bf16.mxu0 %v3192
      %3251 = vmatpush1.bf16.msra.mxu0 %v3191
      %3252 = vmatprep.subr.bf16.mxu0 %v3194
      %3253 = vmatpush1.bf16.msra.mxu0 %v3193
      %3254 = vmatprep.subr.bf16.mxu0 0
      %3255 = vmatpush1.bf16.msra.mxu0 0
      %3256 = vmatprep.subr.bf16.mxu0 0
      %3257 = vmatpush1.bf16.msra.mxu0 0
      %3258 = vmatprep.mubr.bf16.mxu0 %v3224
      %3259 = vmatmul.mubr.bf16.gmra.mrb[0].mxu0 %v2832
      %v3260 = vpop.f32.mrb[0].mxu0
      %v3261 = vadd.f32 %v3077, %v3260
      %v3262 = vpop.f32.mrb[0].mxu0
      %v3263 = vadd.f32 %v3079, %v3262
      %v3264 = vpop.f32.mrb[0].mxu0
      %v3265 = vpop.f32.mrb[0].mxu0
      %3266 = vdwg.mxu0
      %s3267 = scalar_lea.vmem %s8, 448
      %v3268 = vld [vmem:[%s3267] sm:$0xff]
      %v3269 = vld [vmem:[%s3267 + $0x8] sm:$0xff]
      %v3270 = vld [vmem:[%s3267 + $0x10] sm:$0xff]
      %v3271 = vld [vmem:[%s3267 + $0x18] sm:$0xff]
      %v3272 = vld [vmem:[%s3267 + $0x20] sm:$0xff]
      %v3273 = vld [vmem:[%s3267 + $0x28] sm:$0xff]
      %v3274 = vld [vmem:[%s3267 + $0x30] sm:$0xff]
      %v3275 = vld [vmem:[%s3267 + $0x38] sm:$0xff]
      %v3276 = vld [vmem:[%s3267 + $0x40] sm:$0xff]
      %v3277 = vld [vmem:[%s3267 + $0x48] sm:$0xff]
      %v3278 = vld [vmem:[%s3267 + $0x50] sm:$0xff]
      %v3279 = vld [vmem:[%s3267 + $0x58] sm:$0xff]
      %v3280 = vld [vmem:[%s3267 + $0x60] sm:$0xff]
      %v3281 = vld [vmem:[%s3267 + $0x68] sm:$0xff]
      %v3282 = vld [vmem:[%s3267 + $0x70] sm:$0xff]
      %v3283 = vld [vmem:[%s3267 + $0x78] sm:$0xff]
      %v3284 = vld [vmem:[%s3267 + $0x80] sm:$0xff]
      %v3285 = vld [vmem:[%s3267 + $0x88] sm:$0xff]
      %v3286 = vld [vmem:[%s3267 + $0x90] sm:$0xff]
      %v3287 = vld [vmem:[%s3267 + $0x98] sm:$0xff]
      %v3288 = vld [vmem:[%s3267 + $0xa0] sm:$0xff]
      %v3289 = vld [vmem:[%s3267 + $0xa8] sm:$0xff]
      %v3290 = vld [vmem:[%s3267 + $0xb0] sm:$0xff]
      %v3291 = vld [vmem:[%s3267 + $0xb8] sm:$0xff]
      %v3292 = vld [vmem:[%s3267 + $0xc0] sm:$0xff]
      %v3293 = vld [vmem:[%s3267 + $0xc8] sm:$0xff]
      %v3294 = vld [vmem:[%s3267 + $0xd0] sm:$0xff]
      %v3295 = vld [vmem:[%s3267 + $0xd8] sm:$0xff]
      %v3324 = vunpack.c.l.b16 %v3268
      %v3325 = vunpack.c.h.b16 %v3268
      %v3326 = vunpack.c.l.b16 %v3269
      %v3327 = vunpack.c.h.b16 %v3269
      %v3328 = vunpack.c.l.b16 %v3270
      %v3329 = vunpack.c.h.b16 %v3270
      %v3330 = vunpack.c.l.b16 %v3271
      %v3331 = vunpack.c.h.b16 %v3271
      %v3332 = vunpack.c.l.b16 %v3272
      %v3333 = vunpack.c.h.b16 %v3272
      %v3334 = vunpack.c.l.b16 %v3273
      %v3335 = vunpack.c.h.b16 %v3273
      %v3336 = vunpack.c.l.b16 %v3274
      %v3337 = vunpack.c.h.b16 %v3274
      %v3338 = vunpack.c.l.b16 %v3275
      %v3339 = vunpack.c.h.b16 %v3275
      %v3340 = vunpack.c.l.b16 %v3276
      %v3341 = vunpack.c.h.b16 %v3276
      %v3342 = vunpack.c.l.b16 %v3277
      %v3343 = vunpack.c.h.b16 %v3277
      %v3344 = vunpack.c.l.b16 %v3278
      %v3345 = vunpack.c.h.b16 %v3278
      %v3346 = vunpack.c.l.b16 %v3279
      %v3347 = vunpack.c.h.b16 %v3279
      %v3348 = vunpack.c.l.b16 %v3280
      %v3349 = vunpack.c.h.b16 %v3280
      %v3350 = vunpack.c.l.b16 %v3281
      %v3351 = vunpack.c.h.b16 %v3281
      %v3352 = vunpack.c.l.b16 %v3282
      %v3353 = vunpack.c.h.b16 %v3282
      %v3354 = vunpack.c.l.b16 %v3283
      %v3355 = vunpack.c.h.b16 %v3283
      %v3356 = vunpack.c.l.b16 %v3284
      %v3357 = vunpack.c.h.b16 %v3284
      %v3358 = vunpack.c.l.b16 %v3285
      %v3359 = vunpack.c.h.b16 %v3285
      %v3360 = vunpack.c.l.b16 %v3286
      %v3361 = vunpack.c.h.b16 %v3286
      %v3362 = vunpack.c.l.b16 %v3287
      %v3363 = vunpack.c.h.b16 %v3287
      %v3364 = vunpack.c.l.b16 %v3288
      %v3365 = vunpack.c.h.b16 %v3288
      %v3366 = vunpack.c.l.b16 %v3289
      %v3367 = vunpack.c.h.b16 %v3289
      %v3368 = vunpack.c.l.b16 %v3290
      %v3369 = vunpack.c.h.b16 %v3290
      %v3370 = vunpack.c.l.b16 %v3291
      %v3371 = vunpack.c.h.b16 %v3291
      %v3372 = vunpack.c.l.b16 %v3292
      %v3373 = vunpack.c.h.b16 %v3292
      %v3374 = vunpack.c.l.b16 %v3293
      %v3375 = vunpack.c.h.b16 %v3293
      %v3376 = vunpack.c.l.b16 %v3294
      %v3377 = vunpack.c.h.b16 %v3294
      %v3378 = vunpack.c.l.b16 %v3295
      %v3379 = vunpack.c.h.b16 %v3295
      %v3380 = vpack.c.b16 %v3326, %v3324
      %v3381 = vpack.c.b16 %v3327, %v3325
      %v3382 = vpack.c.b16 %v3330, %v3328
      %v3383 = vpack.c.b16 %v3331, %v3329
      %v3384 = vpack.c.b16 %v3334, %v3332
      %v3385 = vpack.c.b16 %v3335, %v3333
      %v3386 = vpack.c.b16 %v3338, %v3336
      %v3387 = vpack.c.b16 %v3339, %v3337
      %v3388 = vpack.c.b16 %v3342, %v3340
      %v3389 = vpack.c.b16 %v3343, %v3341
      %v3390 = vpack.c.b16 %v3346, %v3344
      %v3391 = vpack.c.b16 %v3347, %v3345
      %v3392 = vpack.c.b16 %v3350, %v3348
      %v3393 = vpack.c.b16 %v3351, %v3349
      %v3394 = vpack.c.b16 %v3354, %v3352
      %v3395 = vpack.c.b16 %v3355, %v3353
      %v3396 = vpack.c.b16 %v3358, %v3356
      %v3397 = vpack.c.b16 %v3359, %v3357
      %v3398 = vpack.c.b16 %v3362, %v3360
      %v3399 = vpack.c.b16 %v3363, %v3361
      %v3400 = vpack.c.b16 %v3366, %v3364
      %v3401 = vpack.c.b16 %v3367, %v3365
      %v3402 = vpack.c.b16 %v3370, %v3368
      %v3403 = vpack.c.b16 %v3371, %v3369
      %v3404 = vpack.c.b16 %v3374, %v3372
      %v3405 = vpack.c.b16 %v3375, %v3373
      %v3406 = vpack.c.b16 %v3378, %v3376
      %v3407 = vpack.c.b16 %v3379, %v3377
      %v3437 = vsel %vm3038, %v2835, 0
      %3439 = vmatprep.subr.bf16.mxu0 %v3381
      %3440 = vmatpush1.bf16.msra.mxu0 %v3380
      %3441 = vmatprep.subr.bf16.mxu0 %v3383
      %3442 = vmatpush1.bf16.msra.mxu0 %v3382
      %3443 = vmatprep.subr.bf16.mxu0 %v3385
      %3444 = vmatpush1.bf16.msra.mxu0 %v3384
      %3445 = vmatprep.subr.bf16.mxu0 %v3387
      %3446 = vmatpush1.bf16.msra.mxu0 %v3386
      %3447 = vmatprep.subr.bf16.mxu0 %v3389
      %3448 = vmatpush1.bf16.msra.mxu0 %v3388
      %3449 = vmatprep.subr.bf16.mxu0 %v3391
      %3450 = vmatpush1.bf16.msra.mxu0 %v3390
      %3451 = vmatprep.subr.bf16.mxu0 %v3393
      %3452 = vmatpush1.bf16.msra.mxu0 %v3392
      %3453 = vmatprep.subr.bf16.mxu0 %v3395
      %3454 = vmatpush1.bf16.msra.mxu0 %v3394
      %3455 = vmatprep.subr.bf16.mxu0 %v3397
      %3456 = vmatpush1.bf16.msra.mxu0 %v3396
      %3457 = vmatprep.subr.bf16.mxu0 %v3399
      %3458 = vmatpush1.bf16.msra.mxu0 %v3398
      %3459 = vmatprep.subr.bf16.mxu0 %v3401
      %3460 = vmatpush1.bf16.msra.mxu0 %v3400
      %3461 = vmatprep.subr.bf16.mxu0 %v3403
      %3462 = vmatpush1.bf16.msra.mxu0 %v3402
      %3463 = vmatprep.subr.bf16.mxu0 %v3405
      %3464 = vmatpush1.bf16.msra.mxu0 %v3404
      %3465 = vmatprep.subr.bf16.mxu0 %v3407
      %3466 = vmatpush1.bf16.msra.mxu0 %v3406
      %3467 = vmatprep.subr.bf16.mxu0 0
      %3468 = vmatpush1.bf16.msra.mxu0 0
      %3469 = vmatprep.subr.bf16.mxu0 0
      %3470 = vmatpush1.bf16.msra.mxu0 0
      %3471 = vmatprep.mubr.bf16.mxu0 %v3437
      %3472 = vmatmul.mubr.bf16.gmra.mrb[0].mxu0 %v2834
      %v3473 = vpop.f32.mrb[0].mxu0
      %v3474 = vadd.f32 0.0, %v3473
      %v3475 = vpop.f32.mrb[0].mxu0
      %v3476 = vadd.f32 0.0, %v3475
      %v3477 = vpop.f32.mrb[0].mxu0
      %v3478 = vpop.f32.mrb[0].mxu0
      %3479 = vdwg.mxu0
      %v3480 = vadd.f32 %v3261, %v3474
      %v3481 = vadd.f32 %v3263, %v3476
      %s3482 = scalar_lea.vmem %s8, 672
      %v3483 = vld [vmem:[%s3482] sm:$0xff]
      %v3484 = vld [vmem:[%s3482 + $0x8] sm:$0xff]
      %v3485 = vld [vmem:[%s3482 + $0x10] sm:$0xff]
      %v3486 = vld [vmem:[%s3482 + $0x18] sm:$0xff]
      %v3487 = vld [vmem:[%s3482 + $0x20] sm:$0xff]
      %v3488 = vld [vmem:[%s3482 + $0x28] sm:$0xff]
      %v3489 = vld [vmem:[%s3482 + $0x30] sm:$0xff]
      %v3490 = vld [vmem:[%s3482 + $0x38] sm:$0xff]
      %v3491 = vld [vmem:[%s3482 + $0x40] sm:$0xff]
      %v3492 = vld [vmem:[%s3482 + $0x48] sm:$0xff]
      %v3493 = vld [vmem:[%s3482 + $0x50] sm:$0xff]
      %v3494 = vld [vmem:[%s3482 + $0x58] sm:$0xff]
      %v3495 = vld [vmem:[%s3482 + $0x60] sm:$0xff]
      %v3496 = vld [vmem:[%s3482 + $0x68] sm:$0xff]
      %v3497 = vld [vmem:[%s3482 + $0x70] sm:$0xff]
      %v3498 = vld [vmem:[%s3482 + $0x78] sm:$0xff]
      %v3499 = vld [vmem:[%s3482 + $0x80] sm:$0xff]
      %v3500 = vld [vmem:[%s3482 + $0x88] sm:$0xff]
      %v3501 = vld [vmem:[%s3482 + $0x90] sm:$0xff]
      %v3502 = vld [vmem:[%s3482 + $0x98] sm:$0xff]
      %v3503 = vld [vmem:[%s3482 + $0xa0] sm:$0xff]
      %v3504 = vld [vmem:[%s3482 + $0xa8] sm:$0xff]
      %v3505 = vld [vmem:[%s3482 + $0xb0] sm:$0xff]
      %v3506 = vld [vmem:[%s3482 + $0xb8] sm:$0xff]
      %v3507 = vld [vmem:[%s3482 + $0xc0] sm:$0xff]
      %v3508 = vld [vmem:[%s3482 + $0xc8] sm:$0xff]
      %v3509 = vld [vmem:[%s3482 + $0xd0] sm:$0xff]
      %v3510 = vld [vmem:[%s3482 + $0xd8] sm:$0xff]
      %v3513 = vrot.slane %v2834, 4
      %v3514 = vrot.slane %v2835, 4
      %v3544 = vunpack.c.l.b16 %v3483
      %v3545 = vunpack.c.h.b16 %v3483
      %v3546 = vunpack.c.l.b16 %v3484
      %v3547 = vunpack.c.h.b16 %v3484
      %v3548 = vunpack.c.l.b16 %v3485
      %v3549 = vunpack.c.h.b16 %v3485
      %v3550 = vunpack.c.l.b16 %v3486
      %v3551 = vunpack.c.h.b16 %v3486
      %v3552 = vunpack.c.l.b16 %v3487
      %v3553 = vunpack.c.h.b16 %v3487
      %v3554 = vunpack.c.l.b16 %v3488
      %v3555 = vunpack.c.h.b16 %v3488
      %v3556 = vunpack.c.l.b16 %v3489
      %v3557 = vunpack.c.h.b16 %v3489
      %v3558 = vunpack.c.l.b16 %v3490
      %v3559 = vunpack.c.h.b16 %v3490
      %v3560 = vunpack.c.l.b16 %v3491
      %v3561 = vunpack.c.h.b16 %v3491
      %v3562 = vunpack.c.l.b16 %v3492
      %v3563 = vunpack.c.h.b16 %v3492
      %v3564 = vunpack.c.l.b16 %v3493
      %v3565 = vunpack.c.h.b16 %v3493
      %v3566 = vunpack.c.l.b16 %v3494
      %v3567 = vunpack.c.h.b16 %v3494
      %v3568 = vunpack.c.l.b16 %v3495
      %v3569 = vunpack.c.h.b16 %v3495
      %v3570 = vunpack.c.l.b16 %v3496
      %v3571 = vunpack.c.h.b16 %v3496
      %v3572 = vunpack.c.l.b16 %v3497
      %v3573 = vunpack.c.h.b16 %v3497
      %v3574 = vunpack.c.l.b16 %v3498
      %v3575 = vunpack.c.h.b16 %v3498
      %v3576 = vunpack.c.l.b16 %v3499
      %v3577 = vunpack.c.h.b16 %v3499
      %v3578 = vunpack.c.l.b16 %v3500
      %v3579 = vunpack.c.h.b16 %v3500
      %v3580 = vunpack.c.l.b16 %v3501
      %v3581 = vunpack.c.h.b16 %v3501
      %v3582 = vunpack.c.l.b16 %v3502
      %v3583 = vunpack.c.h.b16 %v3502
      %v3584 = vunpack.c.l.b16 %v3503
      %v3585 = vunpack.c.h.b16 %v3503
      %v3586 = vunpack.c.l.b16 %v3504
      %v3587 = vunpack.c.h.b16 %v3504
      %v3588 = vunpack.c.l.b16 %v3505
      %v3589 = vunpack.c.h.b16 %v3505
      %v3590 = vunpack.c.l.b16 %v3506
      %v3591 = vunpack.c.h.b16 %v3506
      %v3592 = vunpack.c.l.b16 %v3507
      %v3593 = vunpack.c.h.b16 %v3507
      %v3594 = vunpack.c.l.b16 %v3508
      %v3595 = vunpack.c.h.b16 %v3508
      %v3596 = vunpack.c.l.b16 %v3509
      %v3597 = vunpack.c.h.b16 %v3509
      %v3598 = vunpack.c.l.b16 %v3510
      %v3599 = vunpack.c.h.b16 %v3510
      %v3600 = vpack.c.b16 %v3546, %v3544
      %v3601 = vpack.c.b16 %v3547, %v3545
      %v3602 = vpack.c.b16 %v3550, %v3548
      %v3603 = vpack.c.b16 %v3551, %v3549
      %v3604 = vpack.c.b16 %v3554, %v3552
      %v3605 = vpack.c.b16 %v3555, %v3553
      %v3606 = vpack.c.b16 %v3558, %v3556
      %v3607 = vpack.c.b16 %v3559, %v3557
      %v3608 = vpack.c.b16 %v3562, %v3560
      %v3609 = vpack.c.b16 %v3563, %v3561
      %v3610 = vpack.c.b16 %v3566, %v3564
      %v3611 = vpack.c.b16 %v3567, %v3565
      %v3612 = vpack.c.b16 %v3570, %v3568
      %v3613 = vpack.c.b16 %v3571, %v3569
      %v3614 = vpack.c.b16 %v3574, %v3572
      %v3615 = vpack.c.b16 %v3575, %v3573
      %v3616 = vpack.c.b16 %v3578, %v3576
      %v3617 = vpack.c.b16 %v3579, %v3577
      %v3618 = vpack.c.b16 %v3582, %v3580
      %v3619 = vpack.c.b16 %v3583, %v3581
      %v3620 = vpack.c.b16 %v3586, %v3584
      %v3621 = vpack.c.b16 %v3587, %v3585
      %v3622 = vpack.c.b16 %v3590, %v3588
      %v3623 = vpack.c.b16 %v3591, %v3589
      %v3624 = vpack.c.b16 %v3594, %v3592
      %v3625 = vpack.c.b16 %v3595, %v3593
      %v3626 = vpack.c.b16 %v3598, %v3596
      %v3627 = vpack.c.b16 %v3599, %v3597
      %v3657 = vsel %vm3038, %v3514, 0
      %3659 = vmatprep.subr.bf16.mxu0 %v3601
      %3660 = vmatpush1.bf16.msra.mxu0 %v3600
      %3661 = vmatprep.subr.bf16.mxu0 %v3603
      %3662 = vmatpush1.bf16.msra.mxu0 %v3602
      %3663 = vmatprep.subr.bf16.mxu0 %v3605
      %3664 = vmatpush1.bf16.msra.mxu0 %v3604
      %3665 = vmatprep.subr.bf16.mxu0 %v3607
      %3666 = vmatpush1.bf16.msra.mxu0 %v3606
      %3667 = vmatprep.subr.bf16.mxu0 %v3609
      %3668 = vmatpush1.bf16.msra.mxu0 %v3608
      %3669 = vmatprep.subr.bf16.mxu0 %v3611
      %3670 = vmatpush1.bf16.msra.mxu0 %v3610
      %3671 = vmatprep.subr.bf16.mxu0 %v3613
      %3672 = vmatpush1.bf16.msra.mxu0 %v3612
      %3673 = vmatprep.subr.bf16.mxu0 %v3615
      %3674 = vmatpush1.bf16.msra.mxu0 %v3614
      %3675 = vmatprep.subr.bf16.mxu0 %v3617
      %3676 = vmatpush1.bf16.msra.mxu0 %v3616
      %3677 = vmatprep.subr.bf16.mxu0 %v3619
      %3678 = vmatpush1.bf16.msra.mxu0 %v3618
      %3679 = vmatprep.subr.bf16.mxu0 %v3621
      %3680 = vmatpush1.bf16.msra.mxu0 %v3620
      %3681 = vmatprep.subr.bf16.mxu0 %v3623
      %3682 = vmatpush1.bf16.msra.mxu0 %v3622
      %3683 = vmatprep.subr.bf16.mxu0 %v3625
      %3684 = vmatpush1.bf16.msra.mxu0 %v3624
      %3685 = vmatprep.subr.bf16.mxu0 %v3627
      %3686 = vmatpush1.bf16.msra.mxu0 %v3626
      %3687 = vmatprep.subr.bf16.mxu0 0
      %3688 = vmatpush1.bf16.msra.mxu0 0
      %3689 = vmatprep.subr.bf16.mxu0 0
      %3690 = vmatpush1.bf16.msra.mxu0 0
      %3691 = vmatprep.mubr.bf16.mxu0 %v3657
      %3692 = vmatmul.mubr.bf16.gmra.mrb[0].mxu0 %v3513
      %v3693 = vpop.f32.mrb[0].mxu0
      %v3694 = vadd.f32 0.0, %v3693
      %v3695 = vpop.f32.mrb[0].mxu0
      %v3696 = vadd.f32 0.0, %v3695
      %v3697 = vpop.f32.mrb[0].mxu0
      %v3698 = vpop.f32.mrb[0].mxu0
      %3699 = vdwg.mxu0
      %v3700 = vadd.f32 %v3480, %v3694
      %v3701 = vadd.f32 %v3481, %v3696
      %v3702 = vld [vmem:[%s9] sm:$0x3]
      %v3704 = vlaneseq
      %v3705 = vshrl.u32 %v3704, 7
      %v3706 = vsub.s32 0, %v3705
      %v3707 = vrot.slane %v3702, %v3706
      %v3708 = vlaneseq
      %v3709 = vshrl.u32 %v3708, 7
      %v3710 = vsub.s32 1, %v3709
      %v3711 = vrot.slane %v3702, %v3710
      %v3714 = vadd.f32 %v3700, %v3707
      %v3715 = vadd.f32 %v3701, %v3711
      %v3716 = vmax.f32 %v3714, 0.0
      %v3717 = vmax.f32 %v3715, 0.0
      %v3718 = vpack.c.bf16 %v3716, %v3716
      %v3719 = vpack.c.bf16 %v3717, %v3717
      %v3720 = vld [vmem:[%s10] sm:$0xf]
      %v3721 = vld [vmem:[%s10 + $0x4] sm:$0xf]
      %v3722 = vld [vmem:[%s10 + $0x8] sm:$0xf]
      %v3723 = vld [vmem:[%s10 + $0xc] sm:$0xf]
      %v3728 = vunpack.c.l.b16 %v3720
      %v3729 = vunpack.c.l.b16 %v3721
      %v3730 = vunpack.c.l.b16 %v3722
      %v3731 = vunpack.c.l.b16 %v3723
      %v3732 = vpack.c.b16 %v3729, %v3728
      %v3733 = vpack.c.b16 %v3731, %v3730
      %vm3734 = vcmask 64512
      %v3736 = vsel %vm3734, %v3732, 0
      %v3739 = vsel %vm3734, %v3733, 0
      %v3742 = vsel %vm1993, %v3718, 0
      %v3745 = vsel %vm1993, %v3719, 0
      %3747 = vmatprep.subr.bf16.mxu0 %v3745
      %3748 = vmatpush1.bf16.msra.mxu0 %v3742
      %3749 = vmatprep.subr.bf16.mxu0 0
      %3750 = vmatpush1.bf16.msra.mxu0 0
      %3751 = vmatprep.subr.bf16.mxu0 0
      %3752 = vmatpush1.bf16.msra.mxu0 0
      %3753 = vmatprep.subr.bf16.mxu0 0
      %3754 = vmatpush1.bf16.msra.mxu0 0
      %3755 = vmatprep.subr.bf16.mxu0 0
      %3756 = vmatpush1.bf16.msra.mxu0 0
      %3757 = vmatprep.subr.bf16.mxu0 0
      %3758 = vmatpush1.bf16.msra.mxu0 0
      %3759 = vmatprep.subr.bf16.mxu0 0
      %3760 = vmatpush1.bf16.msra.mxu0 0
      %3761 = vmatprep.subr.bf16.mxu0 0
      %3762 = vmatpush1.bf16.msra.mxu0 0
      %3763 = vmatprep.subr.bf16.mxu0 0
      %3764 = vmatpush1.bf16.msra.mxu0 0
      %3765 = vmatprep.subr.bf16.mxu0 0
      %3766 = vmatpush1.bf16.msra.mxu0 0
      %3767 = vmatprep.subr.bf16.mxu0 0
      %3768 = vmatpush1.bf16.msra.mxu0 0
      %3769 = vmatprep.subr.bf16.mxu0 0
      %3770 = vmatpush1.bf16.msra.mxu0 0
      %3771 = vmatprep.subr.bf16.mxu0 0
      %3772 = vmatpush1.bf16.msra.mxu0 0
      %3773 = vmatprep.subr.bf16.mxu0 0
      %3774 = vmatpush1.bf16.msra.mxu0 0
      %3775 = vmatprep.subr.bf16.mxu0 0
      %3776 = vmatpush1.bf16.msra.mxu0 0
      %3777 = vmatprep.subr.bf16.mxu0 0
      %3778 = vmatpush1.bf16.msra.mxu0 0
      %3779 = vmatprep.mubr.bf16.mxu0 0
      %3780 = vmatmul.mubr.bf16.gmra.mrb[0].mxu0 %v3736
      %v3781 = vpop.f32.mrb[0].mxu0
      %v3782 = vadd.f32 0.0, %v3781
      %v3783 = vpop.f32.mrb[0].mxu0
      %v3784 = vadd.f32 0.0, %v3783
      %v3785 = vpop.f32.mrb[0].mxu0
      %v3786 = vadd.f32 0.0, %v3785
      %v3787 = vpop.f32.mrb[0].mxu0
      %v3788 = vadd.f32 0.0, %v3787
      %3789 = vmatprep.mubr.bf16.mxu0 0
      %3790 = vmatmul.mubr.bf16.gmra.mrb[0].mxu0 %v3739
      %v3791 = vpop.f32.mrb[0].mxu0
      %v3792 = vadd.f32 0.0, %v3791
      %v3793 = vpop.f32.mrb[0].mxu0
      %v3794 = vadd.f32 0.0, %v3793
      %v3795 = vpop.f32.mrb[0].mxu0
      %v3796 = vadd.f32 0.0, %v3795
      %v3797 = vpop.f32.mrb[0].mxu0
      %v3798 = vadd.f32 0.0, %v3797
      %3799 = vdwg.mxu0
      %v3800 = vpack.c.bf16 %v3786, %v3782
      %v3801 = vpack.c.bf16 %v3788, %v3784
      %v3802 = vpack.c.bf16 %v3796, %v3792
      %v3803 = vpack.c.bf16 %v3798, %v3794
      %v3804 = vld [vmem:[%s11] sm:$0xf]
      %v3805 = vld [vmem:[%s11 + $0x4] sm:$0xf]
      %v3806 = vld [vmem:[%s11 + $0x8] sm:$0xf]
      %v3807 = vld [vmem:[%s11 + $0xc] sm:$0xf]
      %v3808 = vld [vmem:[%s11 + $0x10] sm:$0xf]
      %v3809 = vld [vmem:[%s11 + $0x14] sm:$0xf]
      %v3810 = vld [vmem:[%s11 + $0x18] sm:$0xf]
      %v3811 = vld [vmem:[%s11 + $0x1c] sm:$0xf]
      %v3812 = vld [vmem:[%s11 + $0x20] sm:$0xf]
      %v3813 = vld [vmem:[%s11 + $0x24] sm:$0xf]
      %v3814 = vld [vmem:[%s11 + $0x28] sm:$0xf]
      %v3815 = vld [vmem:[%s11 + $0x2c] sm:$0xf]
      %v3816 = vld [vmem:[%s11 + $0x30] sm:$0xf]
      %v3817 = vld [vmem:[%s11 + $0x34] sm:$0xf]
      %v3818 = vld [vmem:[%s11 + $0x38] sm:$0xf]
      %v3819 = vld [vmem:[%s11 + $0x3c] sm:$0xf]
      %v3820 = vld [vmem:[%s11 + $0x40] sm:$0xf]
      %v3821 = vld [vmem:[%s11 + $0x44] sm:$0xf]
      %v3822 = vld [vmem:[%s11 + $0x48] sm:$0xf]
      %v3823 = vld [vmem:[%s11 + $0x4c] sm:$0xf]
      %v3824 = vld [vmem:[%s11 + $0x50] sm:$0xf]
      %v3825 = vld [vmem:[%s11 + $0x54] sm:$0xf]
      %v3826 = vld [vmem:[%s11 + $0x58] sm:$0xf]
      %v3827 = vld [vmem:[%s11 + $0x5c] sm:$0xf]
      %s3828 = scalar_lea.vmem %s11, 96
      %v3829 = vld [vmem:[%s3828] sm:$0xf]
      %v3830 = vld [vmem:[%s3828 + $0x4] sm:$0xf]
      %v3831 = vld [vmem:[%s3828 + $0x8] sm:$0xf]
      %v3832 = vld [vmem:[%s3828 + $0xc] sm:$0xf]
      %v3833 = vld [vmem:[%s3828 + $0x10] sm:$0xf]
      %v3834 = vld [vmem:[%s3828 + $0x14] sm:$0xf]
      %v3835 = vld [vmem:[%s3828 + $0x18] sm:$0xf]
      %v3836 = vld [vmem:[%s3828 + $0x1c] sm:$0xf]
      %v3837 = vld [vmem:[%s3828 + $0x20] sm:$0xf]
      %v3838 = vld [vmem:[%s3828 + $0x24] sm:$0xf]
      %v3839 = vld [vmem:[%s3828 + $0x28] sm:$0xf]
      %v3840 = vld [vmem:[%s3828 + $0x2c] sm:$0xf]
      %v3841 = vld [vmem:[%s3828 + $0x30] sm:$0xf]
      %v3842 = vld [vmem:[%s3828 + $0x34] sm:$0xf]
      %v3843 = vld [vmem:[%s3828 + $0x38] sm:$0xf]
      %v3844 = vld [vmem:[%s3828 + $0x3c] sm:$0xf]
      %v3845 = vld [vmem:[%s3828 + $0x40] sm:$0xf]
      %v3846 = vld [vmem:[%s3828 + $0x44] sm:$0xf]
      %v3847 = vld [vmem:[%s3828 + $0x48] sm:$0xf]
      %v3848 = vld [vmem:[%s3828 + $0x4c] sm:$0xf]
      %v3849 = vld [vmem:[%s3828 + $0x50] sm:$0xf]
      %v3850 = vld [vmem:[%s3828 + $0x54] sm:$0xf]
      %v3851 = vld [vmem:[%s3828 + $0x58] sm:$0xf]
      %v3852 = vld [vmem:[%s3828 + $0x5c] sm:$0xf]
      %v3855 = vrot.slane %v3800, 4
      %v3856 = vrot.slane %v3801, 4
      %v3882 = vunpack.c.l.b16 %v3829
      %v3883 = vunpack.c.l.b16 %v3830
      %v3884 = vunpack.c.l.b16 %v3831
      %v3885 = vunpack.c.l.b16 %v3832
      %v3886 = vunpack.c.l.b16 %v3833
      %v3887 = vunpack.c.l.b16 %v3834
      %v3888 = vunpack.c.l.b16 %v3835
      %v3889 = vunpack.c.l.b16 %v3836
      %v3890 = vunpack.c.l.b16 %v3837
      %v3891 = vunpack.c.l.b16 %v3838
      %v3892 = vunpack.c.l.b16 %v3839
      %v3893 = vunpack.c.l.b16 %v3840
      %v3894 = vunpack.c.l.b16 %v3841
      %v3895 = vunpack.c.l.b16 %v3842
      %v3896 = vunpack.c.l.b16 %v3843
      %v3897 = vunpack.c.l.b16 %v3844
      %v3898 = vunpack.c.l.b16 %v3845
      %v3899 = vunpack.c.l.b16 %v3846
      %v3900 = vunpack.c.l.b16 %v3847
      %v3901 = vunpack.c.l.b16 %v3848
      %v3902 = vunpack.c.l.b16 %v3849
      %v3903 = vunpack.c.l.b16 %v3850
      %v3904 = vunpack.c.l.b16 %v3851
      %v3905 = vunpack.c.l.b16 %v3852
      %v3906 = vpack.c.b16 %v3883, %v3882
      %v3907 = vpack.c.b16 %v3885, %v3884
      %v3908 = vpack.c.b16 %v3887, %v3886
      %v3909 = vpack.c.b16 %v3889, %v3888
      %v3910 = vpack.c.b16 %v3891, %v3890
      %v3911 = vpack.c.b16 %v3893, %v3892
      %v3912 = vpack.c.b16 %v3895, %v3894
      %v3913 = vpack.c.b16 %v3897, %v3896
      %v3914 = vpack.c.b16 %v3899, %v3898
      %v3915 = vpack.c.b16 %v3901, %v3900
      %v3916 = vpack.c.b16 %v3903, %v3902
      %v3917 = vpack.c.b16 %v3905, %v3904
      %v3931 = vsel %vm632, %v3856, 0
      %3933 = vmatprep.subr.bf16.mxu0 0
      %3934 = vmatpush1.bf16.msra.mxu0 %v3906
      %3935 = vmatprep.subr.bf16.mxu0 0
      %3936 = vmatpush1.bf16.msra.mxu0 %v3907
      %3937 = vmatprep.subr.bf16.mxu0 0
      %3938 = vmatpush1.bf16.msra.mxu0 %v3908
      %3939 = vmatprep.subr.bf16.mxu0 0
      %3940 = vmatpush1.bf16.msra.mxu0 %v3909
      %3941 = vmatprep.subr.bf16.mxu0 0
      %3942 = vmatpush1.bf16.msra.mxu0 %v3910
      %3943 = vmatprep.subr.bf16.mxu0 0
      %3944 = vmatpush1.bf16.msra.mxu0 %v3911
      %3945 = vmatprep.subr.bf16.mxu0 0
      %3946 = vmatpush1.bf16.msra.mxu0 %v3912
      %3947 = vmatprep.subr.bf16.mxu0 0
      %3948 = vmatpush1.bf16.msra.mxu0 %v3913
      %3949 = vmatprep.subr.bf16.mxu0 0
      %3950 = vmatpush1.bf16.msra.mxu0 %v3914
      %3951 = vmatprep.subr.bf16.mxu0 0
      %3952 = vmatpush1.bf16.msra.mxu0 %v3915
      %3953 = vmatprep.subr.bf16.mxu0 0
      %3954 = vmatpush1.bf16.msra.mxu0 %v3916
      %3955 = vmatprep.subr.bf16.mxu0 0
      %3956 = vmatpush1.bf16.msra.mxu0 %v3917
      %3957 = vmatprep.subr.bf16.mxu0 0
      %3958 = vmatpush1.bf16.msra.mxu0 0
      %3959 = vmatprep.subr.bf16.mxu0 0
      %3960 = vmatpush1.bf16.msra.mxu0 0
      %3961 = vmatprep.subr.bf16.mxu0 0
      %3962 = vmatpush1.bf16.msra.mxu0 0
      %3963 = vmatprep.subr.bf16.mxu0 0
      %3964 = vmatpush1.bf16.msra.mxu0 0
      %3965 = vmatprep.mubr.bf16.mxu0 %v3931
      %3966 = vmatmul.mubr.bf16.gmra.mrb[0].mxu0 %v3855
      %v3967 = vpop.f32.mrb[0].mxu0
      %v3968 = vadd.f32 0.0, %v3967
      %v3969 = vpop.f32.mrb[0].mxu0
      %v3970 = vpop.f32.mrb[0].mxu0
      %v3971 = vpop.f32.mrb[0].mxu0
      %3972 = vdwg.mxu0
      %v3997 = vunpack.c.l.b16 %v3804
      %v3998 = vunpack.c.l.b16 %v3805
      %v3999 = vunpack.c.l.b16 %v3806
      %v4000 = vunpack.c.l.b16 %v3807
      %v4001 = vunpack.c.l.b16 %v3808
      %v4002 = vunpack.c.l.b16 %v3809
      %v4003 = vunpack.c.l.b16 %v3810
      %v4004 = vunpack.c.l.b16 %v3811
      %v4005 = vunpack.c.l.b16 %v3812
      %v4006 = vunpack.c.l.b16 %v3813
      %v4007 = vunpack.c.l.b16 %v3814
      %v4008 = vunpack.c.l.b16 %v3815
      %v4009 = vunpack.c.l.b16 %v3816
      %v4010 = vunpack.c.l.b16 %v3817
      %v4011 = vunpack.c.l.b16 %v3818
      %v4012 = vunpack.c.l.b16 %v3819
      %v4013 = vunpack.c.l.b16 %v3820
      %v4014 = vunpack.c.l.b16 %v3821
      %v4015 = vunpack.c.l.b16 %v3822
      %v4016 = vunpack.c.l.b16 %v3823
      %v4017 = vunpack.c.l.b16 %v3824
      %v4018 = vunpack.c.l.b16 %v3825
      %v4019 = vunpack.c.l.b16 %v3826
      %v4020 = vunpack.c.l.b16 %v3827
      %v4021 = vpack.c.b16 %v3998, %v3997
      %v4022 = vpack.c.b16 %v4000, %v3999
      %v4023 = vpack.c.b16 %v4002, %v4001
      %v4024 = vpack.c.b16 %v4004, %v4003
      %v4025 = vpack.c.b16 %v4006, %v4005
      %v4026 = vpack.c.b16 %v4008, %v4007
      %v4027 = vpack.c.b16 %v4010, %v4009
      %v4028 = vpack.c.b16 %v4012, %v4011
      %v4029 = vpack.c.b16 %v4014, %v4013
      %v4030 = vpack.c.b16 %v4016, %v4015
      %v4031 = vpack.c.b16 %v4018, %v4017
      %v4032 = vpack.c.b16 %v4020, %v4019
      %v4046 = vsel %vm632, %v3801, 0
      %4048 = vmatprep.subr.bf16.mxu0 0
      %4049 = vmatpush1.bf16.msra.mxu0 %v4021
      %4050 = vmatprep.subr.bf16.mxu0 0
      %4051 = vmatpush1.bf16.msra.mxu0 %v4022
      %4052 = vmatprep.subr.bf16.mxu0 0
      %4053 = vmatpush1.bf16.msra.mxu0 %v4023
      %4054 = vmatprep.subr.bf16.mxu0 0
      %4055 = vmatpush1.bf16.msra.mxu0 %v4024
      %4056 = vmatprep.subr.bf16.mxu0 0
      %4057 = vmatpush1.bf16.msra.mxu0 %v4025
      %4058 = vmatprep.subr.bf16.mxu0 0
      %4059 = vmatpush1.bf16.msra.mxu0 %v4026
      %4060 = vmatprep.subr.bf16.mxu0 0
      %4061 = vmatpush1.bf16.msra.mxu0 %v4027
      %4062 = vmatprep.subr.bf16.mxu0 0
      %4063 = vmatpush1.bf16.msra.mxu0 %v4028
      %4064 = vmatprep.subr.bf16.mxu0 0
      %4065 = vmatpush1.bf16.msra.mxu0 %v4029
      %4066 = vmatprep.subr.bf16.mxu0 0
      %4067 = vmatpush1.bf16.msra.mxu0 %v4030
      %4068 = vmatprep.subr.bf16.mxu0 0
      %4069 = vmatpush1.bf16.msra.mxu0 %v4031
      %4070 = vmatprep.subr.bf16.mxu0 0
      %4071 = vmatpush1.bf16.msra.mxu0 %v4032
      %4072 = vmatprep.subr.bf16.mxu0 0
      %4073 = vmatpush1.bf16.msra.mxu0 0
      %4074 = vmatprep.subr.bf16.mxu0 0
      %4075 = vmatpush1.bf16.msra.mxu0 0
      %4076 = vmatprep.subr.bf16.mxu0 0
      %4077 = vmatpush1.bf16.msra.mxu0 0
      %4078 = vmatprep.subr.bf16.mxu0 0
      %4079 = vmatpush1.bf16.msra.mxu0 0
      %4080 = vmatprep.mubr.bf16.mxu0 %v4046
      %4081 = vmatmul.mubr.bf16.gmra.mrb[0].mxu0 %v3800
      %v4082 = vpop.f32.mrb[0].mxu0
      %v4083 = vadd.f32 %v3968, %v4082
      %v4084 = vpop.f32.mrb[0].mxu0
      %v4085 = vpop.f32.mrb[0].mxu0
      %v4086 = vpop.f32.mrb[0].mxu0
      %4087 = vdwg.mxu0
      %s4088 = scalar_lea.vmem %s11, 192
      %v4089 = vld [vmem:[%s4088] sm:$0xf]
      %v4090 = vld [vmem:[%s4088 + $0x4] sm:$0xf]
      %v4091 = vld [vmem:[%s4088 + $0x8] sm:$0xf]
      %v4092 = vld [vmem:[%s4088 + $0xc] sm:$0xf]
      %v4093 = vld [vmem:[%s4088 + $0x10] sm:$0xf]
      %v4094 = vld [vmem:[%s4088 + $0x14] sm:$0xf]
      %v4095 = vld [vmem:[%s4088 + $0x18] sm:$0xf]
      %v4096 = vld [vmem:[%s4088 + $0x1c] sm:$0xf]
      %v4097 = vld [vmem:[%s4088 + $0x20] sm:$0xf]
      %v4098 = vld [vmem:[%s4088 + $0x24] sm:$0xf]
      %v4099 = vld [vmem:[%s4088 + $0x28] sm:$0xf]
      %v4100 = vld [vmem:[%s4088 + $0x2c] sm:$0xf]
      %v4101 = vld [vmem:[%s4088 + $0x30] sm:$0xf]
      %v4102 = vld [vmem:[%s4088 + $0x34] sm:$0xf]
      %v4103 = vld [vmem:[%s4088 + $0x38] sm:$0xf]
      %v4104 = vld [vmem:[%s4088 + $0x3c] sm:$0xf]
      %v4105 = vld [vmem:[%s4088 + $0x40] sm:$0xf]
      %v4106 = vld [vmem:[%s4088 + $0x44] sm:$0xf]
      %v4107 = vld [vmem:[%s4088 + $0x48] sm:$0xf]
      %v4108 = vld [vmem:[%s4088 + $0x4c] sm:$0xf]
      %v4109 = vld [vmem:[%s4088 + $0x50] sm:$0xf]
      %v4110 = vld [vmem:[%s4088 + $0x54] sm:$0xf]
      %v4111 = vld [vmem:[%s4088 + $0x58] sm:$0xf]
      %v4112 = vld [vmem:[%s4088 + $0x5c] sm:$0xf]
      %v4137 = vunpack.c.l.b16 %v4089
      %v4138 = vunpack.c.l.b16 %v4090
      %v4139 = vunpack.c.l.b16 %v4091
      %v4140 = vunpack.c.l.b16 %v4092
      %v4141 = vunpack.c.l.b16 %v4093
      %v4142 = vunpack.c.l.b16 %v4094
      %v4143 = vunpack.c.l.b16 %v4095
      %v4144 = vunpack.c.l.b16 %v4096
      %v4145 = vunpack.c.l.b16 %v4097
      %v4146 = vunpack.c.l.b16 %v4098
      %v4147 = vunpack.c.l.b16 %v4099
      %v4148 = vunpack.c.l.b16 %v4100
      %v4149 = vunpack.c.l.b16 %v4101
      %v4150 = vunpack.c.l.b16 %v4102
      %v4151 = vunpack.c.l.b16 %v4103
      %v4152 = vunpack.c.l.b16 %v4104
      %v4153 = vunpack.c.l.b16 %v4105
      %v4154 = vunpack.c.l.b16 %v4106
      %v4155 = vunpack.c.l.b16 %v4107
      %v4156 = vunpack.c.l.b16 %v4108
      %v4157 = vunpack.c.l.b16 %v4109
      %v4158 = vunpack.c.l.b16 %v4110
      %v4159 = vunpack.c.l.b16 %v4111
      %v4160 = vunpack.c.l.b16 %v4112
      %v4161 = vpack.c.b16 %v4138, %v4137
      %v4162 = vpack.c.b16 %v4140, %v4139
      %v4163 = vpack.c.b16 %v4142, %v4141
      %v4164 = vpack.c.b16 %v4144, %v4143
      %v4165 = vpack.c.b16 %v4146, %v4145
      %v4166 = vpack.c.b16 %v4148, %v4147
      %v4167 = vpack.c.b16 %v4150, %v4149
      %v4168 = vpack.c.b16 %v4152, %v4151
      %v4169 = vpack.c.b16 %v4154, %v4153
      %v4170 = vpack.c.b16 %v4156, %v4155
      %v4171 = vpack.c.b16 %v4158, %v4157
      %v4172 = vpack.c.b16 %v4160, %v4159
      %v4186 = vsel %vm632, %v3803, 0
      %4188 = vmatprep.subr.bf16.mxu0 0
      %4189 = vmatpush1.bf16.msra.mxu0 %v4161
      %4190 = vmatprep.subr.bf16.mxu0 0
      %4191 = vmatpush1.bf16.msra.mxu0 %v4162
      %4192 = vmatprep.subr.bf16.mxu0 0
      %4193 = vmatpush1.bf16.msra.mxu0 %v4163
      %4194 = vmatprep.subr.bf16.mxu0 0
      %4195 = vmatpush1.bf16.msra.mxu0 %v4164
      %4196 = vmatprep.subr.bf16.mxu0 0
      %4197 = vmatpush1.bf16.msra.mxu0 %v4165
      %4198 = vmatprep.subr.bf16.mxu0 0
      %4199 = vmatpush1.bf16.msra.mxu0 %v4166
      %4200 = vmatprep.subr.bf16.mxu0 0
      %4201 = vmatpush1.bf16.msra.mxu0 %v4167
      %4202 = vmatprep.subr.bf16.mxu0 0
      %4203 = vmatpush1.bf16.msra.mxu0 %v4168
      %4204 = vmatprep.subr.bf16.mxu0 0
      %4205 = vmatpush1.bf16.msra.mxu0 %v4169
      %4206 = vmatprep.subr.bf16.mxu0 0
      %4207 = vmatpush1.bf16.msra.mxu0 %v4170
      %4208 = vmatprep.subr.bf16.mxu0 0
      %4209 = vmatpush1.bf16.msra.mxu0 %v4171
      %4210 = vmatprep.subr.bf16.mxu0 0
      %4211 = vmatpush1.bf16.msra.mxu0 %v4172
      %4212 = vmatprep.subr.bf16.mxu0 0
      %4213 = vmatpush1.bf16.msra.mxu0 0
      %4214 = vmatprep.subr.bf16.mxu0 0
      %4215 = vmatpush1.bf16.msra.mxu0 0
      %4216 = vmatprep.subr.bf16.mxu0 0
      %4217 = vmatpush1.bf16.msra.mxu0 0
      %4218 = vmatprep.subr.bf16.mxu0 0
      %4219 = vmatpush1.bf16.msra.mxu0 0
      %4220 = vmatprep.mubr.bf16.mxu0 %v4186
      %4221 = vmatmul.mubr.bf16.gmra.mrb[0].mxu0 %v3802
      %v4222 = vpop.f32.mrb[0].mxu0
      %v4223 = vadd.f32 0.0, %v4222
      %v4224 = vpop.f32.mrb[0].mxu0
      %v4225 = vpop.f32.mrb[0].mxu0
      %v4226 = vpop.f32.mrb[0].mxu0
      %4227 = vdwg.mxu0
      %v4228 = vadd.f32 %v4083, %v4223
      %s4229 = scalar_lea.vmem %s11, 288
      %v4230 = vld [vmem:[%s4229] sm:$0xf]
      %v4231 = vld [vmem:[%s4229 + $0x4] sm:$0xf]
      %v4232 = vld [vmem:[%s4229 + $0x8] sm:$0xf]
      %v4233 = vld [vmem:[%s4229 + $0xc] sm:$0xf]
      %v4234 = vld [vmem:[%s4229 + $0x10] sm:$0xf]
      %v4235 = vld [vmem:[%s4229 + $0x14] sm:$0xf]
      %v4236 = vld [vmem:[%s4229 + $0x18] sm:$0xf]
      %v4237 = vld [vmem:[%s4229 + $0x1c] sm:$0xf]
      %v4238 = vld [vmem:[%s4229 + $0x20] sm:$0xf]
      %v4239 = vld [vmem:[%s4229 + $0x24] sm:$0xf]
      %v4240 = vld [vmem:[%s4229 + $0x28] sm:$0xf]
      %v4241 = vld [vmem:[%s4229 + $0x2c] sm:$0xf]
      %v4242 = vld [vmem:[%s4229 + $0x30] sm:$0xf]
      %v4243 = vld [vmem:[%s4229 + $0x34] sm:$0xf]
      %v4244 = vld [vmem:[%s4229 + $0x38] sm:$0xf]
      %v4245 = vld [vmem:[%s4229 + $0x3c] sm:$0xf]
      %v4246 = vld [vmem:[%s4229 + $0x40] sm:$0xf]
      %v4247 = vld [vmem:[%s4229 + $0x44] sm:$0xf]
      %v4248 = vld [vmem:[%s4229 + $0x48] sm:$0xf]
      %v4249 = vld [vmem:[%s4229 + $0x4c] sm:$0xf]
      %v4250 = vld [vmem:[%s4229 + $0x50] sm:$0xf]
      %v4251 = vld [vmem:[%s4229 + $0x54] sm:$0xf]
      %v4252 = vld [vmem:[%s4229 + $0x58] sm:$0xf]
      %v4253 = vld [vmem:[%s4229 + $0x5c] sm:$0xf]
      %v4256 = vrot.slane %v3802, 4
      %v4257 = vrot.slane %v3803, 4
      %v4283 = vunpack.c.l.b16 %v4230
      %v4284 = vunpack.c.l.b16 %v4231
      %v4285 = vunpack.c.l.b16 %v4232
      %v4286 = vunpack.c.l.b16 %v4233
      %v4287 = vunpack.c.l.b16 %v4234
      %v4288 = vunpack.c.l.b16 %v4235
      %v4289 = vunpack.c.l.b16 %v4236
      %v4290 = vunpack.c.l.b16 %v4237
      %v4291 = vunpack.c.l.b16 %v4238
      %v4292 = vunpack.c.l.b16 %v4239
      %v4293 = vunpack.c.l.b16 %v4240
      %v4294 = vunpack.c.l.b16 %v4241
      %v4295 = vunpack.c.l.b16 %v4242
      %v4296 = vunpack.c.l.b16 %v4243
      %v4297 = vunpack.c.l.b16 %v4244
      %v4298 = vunpack.c.l.b16 %v4245
      %v4299 = vunpack.c.l.b16 %v4246
      %v4300 = vunpack.c.l.b16 %v4247
      %v4301 = vunpack.c.l.b16 %v4248
      %v4302 = vunpack.c.l.b16 %v4249
      %v4303 = vunpack.c.l.b16 %v4250
      %v4304 = vunpack.c.l.b16 %v4251
      %v4305 = vunpack.c.l.b16 %v4252
      %v4306 = vunpack.c.l.b16 %v4253
      %v4307 = vpack.c.b16 %v4284, %v4283
      %v4308 = vpack.c.b16 %v4286, %v4285
      %v4309 = vpack.c.b16 %v4288, %v4287
      %v4310 = vpack.c.b16 %v4290, %v4289
      %v4311 = vpack.c.b16 %v4292, %v4291
      %v4312 = vpack.c.b16 %v4294, %v4293
      %v4313 = vpack.c.b16 %v4296, %v4295
      %v4314 = vpack.c.b16 %v4298, %v4297
      %v4315 = vpack.c.b16 %v4300, %v4299
      %v4316 = vpack.c.b16 %v4302, %v4301
      %v4317 = vpack.c.b16 %v4304, %v4303
      %v4318 = vpack.c.b16 %v4306, %v4305
      %v4332 = vsel %vm632, %v4257, 0
      %4334 = vmatprep.subr.bf16.mxu0 0
      %4335 = vmatpush1.bf16.msra.mxu0 %v4307
      %4336 = vmatprep.subr.bf16.mxu0 0
      %4337 = vmatpush1.bf16.msra.mxu0 %v4308
      %4338 = vmatprep.subr.bf16.mxu0 0
      %4339 = vmatpush1.bf16.msra.mxu0 %v4309
      %4340 = vmatprep.subr.bf16.mxu0 0
      %4341 = vmatpush1.bf16.msra.mxu0 %v4310
      %4342 = vmatprep.subr.bf16.mxu0 0
      %4343 = vmatpush1.bf16.msra.mxu0 %v4311
      %4344 = vmatprep.subr.bf16.mxu0 0
      %4345 = vmatpush1.bf16.msra.mxu0 %v4312
      %4346 = vmatprep.subr.bf16.mxu0 0
      %4347 = vmatpush1.bf16.msra.mxu0 %v4313
      %4348 = vmatprep.subr.bf16.mxu0 0
      %4349 = vmatpush1.bf16.msra.mxu0 %v4314
      %4350 = vmatprep.subr.bf16.mxu0 0
      %4351 = vmatpush1.bf16.msra.mxu0 %v4315
      %4352 = vmatprep.subr.bf16.mxu0 0
      %4353 = vmatpush1.bf16.msra.mxu0 %v4316
      %4354 = vmatprep.subr.bf16.mxu0 0
      %4355 = vmatpush1.bf16.msra.mxu0 %v4317
      %4356 = vmatprep.subr.bf16.mxu0 0
      %4357 = vmatpush1.bf16.msra.mxu0 %v4318
      %4358 = vmatprep.subr.bf16.mxu0 0
      %4359 = vmatpush1.bf16.msra.mxu0 0
      %4360 = vmatprep.subr.bf16.mxu0 0
      %4361 = vmatpush1.bf16.msra.mxu0 0
      %4362 = vmatprep.subr.bf16.mxu0 0
      %4363 = vmatpush1.bf16.msra.mxu0 0
      %4364 = vmatprep.subr.bf16.mxu0 0
      %4365 = vmatpush1.bf16.msra.mxu0 0
      %4366 = vmatprep.mubr.bf16.mxu0 %v4332
      %4367 = vmatmul.mubr.bf16.gmra.mrb[0].mxu0 %v4256
      %v4368 = vpop.f32.mrb[0].mxu0
      %v4369 = vadd.f32 0.0, %v4368
      %v4370 = vpop.f32.mrb[0].mxu0
      %v4371 = vpop.f32.mrb[0].mxu0
      %v4372 = vpop.f32.mrb[0].mxu0
      %4373 = vdwg.mxu0
      %v4374 = vadd.f32 %v4228, %v4369
      %v4375 = vld [vmem:[%s12] sm:$0x1]
      %v4377 = vlaneseq
      %v4378 = vshrl.u32 %v4377, 7
      %v4379 = vsub.s32 0, %v4378
      %v4380 = vrot.slane %v4375, %v4379
      %v4382 = vadd.f32 %v4374, %v4380
      %v4383 = vmax.f32 %v4382, 0.0
      %v4384 = vpack.c.bf16 %v4383, %v4383
      %v4385 = vld [vmem:[%s13] sm:$0xf]
      %v4386 = vld [vmem:[%s13 + $0x4] sm:$0xf]
      %v4387 = vld [vmem:[%s13 + $0x8] sm:$0xf]
      %v4388 = vld [vmem:[%s13 + $0xc] sm:$0xf]
      %v4389 = vld [vmem:[%s13 + $0x10] sm:$0xf]
      %v4390 = vld [vmem:[%s13 + $0x14] sm:$0xf]
      %v4391 = vld [vmem:[%s13 + $0x18] sm:$0xf]
      %v4392 = vld [vmem:[%s13 + $0x1c] sm:$0xf]
      %v4393 = vld [vmem:[%s13 + $0x20] sm:$0xf]
      %v4394 = vld [vmem:[%s13 + $0x24] sm:$0xf]
      %v4395 = vld [vmem:[%s13 + $0x28] sm:$0xf]
      %v4396 = vld [vmem:[%s13 + $0x2c] sm:$0xf]
      %v4397 = vld [vmem:[%s13 + $0x30] sm:$0xf]
      %v4398 = vld [vmem:[%s13 + $0x34] sm:$0xf]
      %v4399 = vld [vmem:[%s13 + $0x38] sm:$0xf]
      %v4400 = vld [vmem:[%s13 + $0x3c] sm:$0xf]
      %s4401 = scalar_lea.vmem %s13, 64
      %v4402 = vld [vmem:[%s4401] sm:$0xf]
      %v4403 = vld [vmem:[%s4401 + $0x4] sm:$0xf]
      %v4404 = vld [vmem:[%s4401 + $0x8] sm:$0xf]
      %v4405 = vld [vmem:[%s4401 + $0xc] sm:$0xf]
      %v4406 = vld [vmem:[%s4401 + $0x10] sm:$0xf]
      %v4407 = vld [vmem:[%s4401 + $0x14] sm:$0xf]
      %v4408 = vld [vmem:[%s4401 + $0x18] sm:$0xf]
      %v4409 = vld [vmem:[%s4401 + $0x1c] sm:$0xf]
      %v4410 = vld [vmem:[%s4401 + $0x20] sm:$0xf]
      %v4411 = vld [vmem:[%s4401 + $0x24] sm:$0xf]
      %v4412 = vld [vmem:[%s4401 + $0x28] sm:$0xf]
      %v4413 = vld [vmem:[%s4401 + $0x2c] sm:$0xf]
      %v4414 = vld [vmem:[%s4401 + $0x30] sm:$0xf]
      %v4415 = vld [vmem:[%s4401 + $0x34] sm:$0xf]
      %v4416 = vld [vmem:[%s4401 + $0x38] sm:$0xf]
      %v4417 = vld [vmem:[%s4401 + $0x3c] sm:$0xf]
      %v4419 = vshrl.u32 %v4384, 16
      %v4438 = vunpack.c.l.b16 %v4402
      %v4439 = vunpack.c.l.b16 %v4403
      %v4440 = vunpack.c.l.b16 %v4404
      %v4441 = vunpack.c.l.b16 %v4405
      %v4442 = vunpack.c.l.b16 %v4406
      %v4443 = vunpack.c.l.b16 %v4407
      %v4444 = vunpack.c.l.b16 %v4408
      %v4445 = vunpack.c.l.b16 %v4409
      %v4446 = vunpack.c.l.b16 %v4410
      %v4447 = vunpack.c.l.b16 %v4411
      %v4448 = vunpack.c.l.b16 %v4412
      %v4449 = vunpack.c.l.b16 %v4413
      %v4450 = vunpack.c.l.b16 %v4414
      %v4451 = vunpack.c.l.b16 %v4415
      %v4452 = vunpack.c.l.b16 %v4416
      %v4453 = vunpack.c.l.b16 %v4417
      %v4454 = vpack.c.b16 %v4439, %v4438
      %v4455 = vpack.c.b16 %v4441, %v4440
      %v4456 = vpack.c.b16 %v4443, %v4442
      %v4457 = vpack.c.b16 %v4445, %v4444
      %v4458 = vpack.c.b16 %v4447, %v4446
      %v4459 = vpack.c.b16 %v4449, %v4448
      %v4460 = vpack.c.b16 %v4451, %v4450
      %v4461 = vpack.c.b16 %v4453, %v4452
      %4470 = vmatprep.subr.bf16.mxu0 0
      %4471 = vmatpush1.bf16.msra.mxu0 %v4454
      %4472 = vmatprep.subr.bf16.mxu0 0
      %4473 = vmatpush1.bf16.msra.mxu0 %v4455
      %4474 = vmatprep.subr.bf16.mxu0 0
      %4475 = vmatpush1.bf16.msra.mxu0 %v4456
      %4476 = vmatprep.subr.bf16.mxu0 0
      %4477 = vmatpush1.bf16.msra.mxu0 %v4457
      %4478 = vmatprep.subr.bf16.mxu0 0
      %4479 = vmatpush1.bf16.msra.mxu0 %v4458
      %4480 = vmatprep.subr.bf16.mxu0 0
      %4481 = vmatpush1.bf16.msra.mxu0 %v4459
      %4482 = vmatprep.subr.bf16.mxu0 0
      %4483 = vmatpush1.bf16.msra.mxu0 %v4460
      %4484 = vmatprep.subr.bf16.mxu0 0
      %4485 = vmatpush1.bf16.msra.mxu0 %v4461
      %4486 = vmatprep.subr.bf16.mxu0 0
      %4487 = vmatpush1.bf16.msra.mxu0 0
      %4488 = vmatprep.subr.bf16.mxu0 0
      %4489 = vmatpush1.bf16.msra.mxu0 0
      %4490 = vmatprep.subr.bf16.mxu0 0
      %4491 = vmatpush1.bf16.msra.mxu0 0
      %4492 = vmatprep.subr.bf16.mxu0 0
      %4493 = vmatpush1.bf16.msra.mxu0 0
      %4494 = vmatprep.subr.bf16.mxu0 0
      %4495 = vmatpush1.bf16.msra.mxu0 0
      %4496 = vmatprep.subr.bf16.mxu0 0
      %4497 = vmatpush1.bf16.msra.mxu0 0
      %4498 = vmatprep.subr.bf16.mxu0 0
      %4499 = vmatpush1.bf16.msra.mxu0 0
      %4500 = vmatprep.subr.bf16.mxu0 0
      %4501 = vmatpush1.bf16.msra.mxu0 0
      %4502 = vmatprep.mubr.bf16.mxu0 0
      %4503 = vmatmul.mubr.bf16.gmra.mrb[0].mxu0 %v4419
      %v4504 = vpop.f32.mrb[0].mxu0
      %v4505 = vadd.f32 0.0, %v4504
      %v4506 = vpop.f32.mrb[0].mxu0
      %v4507 = vpop.f32.mrb[0].mxu0
      %v4508 = vpop.f32.mrb[0].mxu0
      %4509 = vdwg.mxu0
      %v4526 = vunpack.c.l.b16 %v4385
      %v4527 = vunpack.c.l.b16 %v4386
      %v4528 = vunpack.c.l.b16 %v4387
      %v4529 = vunpack.c.l.b16 %v4388
      %v4530 = vunpack.c.l.b16 %v4389
      %v4531 = vunpack.c.l.b16 %v4390
      %v4532 = vunpack.c.l.b16 %v4391
      %v4533 = vunpack.c.l.b16 %v4392
      %v4534 = vunpack.c.l.b16 %v4393
      %v4535 = vunpack.c.l.b16 %v4394
      %v4536 = vunpack.c.l.b16 %v4395
      %v4537 = vunpack.c.l.b16 %v4396
      %v4538 = vunpack.c.l.b16 %v4397
      %v4539 = vunpack.c.l.b16 %v4398
      %v4540 = vunpack.c.l.b16 %v4399
      %v4541 = vunpack.c.l.b16 %v4400
      %v4542 = vpack.c.b16 %v4527, %v4526
      %v4543 = vpack.c.b16 %v4529, %v4528
      %v4544 = vpack.c.b16 %v4531, %v4530
      %v4545 = vpack.c.b16 %v4533, %v4532
      %v4546 = vpack.c.b16 %v4535, %v4534
      %v4547 = vpack.c.b16 %v4537, %v4536
      %v4548 = vpack.c.b16 %v4539, %v4538
      %v4549 = vpack.c.b16 %v4541, %v4540
      %4558 = vmatprep.subr.bf16.mxu0 0
      %4559 = vmatpush1.bf16.msra.mxu0 %v4542
      %4560 = vmatprep.subr.bf16.mxu0 0
      %4561 = vmatpush1.bf16.msra.mxu0 %v4543
      %4562 = vmatprep.subr.bf16.mxu0 0
      %4563 = vmatpush1.bf16.msra.mxu0 %v4544
      %4564 = vmatprep.subr.bf16.mxu0 0
      %4565 = vmatpush1.bf16.msra.mxu0 %v4545
      %4566 = vmatprep.subr.bf16.mxu0 0
      %4567 = vmatpush1.bf16.msra.mxu0 %v4546
      %4568 = vmatprep.subr.bf16.mxu0 0
      %4569 = vmatpush1.bf16.msra.mxu0 %v4547
      %4570 = vmatprep.subr.bf16.mxu0 0
      %4571 = vmatpush1.bf16.msra.mxu0 %v4548
      %4572 = vmatprep.subr.bf16.mxu0 0
      %4573 = vmatpush1.bf16.msra.mxu0 %v4549
      %4574 = vmatprep.subr.bf16.mxu0 0
      %4575 = vmatpush1.bf16.msra.mxu0 0
      %4576 = vmatprep.subr.bf16.mxu0 0
      %4577 = vmatpush1.bf16.msra.mxu0 0
      %4578 = vmatprep.subr.bf16.mxu0 0
      %4579 = vmatpush1.bf16.msra.mxu0 0
      %4580 = vmatprep.subr.bf16.mxu0 0
      %4581 = vmatpush1.bf16.msra.mxu0 0
      %4582 = vmatprep.subr.bf16.mxu0 0
      %4583 = vmatpush1.bf16.msra.mxu0 0
      %4584 = vmatprep.subr.bf16.mxu0 0
      %4585 = vmatpush1.bf16.msra.mxu0 0
      %4586 = vmatprep.subr.bf16.mxu0 0
      %4587 = vmatpush1.bf16.msra.mxu0 0
      %4588 = vmatprep.subr.bf16.mxu0 0
      %4589 = vmatpush1.bf16.msra.mxu0 0
      %4590 = vmatprep.mubr.bf16.mxu0 0
      %4591 = vmatmul.mubr.bf16.gmra.mrb[0].mxu0 %v4384
      %v4592 = vpop.f32.mrb[0].mxu0
      %v4593 = vadd.f32 %v4505, %v4592
      %v4594 = vpop.f32.mrb[0].mxu0
      %v4595 = vpop.f32.mrb[0].mxu0
      %v4596 = vpop.f32.mrb[0].mxu0
      %4597 = vdwg.mxu0
      %v4598 = vld [vmem:[%s14] sm:$0x1]
      %v4599 = vadd.f32 %v4593, %v4598
      %vm4600 = vcmask 122880
      %4601 = vst.msk [vmem:[%s523] sm:$0x1] %vm4600, %v4599
      %v4602 = vmax.f32 %v4599, 0.0
      %v4603 = vand.u32 2147483647, %v4599
      %v4604 = vsub.f32 0.0, %v4603
      %v4605 = vmul.f32 %v4604, 1.442695
      %v4606 = vpow.pop %v4605
      %v4607 = vadd.f32 %v4606, 1.0
      %v4608 = vlog2.pop %v4607
      %v4609 = vmul.f32 %v4608, 0.6931472
      %v4610 = vadd.f32 %v4602, %v4609
      %v4611 = vadd.f32 %v4610, 1e-05
      %4613 = vrot.lane.b32.xlu0 %v4611, 112
      %v4614 = vpop.permute.xlu0 %4613
      %4616 = vst.msk [vmem:[%s526] sm:$0x1] %vm4600, %v4614
      %p4617 = scmp.lt.s32.totalorder %s28, 5
      %s4618 = scalar_select %p4617, %s28, 5
      %s4619 = scalar_lea.vmem %s15, %s4618
      %p4620 = scmp.lt.s32.totalorder %s28, 5
      %s4621 = scalar_select %p4620, %s28, 5
      %s4622 = scalar_lea.vmem %s16, %s4621
      // Predicated region
      $region81: #{conv_encoder_forward.1} parent=79 // pred_check
        %p4623 = pneg %p366
      $region82: #{conv_encoder_forward.1} parent=79 // pred_check_branch
        %4625 = sbr.rel (%p4623) target = $region84
      $region83: #{conv_encoder_forward.1} parent=79 // pred_region
        _
      $region84: #{conv_encoder_forward.1} parent=79 // pred_fallthru
        _
      // Predicated region
      $region85: #{conv_encoder_forward.1} parent=79 // pred_check
        %p4626 = pneg %p392
      $region86: #{conv_encoder_forward.1} parent=79 // pred_check_branch
        %4628 = sbr.rel (%p4626) target = $region88
      $region87: #{conv_encoder_forward.1} parent=79 // pred_region
        _
      $region88: #{conv_encoder_forward.1} parent=79 // pred_fallthru
        _
    $region80: #{conv_encoder_forward.1} parent=5 // pred_fallthru
      _
    %p4629 = scmp.le.s32.totalorder 2, %s23
    // Predicated region
    $region89: #{conv_encoder_forward.1} parent=5 // pred_check
      %p4630 = pneg %p4629
    $region90: #{conv_encoder_forward.1} parent=5 // pred_check_branch
      %4632 = sbr.rel (%p4630) target = $region92
    $region91: #{conv_encoder_forward.1} parent=5 // pred_region
      %s4633 = ssub.s32 %s23, 2
      // Predicated region
      $region93: #{conv_encoder_forward.1} parent=91 // pred_check
        %p4634 = pneg %p372
      $region94: #{conv_encoder_forward.1} parent=91 // pred_check_branch
        %4636 = sbr.rel (%p4634) target = $region96
      $region95: #{conv_encoder_forward.1} parent=91 // pred_region
        %p4637 = scmp.lt.s32.totalorder %s29, 5
        %s4638 = scalar_select %p4637, %s29, 5
        %s4639 = scalar_lea.vmem %s15, %s4638
      $region96: #{conv_encoder_forward.1} parent=91 // pred_fallthru
        _
      // Predicated region
      $region97: #{conv_encoder_forward.1} parent=91 // pred_check
        %p4640 = pneg %p398
      $region98: #{conv_encoder_forward.1} parent=91 // pred_check_branch
        %4642 = sbr.rel (%p4640) target = $region100
      $region99: #{conv_encoder_forward.1} parent=91 // pred_region
        %p4643 = scmp.lt.s32.totalorder %s29, 5
        %s4644 = scalar_select %p4643, %s29, 5
        %s4645 = scalar_lea.vmem %s16, %s4644
      $region100: #{conv_encoder_forward.1} parent=91 // pred_fallthru
        _
    $region92: #{conv_encoder_forward.1} parent=5 // pred_fallthru
      _
  $region6: #{conv_encoder_forward.1} parent=0 // loop_footer
    %s27 = sadd.s32 1, %s23
  $region7: #{conv_encoder_forward.1} parent=0 // loop_footer_branch
    %22 = sbr.rel target = $region3
  $region8: #{conv_encoder_forward.1} parent=0 // loop_exit
    _

</llo_original>
